<compile_context>
chip_gen: v6e
topology: v6e:2x2x1
jax: 0.10.0
libtpu: 0.0.40
codegen_flags: <defaults>
</compile_context>

<pallas_src>
import jax
import jax.numpy as jnp
from jax.experimental import pallas as pl
from jax.experimental.pallas import tpu as pltpu


def _elu(x):
    # nn.ELU(alpha=1.0)
    return jnp.where(x > 0, x, jnp.exp(x) - 1.0)


# --------------------------- in-kernel building blocks ---------------------------

def _im2col_same(a, H, W, mask_l, mask_r):
    """9-tap im2col of a (C, H*W) map, zero 'same' padding, stride 1.

    Row block t = dy*3+dx holds input (y+dy-1, x+dx-1) for output (y, x).
    Vertical pad = W+1 zero lanes each side (one lane concat); horizontal
    out-of-bounds taps are zeroed with the precomputed (1, H*W) lane masks.
    """
    C, HW = a.shape
    zp = jnp.zeros((C, W + 1), a.dtype)
    af = jnp.concatenate([zp, a, zp], axis=-1)               # (C, HW + 2W + 2)
    wins = []
    for dy in range(3):
        for dx in range(3):
            s = dy * W + dx                                  # static lane shift
            win = af[:, s:s + HW]
            if dx == 0:
                win = win * mask_l
            elif dx == 2:
                win = win * mask_r
            wins.append(win)
    return jnp.concatenate(wins, axis=0)                     # (9*C, HW)


def _im2col_even_rows(a, H, W, mask_l, mask_r):
    """9-tap im2col of a stride-2 conv, built only at even output rows.

    Output lane order is (yo, x) with yo = 0..H//2-1 (input row 2*yo) and x =
    0..W-1 (ALL columns; the even-column gather happens after the conv matmul
    via a small 0/1 selector).  Row block t = dy*3+dx holds input
    (2*yo + dy - 1, x + dx - 1).  Odd input rows are never materialized.
    """
    C, HW = a.shape
    Ho = H // 2
    L = Ho * W
    zp = jnp.zeros((C, W + 1), a.dtype)
    af = jnp.concatenate([zp, a, zp], axis=-1)               # input row r starts at (r+1)*W + 1
    z1 = jnp.zeros((C, 1), a.dtype)
    wins = []
    for dy in range(3):
        segs = [af[:, (2 * yo + dy) * W + 1:(2 * yo + dy) * W + 1 + W]
                for yo in range(Ho)]                         # input rows 2*yo + dy - 1
        rowp = jnp.concatenate([z1] + segs + [z1], axis=-1)  # (C, L + 2)
        for dx in range(3):
            win = rowp[:, dx:dx + L]
            if dx == 0:
                win = win * mask_l
            elif dx == 2:
                win = win * mask_r
            wins.append(win)
    return jnp.concatenate(wins, axis=0)                     # (9*C, L)


def _make_encoder_kernel(plan, n_const):
    """plan: static per-conv schedule [(kind, H_in, W_in, mask_idx, sel_idx), ...].

    Kernel args: x_ref, 2 param refs per conv (gamma-folded w, beta), the shared
    constants (masks / selectors), then one output ref per residual block.
    One grid step == one batch element; intermediates never touch HBM.
    """
    n_param = 2 * len(plan)

    def kernel(x_ref, *refs):
        prefs = refs[:n_param]
        crefs = refs[n_param:n_param + n_const]
        orefs = refs[n_param + n_const:]
        h = x_ref[...]                                       # (C, H*W) f32, lanes = H*W
        oi = 0
        for li, (kind, hh, ww, mi, si) in enumerate(plan):
            wv = prefs[2 * li][...]                          # (Cout, K), gamma pre-folded
            beta = prefs[2 * li + 1][...]                    # (Cout, 1) f32
            if kind == "in":
                # NormConv2d 1x1, transposed so H*W stays on lanes.
                h = jnp.dot(wv, h.astype(wv.dtype),
                            preferred_element_type=jnp.float32) + beta
            elif kind == "res":
                # VUnetResnetBlock: h + NormConv3x3(ELU(h)); dropout(p=0) omitted.
                ml, mr = crefs[mi][0:1, :], crefs[mi][1:2, :]
                cols = _im2col_same(_elu(h), hh, ww, ml, mr)           # (9C, H*W)
                y = jnp.dot(wv, cols.astype(wv.dtype),
                            preferred_element_type=jnp.float32)
                h = h + y + beta
                orefs[oi][...] = h.astype(orefs[oi].dtype)
                oi += 1
            else:  # "down": NormConv2d 3x3, stride 2, pad 1
                ml, mr = crefs[mi][0:1, :], crefs[mi][1:2, :]
                cols = _im2col_even_rows(h, hh, ww, ml, mr)            # (9C, H/2*W)
                y = jnp.dot(wv, cols.astype(wv.dtype),
                            preferred_element_type=jnp.float32)        # even rows, all cols
                y = jnp.dot(y, crefs[si][...],
                            preferred_element_type=jnp.float32)        # even cols (exact 0/1)
                h = y + beta

    return kernel


# --------------------------------- wrapper ---------------------------------

def _mask_pair(nrows, w):
    """(2, nrows*w) f32: row 0 zeroes x==0 (left tap), row 1 zeroes x==w-1."""
    L = nrows * w
    col = jnp.arange(L, dtype=jnp.int32) % w
    ml = (col != 0).astype(jnp.float32)
    mr = (col != w - 1).astype(jnp.float32)
    return jnp.stack([ml, mr], axis=0)


def _stride2_col_select(h, w):
    """(h//2*w, h//2*w//2) 0/1 selector of even columns per output row."""
    ho, wo = h // 2, w // 2
    L, Lo = ho * w, ho * wo
    i = jnp.arange(L, dtype=jnp.int32)[:, None]
    j = jnp.arange(Lo, dtype=jnp.int32)[None, :]
    tgt = (j // wo) * w + 2 * (j % wo)
    return (i == tgt).astype(jnp.float32)


def _to_kernel_layout(p, compute_dtype):
    """HWIO weight-normed conv params -> kernel layout, gamma folded into w.

    1x1: (Cout, Cin).  3x3: (Cout, 9*Cin), tap-major (dy, dx) blocks of Cin,
    matching the im2col row order.  beta stays an f32 (Cout, 1) column.
    """
    w = p["w"]
    k, _, cin, cout = w.shape
    if k == 1:
        wk = w.reshape(cin, cout).T
    else:
        wk = jnp.transpose(w, (3, 0, 1, 2)).reshape(cout, k * k * cin)
    wk = p["gamma"].reshape(cout, 1) * wk                    # gamma*(W@x) == (gamma*W)@x
    return wk.astype(compute_dtype), p["beta"].reshape(cout, 1).astype(jnp.float32)


def vunet_encoder_forward(params, x_nchw, n_stages, n_rnb, *, use_bf16=False):
    """Whole VUnetEncoder in a single pallas_call.  In/out layout: NCHW."""
    N, nf_in, H, W = x_nchw.shape
    compute_dtype = jnp.bfloat16 if use_bf16 else jnp.float32

    flat_params, flat_consts, plan, out_cfg = [], [], [], []
    const_index = {}

    def _const(key, build):
        if key not in const_index:
            const_index[key] = len(flat_consts)
            flat_consts.append(build())
        return const_index[key]

    def _add(p, kind, hh, ww):
        wk, b = _to_kernel_layout(p, compute_dtype)
        flat_params.extend([wk, b])
        mi = si = -1
        if kind == "res":
            mi = _const(("mask", hh, ww), lambda: _mask_pair(hh, ww))
        elif kind == "down":
            assert hh % 2 == 0 and ww % 2 == 0, "stride-2 path assumes even H, W"
            mi = _const(("mask", hh // 2, ww), lambda: _mask_pair(hh // 2, ww))
            si = _const(("sel", hh, ww), lambda: _stride2_col_select(hh, ww))
        plan.append((kind, hh, ww, mi, si))
        return wk.shape[0]

    _add(params["in_op"], "in", H, W)
    h_, w_ = H, W
    for i_s in range(n_stages):
        if i_s > 0:
            _add(params["downs"][f"s{i_s + 1}"], "down", h_, w_)
            h_, w_ = h_ // 2, w_ // 2
        for ir in range(n_rnb):
            name = f"s{i_s + 1}_{ir + 1}"
            nf = _add(params["blocks"][name], "res", h_, w_)
            out_cfg.append((name, nf, h_, w_))

    kernel = _make_encoder_kernel(tuple(plan), len(flat_consts))

    # NCHW is already (channels, flattened-spatial) per image: reshape only.
    x_flat = x_nchw.reshape(N, nf_in, H * W)

    resident = flat_params + flat_consts                     # constant index maps -> stay resident
    in_specs = [pl.BlockSpec((None, nf_in, H * W), lambda n: (n, 0, 0))]
    in_specs += [pl.BlockSpec(a.shape, lambda n, nd=a.ndim: (0,) * nd)
                 for a in resident]
    out_shape = tuple(jax.ShapeDtypeStruct((N, c, hh * ww), jnp.float32)
                      for (_, c, hh, ww) in out_cfg)
    out_specs = tuple(pl.BlockSpec((None, c, hh * ww), lambda n: (n, 0, 0))
                      for (_, c, hh, ww) in out_cfg)

    outs = pl.pallas_call(
        kernel,
        out_shape=out_shape,
        grid=(N,),
        in_specs=in_specs,
        out_specs=out_specs,
        compiler_params=pltpu.CompilerParams(
            dimension_semantics=("parallel",),               # batch axis -> 2 TCs on v7x
            vmem_limit_bytes=32 * 1024 * 1024),
    )(x_flat, *resident)

    return {name: o.reshape(N, c, hh, ww)
            for o, (name, c, hh, ww) in zip(outs, out_cfg)}


# -------------------------------- parameters --------------------------------

def init_normconv_params(key, cin, cout, k):
    kv, kg, kb, kgam, kbet = jax.random.split(key, 5)
    v = 0.2 * jax.random.normal(kv, (cout, cin, k, k), jnp.float32)      # Conv2d weight_v
    g = 1.0 + 0.1 * jax.random.normal(kg, (cout,), jnp.float32)          # weight_g
    bias = 0.1 * jax.random.normal(kb, (cout,), jnp.float32)             # Conv2d bias
    gamma = 1.0 + 0.1 * jax.random.normal(kgam, (cout,), jnp.float32)    # NormConv2d.gamma
    beta = 0.1 * jax.random.normal(kbet, (cout,), jnp.float32)           # NormConv2d.beta
    # torch weight_norm (dim=0): w = g * v / ||v||_2 per output channel
    norm = jnp.sqrt(jnp.sum(v * v, axis=(1, 2, 3), keepdims=True))
    w_oihw = g[:, None, None, None] * v / norm
    w_hwio = jnp.transpose(w_oihw, (2, 3, 1, 0))
    # gamma*(conv(x)+bias)+beta  ->  gamma*conv(x) + (gamma*bias + beta)
    return {"w": w_hwio, "gamma": gamma, "beta": gamma * bias + beta}


def init_vunet_encoder_params(key, n_stages, nf_in, nf_start, nf_max, n_rnb):
    params = {"blocks": {}, "downs": {}}
    key, sub = jax.random.split(key)
    params["in_op"] = init_normconv_params(sub, nf_in, nf_start, 1)
    nf = nf_start
    for i_s in range(n_stages):
        if i_s > 0:
            key, sub = jax.random.split(key)
            nf_out = min(2 * nf, nf_max)
            params["downs"][f"s{i_s + 1}"] = init_normconv_params(sub, nf, nf_out, 3)
            nf = nf_out
        for ir in range(n_rnb):
            key, sub = jax.random.split(key)
            params["blocks"][f"s{i_s + 1}_{ir + 1}"] = init_normconv_params(sub, nf, nf, 3)
    return params


# ----------------------------- pure-JAX reference -----------------------------

def _normconv_ref(x_nhwc, p, stride):
    pad = p["w"].shape[0] // 2
    y = jax.lax.conv_general_dilated(
        x_nhwc, p["w"], window_strides=(stride, stride),
        padding=((pad, pad), (pad, pad)),
        dimension_numbers=("NHWC", "HWIO", "NHWC"),
        precision=jax.lax.Precision.HIGHEST)
    return p["gamma"][None, None, None, :] * y + p["beta"][None, None, None, :]


def vunet_encoder_ref(params, x_nchw, n_stages, n_rnb):
    x = jnp.transpose(x_nchw, (0, 2, 3, 1))
    out = {}
    h = _normconv_ref(x, params["in_op"], 1)
    for ir in range(n_rnb):
        p = params["blocks"][f"s1_{ir + 1}"]
        h = h + _normconv_ref(_elu(h), p, 1)
        out[f"s1_{ir + 1}"] = h
    for i_s in range(1, n_stages):
        h = _normconv_ref(h, params["downs"][f"s{i_s + 1}"], 2)
        for ir in range(n_rnb):
            stage = f"s{i_s + 1}_{ir + 1}"
            p = params["blocks"][stage]
            h = h + _normconv_ref(_elu(h), p, 1)
            out[stage] = h
    return {k: jnp.transpose(v, (0, 3, 1, 2)) for k, v in out.items()}


# ------------------------------------ main ------------------------------------

if __name__ == "__main__":
    n_stages, nf_in, nf_start, nf_max, n_rnb = 3, 3, 8, 16, 2
    N, H, W = 2, 16, 16

    key = jax.random.PRNGKey(0)
    kx, kp = jax.random.split(key)
    x = jax.random.normal(kx, (N, nf_in, H, W), jnp.float32)          # NCHW, like PyTorch
    params = init_vunet_encoder_params(kp, n_stages, nf_in, nf_start, nf_max, n_rnb)

    refs = vunet_encoder_ref(params, x, n_stages, n_rnb)
    expected_shapes = {
        "s1_1": (N, nf_start, H, W), "s1_2": (N, nf_start, H, W),
        "s2_1": (N, nf_max, H // 2, W // 2), "s2_2": (N, nf_max, H // 2, W // 2),
        "s3_1": (N, nf_max, H // 4, W // 4), "s3_2": (N, nf_max, H // 4, W // 4),
    }

    # 1) f32 path: numerically faithful to the PyTorch module.
    outs = vunet_encoder_forward(params, x, n_stages, n_rnb, use_bf16=False)
    outs = jax.tree_util.tree_map(jax.block_until_ready, outs)
    for k_name, shp in expected_shapes.items():
        assert outs[k_name].shape == shp, (k_name, outs[k_name].shape, shp)
        err = float(jnp.max(jnp.abs(outs[k_name] - refs[k_name])))
        assert jnp.allclose(outs[k_name], refs[k_name], atol=3e-3, rtol=3e-3), (k_name, err)

    # 2) bf16-operand path (v6e/v7x MXU fast path), f32 accumulation.
    #    Checked with a relative-L2 bound (bf16 operand rounding compounds
    #    through 8 residual convs, so elementwise atol would be misleading).
    outs_bf16 = vunet_encoder_forward(params, x, n_stages, n_rnb, use_bf16=True)
    outs_bf16 = jax.tree_util.tree_map(jax.block_until_ready, outs_bf16)
    for k_name, shp in expected_shapes.items():
        assert outs_bf16[k_name].shape == shp
        rel = (float(jnp.linalg.norm(outs_bf16[k_name] - refs[k_name]))
               / max(float(jnp.linalg.norm(refs[k_name])), 1e-12))
        assert rel < 2e-2, (k_name, rel)

    print("KERNEL_OK")
</pallas_src>

<mosaic_0001>
module attributes {stable_mosaic.version = 11 : i64} {
  func.func @kernel(%arg0: i32, %arg1: memref<1x3x256xf32, #tpu.memory_space<vmem>>, %arg2: memref<8x3xf32, #tpu.memory_space<vmem>>, %arg3: memref<8x1xf32, #tpu.memory_space<vmem>>, %arg4: memref<8x72xf32, #tpu.memory_space<vmem>>, %arg5: memref<8x1xf32, #tpu.memory_space<vmem>>, %arg6: memref<8x72xf32, #tpu.memory_space<vmem>>, %arg7: memref<8x1xf32, #tpu.memory_space<vmem>>, %arg8: memref<16x72xf32, #tpu.memory_space<vmem>>, %arg9: memref<16x1xf32, #tpu.memory_space<vmem>>, %arg10: memref<16x144xf32, #tpu.memory_space<vmem>>, %arg11: memref<16x1xf32, #tpu.memory_space<vmem>>, %arg12: memref<16x144xf32, #tpu.memory_space<vmem>>, %arg13: memref<16x1xf32, #tpu.memory_space<vmem>>, %arg14: memref<16x144xf32, #tpu.memory_space<vmem>>, %arg15: memref<16x1xf32, #tpu.memory_space<vmem>>, %arg16: memref<16x144xf32, #tpu.memory_space<vmem>>, %arg17: memref<16x1xf32, #tpu.memory_space<vmem>>, %arg18: memref<16x144xf32, #tpu.memory_space<vmem>>, %arg19: memref<16x1xf32, #tpu.memory_space<vmem>>, %arg20: memref<2x256xf32, #tpu.memory_space<vmem>>, %arg21: memref<2x128xf32, #tpu.memory_space<vmem>>, %arg22: memref<128x64xf32, #tpu.memory_space<vmem>>, %arg23: memref<2x64xf32, #tpu.memory_space<vmem>>, %arg24: memref<2x32xf32, #tpu.memory_space<vmem>>, %arg25: memref<32x16xf32, #tpu.memory_space<vmem>>, %arg26: memref<2x16xf32, #tpu.memory_space<vmem>>, %arg27: memref<1x8x256xf32, #tpu.memory_space<vmem>>, %arg28: memref<1x8x256xf32, #tpu.memory_space<vmem>>, %arg29: memref<1x16x64xf32, #tpu.memory_space<vmem>>, %arg30: memref<1x16x64xf32, #tpu.memory_space<vmem>>, %arg31: memref<1x16x16xf32, #tpu.memory_space<vmem>>, %arg32: memref<1x16x16xf32, #tpu.memory_space<vmem>>) attributes {dimension_semantics = [#tpu.dimension_semantics<parallel>], iteration_bounds = array<i64: 2>, scalar_prefetch = 0 : i64, scratch_operands = 0 : i64, tpu.core_type = #tpu.core_type<tc>, window_params = [{transform_indices = @transform_0, window_bounds = array<i64: 1, 3, 256>}, {pipeline_mode = #tpu.pipeline_mode<synchronous>, transform_indices = @transform_1, window_bounds = array<i64: 8, 3>}, {pipeline_mode = #tpu.pipeline_mode<synchronous>, transform_indices = @transform_2, window_bounds = array<i64: 8, 1>}, {pipeline_mode = #tpu.pipeline_mode<synchronous>, transform_indices = @transform_3, window_bounds = array<i64: 8, 72>}, {pipeline_mode = #tpu.pipeline_mode<synchronous>, transform_indices = @transform_4, window_bounds = array<i64: 8, 1>}, {pipeline_mode = #tpu.pipeline_mode<synchronous>, transform_indices = @transform_5, window_bounds = array<i64: 8, 72>}, {pipeline_mode = #tpu.pipeline_mode<synchronous>, transform_indices = @transform_6, window_bounds = array<i64: 8, 1>}, {pipeline_mode = #tpu.pipeline_mode<synchronous>, transform_indices = @transform_7, window_bounds = array<i64: 16, 72>}, {pipeline_mode = #tpu.pipeline_mode<synchronous>, transform_indices = @transform_8, window_bounds = array<i64: 16, 1>}, {pipeline_mode = #tpu.pipeline_mode<synchronous>, transform_indices = @transform_9, window_bounds = array<i64: 16, 144>}, {pipeline_mode = #tpu.pipeline_mode<synchronous>, transform_indices = @transform_10, window_bounds = array<i64: 16, 1>}, {pipeline_mode = #tpu.pipeline_mode<synchronous>, transform_indices = @transform_11, window_bounds = array<i64: 16, 144>}, {pipeline_mode = #tpu.pipeline_mode<synchronous>, transform_indices = @transform_12, window_bounds = array<i64: 16, 1>}, {pipeline_mode = #tpu.pipeline_mode<synchronous>, transform_indices = @transform_13, window_bounds = array<i64: 16, 144>}, {pipeline_mode = #tpu.pipeline_mode<synchronous>, transform_indices = @transform_14, window_bounds = array<i64: 16, 1>}, {pipeline_mode = #tpu.pipeline_mode<synchronous>, transform_indices = @transform_15, window_bounds = array<i64: 16, 144>}, {pipeline_mode = #tpu.pipeline_mode<synchronous>, transform_indices = @transform_16, window_bounds = array<i64: 16, 1>}, {pipeline_mode = #tpu.pipeline_mode<synchronous>, transform_indices = @transform_17, window_bounds = array<i64: 16, 144>}, {pipeline_mode = #tpu.pipeline_mode<synchronous>, transform_indices = @transform_18, window_bounds = array<i64: 16, 1>}, {pipeline_mode = #tpu.pipeline_mode<synchronous>, transform_indices = @transform_19, window_bounds = array<i64: 2, 256>}, {pipeline_mode = #tpu.pipeline_mode<synchronous>, transform_indices = @transform_20, window_bounds = array<i64: 2, 128>}, {pipeline_mode = #tpu.pipeline_mode<synchronous>, transform_indices = @transform_21, window_bounds = array<i64: 128, 64>}, {pipeline_mode = #tpu.pipeline_mode<synchronous>, transform_indices = @transform_22, window_bounds = array<i64: 2, 64>}, {pipeline_mode = #tpu.pipeline_mode<synchronous>, transform_indices = @transform_23, window_bounds = array<i64: 2, 32>}, {pipeline_mode = #tpu.pipeline_mode<synchronous>, transform_indices = @transform_24, window_bounds = array<i64: 32, 16>}, {pipeline_mode = #tpu.pipeline_mode<synchronous>, transform_indices = @transform_25, window_bounds = array<i64: 2, 16>}, {transform_indices = @transform_26, window_bounds = array<i64: 1, 8, 256>}, {transform_indices = @transform_27, window_bounds = array<i64: 1, 8, 256>}, {transform_indices = @transform_28, window_bounds = array<i64: 1, 16, 64>}, {transform_indices = @transform_29, window_bounds = array<i64: 1, 16, 64>}, {transform_indices = @transform_30, window_bounds = array<i64: 1, 16, 16>}, {transform_indices = @transform_31, window_bounds = array<i64: 1, 16, 16>}]} {
    %c0 = arith.constant 0 : index
    %c0_0 = arith.constant 0 : index
    %c0_1 = arith.constant 0 : index
    %0 = vector.load %arg1[%c0, %c0_0, %c0_1] : memref<1x3x256xf32, #tpu.memory_space<vmem>>, vector<1x3x256xf32>
    %1 = vector.shape_cast %0 : vector<1x3x256xf32> to vector<3x256xf32>
    %c0_2 = arith.constant 0 : index
    %c0_3 = arith.constant 0 : index
    %2 = vector.load %arg2[%c0_2, %c0_3] : memref<8x3xf32, #tpu.memory_space<vmem>>, vector<8x3xf32>
    %c0_4 = arith.constant 0 : index
    %c0_5 = arith.constant 0 : index
    %3 = vector.load %arg3[%c0_4, %c0_5] : memref<8x1xf32, #tpu.memory_space<vmem>>, vector<8x1xf32>
    %cst = arith.constant dense<0.000000e+00> : vector<8x256xf32>
    %4 = tpu.matmul %2, %1, %cst {dimension_numbers = #tpu.dot_dimension_numbers<[1], [0], [0], [1], [0, 0, 1, 1], [], []>} : vector<8x3xf32>, vector<3x256xf32>, vector<8x256xf32> -> vector<8x256xf32>
    %5 = vector.broadcast %3 : vector<8x1xf32> to vector<8x256xf32>
    %6 = arith.addf %4, %5 : vector<8x256xf32>
    %c0_6 = arith.constant 0 : index
    %c0_7 = arith.constant 0 : index
    %7 = vector.load %arg4[%c0_6, %c0_7] : memref<8x72xf32, #tpu.memory_space<vmem>>, vector<8x72xf32>
    %c0_8 = arith.constant 0 : index
    %c0_9 = arith.constant 0 : index
    %8 = vector.load %arg5[%c0_8, %c0_9] : memref<8x1xf32, #tpu.memory_space<vmem>>, vector<8x1xf32>
    %c0_10 = arith.constant 0 : index
    %c0_11 = arith.constant 0 : index
    %9 = vector.load %arg20[%c0_10, %c0_11] : memref<2x256xf32, #tpu.memory_space<vmem>>, vector<1x256xf32>
    %c1 = arith.constant 1 : index
    %c0_12 = arith.constant 0 : index
    %10 = vector.load %arg20[%c1, %c0_12] : memref<2x256xf32, #tpu.memory_space<vmem>>, vector<1x256xf32>
    %cst_13 = arith.constant 0.000000e+00 : f32
    %11 = vector.broadcast %cst_13 : f32 to vector<8x256xf32>
    %12 = arith.cmpf ogt, %6, %11 : vector<8x256xf32>
    %13 = math.exp %6 : vector<8x256xf32>
    %cst_14 = arith.constant 1.000000e+00 : f32
    %14 = vector.broadcast %cst_14 : f32 to vector<8x256xf32>
    %15 = arith.subf %13, %14 : vector<8x256xf32>
    %16 = arith.select %12, %6, %15 : vector<8x256xi1>, vector<8x256xf32>
    %cst_15 = arith.constant 0.000000e+00 : f32
    %17 = vector.broadcast %cst_15 : f32 to vector<8x17xf32>
    %18 = tpu.concatenate %17, %16, %17 in 1 : vector<8x17xf32>, vector<8x256xf32>, vector<8x17xf32> -> vector<8x290xf32>
    %19 = vector.extract_strided_slice %18 {offsets = [0, 0], sizes = [8, 256], strides = [1, 1]} : vector<8x290xf32> to vector<8x256xf32>
    %20 = vector.broadcast %9 : vector<1x256xf32> to vector<8x256xf32>
    %21 = arith.mulf %19, %20 : vector<8x256xf32>
    %22 = vector.extract_strided_slice %18 {offsets = [0, 1], sizes = [8, 256], strides = [1, 1]} : vector<8x290xf32> to vector<8x256xf32>
    %23 = vector.extract_strided_slice %18 {offsets = [0, 2], sizes = [8, 256], strides = [1, 1]} : vector<8x290xf32> to vector<8x256xf32>
    %24 = vector.broadcast %10 : vector<1x256xf32> to vector<8x256xf32>
    %25 = arith.mulf %23, %24 : vector<8x256xf32>
    %26 = vector.extract_strided_slice %18 {offsets = [0, 16], sizes = [8, 256], strides = [1, 1]} : vector<8x290xf32> to vector<8x256xf32>
    %27 = vector.broadcast %9 : vector<1x256xf32> to vector<8x256xf32>
    %28 = arith.mulf %26, %27 : vector<8x256xf32>
    %29 = vector.extract_strided_slice %18 {offsets = [0, 17], sizes = [8, 256], strides = [1, 1]} : vector<8x290xf32> to vector<8x256xf32>
    %30 = vector.extract_strided_slice %18 {offsets = [0, 18], sizes = [8, 256], strides = [1, 1]} : vector<8x290xf32> to vector<8x256xf32>
    %31 = vector.broadcast %10 : vector<1x256xf32> to vector<8x256xf32>
    %32 = arith.mulf %30, %31 : vector<8x256xf32>
    %33 = vector.extract_strided_slice %18 {offsets = [0, 32], sizes = [8, 256], strides = [1, 1]} : vector<8x290xf32> to vector<8x256xf32>
    %34 = vector.broadcast %9 : vector<1x256xf32> to vector<8x256xf32>
    %35 = arith.mulf %33, %34 : vector<8x256xf32>
    %36 = vector.extract_strided_slice %18 {offsets = [0, 33], sizes = [8, 256], strides = [1, 1]} : vector<8x290xf32> to vector<8x256xf32>
    %37 = vector.extract_strided_slice %18 {offsets = [0, 34], sizes = [8, 256], strides = [1, 1]} : vector<8x290xf32> to vector<8x256xf32>
    %38 = vector.broadcast %10 : vector<1x256xf32> to vector<8x256xf32>
    %39 = arith.mulf %37, %38 : vector<8x256xf32>
    %40 = tpu.concatenate %21, %22, %25, %28, %29, %32, %35, %36, %39 in 0 : vector<8x256xf32>, vector<8x256xf32>, vector<8x256xf32>, vector<8x256xf32>, vector<8x256xf32>, vector<8x256xf32>, vector<8x256xf32>, vector<8x256xf32>, vector<8x256xf32> -> vector<72x256xf32>
    %cst_16 = arith.constant dense<0.000000e+00> : vector<8x256xf32>
    %41 = tpu.matmul %7, %40, %cst_16 {dimension_numbers = #tpu.dot_dimension_numbers<[1], [0], [0], [1], [0, 0, 1, 1], [], []>} : vector<8x72xf32>, vector<72x256xf32>, vector<8x256xf32> -> vector<8x256xf32>
    %42 = arith.addf %6, %41 : vector<8x256xf32>
    %43 = vector.broadcast %8 : vector<8x1xf32> to vector<8x256xf32>
    %44 = arith.addf %42, %43 : vector<8x256xf32>
    %c0_17 = arith.constant 0 : index
    %c0_18 = arith.constant 0 : index
    %c0_19 = arith.constant 0 : index
    %45 = vector.load %arg27[%c0_17, %c0_18, %c0_19] : memref<1x8x256xf32, #tpu.memory_space<vmem>>, vector<1x8x256xf32>
    %46 = vector.shape_cast %45 : vector<1x8x256xf32> to vector<8x256xf32>
    %47 = vector.shape_cast %44 : vector<8x256xf32> to vector<1x8x256xf32>
    tpu.vector_store %arg27[%c0_17, %c0_18, %c0_19], %47 {strides = array<i32>} : memref<1x8x256xf32, #tpu.memory_space<vmem>>, vector<1x8x256xf32>,
    %c0_20 = arith.constant 0 : index
    %c0_21 = arith.constant 0 : index
    %48 = vector.load %arg6[%c0_20, %c0_21] : memref<8x72xf32, #tpu.memory_space<vmem>>, vector<8x72xf32>
    %c0_22 = arith.constant 0 : index
    %c0_23 = arith.constant 0 : index
    %49 = vector.load %arg7[%c0_22, %c0_23] : memref<8x1xf32, #tpu.memory_space<vmem>>, vector<8x1xf32>
    %c0_24 = arith.constant 0 : index
    %c0_25 = arith.constant 0 : index
    %50 = vector.load %arg20[%c0_24, %c0_25] : memref<2x256xf32, #tpu.memory_space<vmem>>, vector<1x256xf32>
    %c1_26 = arith.constant 1 : index
    %c0_27 = arith.constant 0 : index
    %51 = vector.load %arg20[%c1_26, %c0_27] : memref<2x256xf32, #tpu.memory_space<vmem>>, vector<1x256xf32>
    %cst_28 = arith.constant 0.000000e+00 : f32
    %52 = vector.broadcast %cst_28 : f32 to vector<8x256xf32>
    %53 = arith.cmpf ogt, %44, %52 : vector<8x256xf32>
    %54 = math.exp %44 : vector<8x256xf32>
    %cst_29 = arith.constant 1.000000e+00 : f32
    %55 = vector.broadcast %cst_29 : f32 to vector<8x256xf32>
    %56 = arith.subf %54, %55 : vector<8x256xf32>
    %57 = arith.select %53, %44, %56 : vector<8x256xi1>, vector<8x256xf32>
    %cst_30 = arith.constant 0.000000e+00 : f32
    %58 = vector.broadcast %cst_30 : f32 to vector<8x17xf32>
    %59 = tpu.concatenate %58, %57, %58 in 1 : vector<8x17xf32>, vector<8x256xf32>, vector<8x17xf32> -> vector<8x290xf32>
    %60 = vector.extract_strided_slice %59 {offsets = [0, 0], sizes = [8, 256], strides = [1, 1]} : vector<8x290xf32> to vector<8x256xf32>
    %61 = vector.broadcast %50 : vector<1x256xf32> to vector<8x256xf32>
    %62 = arith.mulf %60, %61 : vector<8x256xf32>
    %63 = vector.extract_strided_slice %59 {offsets = [0, 1], sizes = [8, 256], strides = [1, 1]} : vector<8x290xf32> to vector<8x256xf32>
    %64 = vector.extract_strided_slice %59 {offsets = [0, 2], sizes = [8, 256], strides = [1, 1]} : vector<8x290xf32> to vector<8x256xf32>
    %65 = vector.broadcast %51 : vector<1x256xf32> to vector<8x256xf32>
    %66 = arith.mulf %64, %65 : vector<8x256xf32>
    %67 = vector.extract_strided_slice %59 {offsets = [0, 16], sizes = [8, 256], strides = [1, 1]} : vector<8x290xf32> to vector<8x256xf32>
    %68 = vector.broadcast %50 : vector<1x256xf32> to vector<8x256xf32>
    %69 = arith.mulf %67, %68 : vector<8x256xf32>
    %70 = vector.extract_strided_slice %59 {offsets = [0, 17], sizes = [8, 256], strides = [1, 1]} : vector<8x290xf32> to vector<8x256xf32>
    %71 = vector.extract_strided_slice %59 {offsets = [0, 18], sizes = [8, 256], strides = [1, 1]} : vector<8x290xf32> to vector<8x256xf32>
    %72 = vector.broadcast %51 : vector<1x256xf32> to vector<8x256xf32>
    %73 = arith.mulf %71, %72 : vector<8x256xf32>
    %74 = vector.extract_strided_slice %59 {offsets = [0, 32], sizes = [8, 256], strides = [1, 1]} : vector<8x290xf32> to vector<8x256xf32>
    %75 = vector.broadcast %50 : vector<1x256xf32> to vector<8x256xf32>
    %76 = arith.mulf %74, %75 : vector<8x256xf32>
    %77 = vector.extract_strided_slice %59 {offsets = [0, 33], sizes = [8, 256], strides = [1, 1]} : vector<8x290xf32> to vector<8x256xf32>
    %78 = vector.extract_strided_slice %59 {offsets = [0, 34], sizes = [8, 256], strides = [1, 1]} : vector<8x290xf32> to vector<8x256xf32>
    %79 = vector.broadcast %51 : vector<1x256xf32> to vector<8x256xf32>
    %80 = arith.mulf %78, %79 : vector<8x256xf32>
    %81 = tpu.concatenate %62, %63, %66, %69, %70, %73, %76, %77, %80 in 0 : vector<8x256xf32>, vector<8x256xf32>, vector<8x256xf32>, vector<8x256xf32>, vector<8x256xf32>, vector<8x256xf32>, vector<8x256xf32>, vector<8x256xf32>, vector<8x256xf32> -> vector<72x256xf32>
    %cst_31 = arith.constant dense<0.000000e+00> : vector<8x256xf32>
    %82 = tpu.matmul %48, %81, %cst_31 {dimension_numbers = #tpu.dot_dimension_numbers<[1], [0], [0], [1], [0, 0, 1, 1], [], []>} : vector<8x72xf32>, vector<72x256xf32>, vector<8x256xf32> -> vector<8x256xf32>
    %83 = arith.addf %44, %82 : vector<8x256xf32>
    %84 = vector.broadcast %49 : vector<8x1xf32> to vector<8x256xf32>
    %85 = arith.addf %83, %84 : vector<8x256xf32>
    %c0_32 = arith.constant 0 : index
    %c0_33 = arith.constant 0 : index
    %c0_34 = arith.constant 0 : index
    %86 = vector.load %arg28[%c0_32, %c0_33, %c0_34] : memref<1x8x256xf32, #tpu.memory_space<vmem>>, vector<1x8x256xf32>
    %87 = vector.shape_cast %86 : vector<1x8x256xf32> to vector<8x256xf32>
    %88 = vector.shape_cast %85 : vector<8x256xf32> to vector<1x8x256xf32>
    tpu.vector_store %arg28[%c0_32, %c0_33, %c0_34], %88 {strides = array<i32>} : memref<1x8x256xf32, #tpu.memory_space<vmem>>, vector<1x8x256xf32>,
    %c0_35 = arith.constant 0 : index
    %c0_36 = arith.constant 0 : index
    %89 = vector.load %arg8[%c0_35, %c0_36] : memref<16x72xf32, #tpu.memory_space<vmem>>, vector<16x72xf32>
    %c0_37 = arith.constant 0 : index
    %c0_38 = arith.constant 0 : index
    %90 = vector.load %arg9[%c0_37, %c0_38] : memref<16x1xf32, #tpu.memory_space<vmem>>, vector<16x1xf32>
    %c0_39 = arith.constant 0 : index
    %c0_40 = arith.constant 0 : index
    %91 = vector.load %arg21[%c0_39, %c0_40] : memref<2x128xf32, #tpu.memory_space<vmem>>, vector<1x128xf32>
    %c1_41 = arith.constant 1 : index
    %c0_42 = arith.constant 0 : index
    %92 = vector.load %arg21[%c1_41, %c0_42] : memref<2x128xf32, #tpu.memory_space<vmem>>, vector<1x128xf32>
    %cst_43 = arith.constant 0.000000e+00 : f32
    %93 = vector.broadcast %cst_43 : f32 to vector<8x17xf32>
    %94 = tpu.concatenate %93, %85, %93 in 1 : vector<8x17xf32>, vector<8x256xf32>, vector<8x17xf32> -> vector<8x290xf32>
    %cst_44 = arith.constant 0.000000e+00 : f32
    %95 = vector.broadcast %cst_44 : f32 to vector<8x1xf32>
    %96 = vector.extract_strided_slice %94 {offsets = [0, 1], sizes = [8, 16], strides = [1, 1]} : vector<8x290xf32> to vector<8x16xf32>
    %97 = vector.extract_strided_slice %94 {offsets = [0, 33], sizes = [8, 16], strides = [1, 1]} : vector<8x290xf32> to vector<8x16xf32>
    %98 = vector.extract_strided_slice %94 {offsets = [0, 65], sizes = [8, 16], strides = [1, 1]} : vector<8x290xf32> to vector<8x16xf32>
    %99 = vector.extract_strided_slice %94 {offsets = [0, 97], sizes = [8, 16], strides = [1, 1]} : vector<8x290xf32> to vector<8x16xf32>
    %100 = vector.extract_strided_slice %94 {offsets = [0, 129], sizes = [8, 16], strides = [1, 1]} : vector<8x290xf32> to vector<8x16xf32>
    %101 = vector.extract_strided_slice %94 {offsets = [0, 161], sizes = [8, 16], strides = [1, 1]} : vector<8x290xf32> to vector<8x16xf32>
    %102 = vector.extract_strided_slice %94 {offsets = [0, 193], sizes = [8, 16], strides = [1, 1]} : vector<8x290xf32> to vector<8x16xf32>
    %103 = vector.extract_strided_slice %94 {offsets = [0, 225], sizes = [8, 16], strides = [1, 1]} : vector<8x290xf32> to vector<8x16xf32>
    %104 = tpu.concatenate %95, %96, %97, %98, %99, %100, %101, %102, %103, %95 in 1 : vector<8x1xf32>, vector<8x16xf32>, vector<8x16xf32>, vector<8x16xf32>, vector<8x16xf32>, vector<8x16xf32>, vector<8x16xf32>, vector<8x16xf32>, vector<8x16xf32>, vector<8x1xf32> -> vector<8x130xf32>
    %105 = vector.extract_strided_slice %104 {offsets = [0, 0], sizes = [8, 128], strides = [1, 1]} : vector<8x130xf32> to vector<8x128xf32>
    %106 = vector.broadcast %91 : vector<1x128xf32> to vector<8x128xf32>
    %107 = arith.mulf %105, %106 : vector<8x128xf32>
    %108 = vector.extract_strided_slice %104 {offsets = [0, 1], sizes = [8, 128], strides = [1, 1]} : vector<8x130xf32> to vector<8x128xf32>
    %109 = vector.extract_strided_slice %104 {offsets = [0, 2], sizes = [8, 128], strides = [1, 1]} : vector<8x130xf32> to vector<8x128xf32>
    %110 = vector.broadcast %92 : vector<1x128xf32> to vector<8x128xf32>
    %111 = arith.mulf %109, %110 : vector<8x128xf32>
    %112 = vector.extract_strided_slice %94 {offsets = [0, 17], sizes = [8, 16], strides = [1, 1]} : vector<8x290xf32> to vector<8x16xf32>
    %113 = vector.extract_strided_slice %94 {offsets = [0, 49], sizes = [8, 16], strides = [1, 1]} : vector<8x290xf32> to vector<8x16xf32>
    %114 = vector.extract_strided_slice %94 {offsets = [0, 81], sizes = [8, 16], strides = [1, 1]} : vector<8x290xf32> to vector<8x16xf32>
    %115 = vector.extract_strided_slice %94 {offsets = [0, 113], sizes = [8, 16], strides = [1, 1]} : vector<8x290xf32> to vector<8x16xf32>
    %116 = vector.extract_strided_slice %94 {offsets = [0, 145], sizes = [8, 16], strides = [1, 1]} : vector<8x290xf32> to vector<8x16xf32>
    %117 = vector.extract_strided_slice %94 {offsets = [0, 177], sizes = [8, 16], strides = [1, 1]} : vector<8x290xf32> to vector<8x16xf32>
    %118 = vector.extract_strided_slice %94 {offsets = [0, 209], sizes = [8, 16], strides = [1, 1]} : vector<8x290xf32> to vector<8x16xf32>
    %119 = vector.extract_strided_slice %94 {offsets = [0, 241], sizes = [8, 16], strides = [1, 1]} : vector<8x290xf32> to vector<8x16xf32>
    %120 = tpu.concatenate %95, %112, %113, %114, %115, %116, %117, %118, %119, %95 in 1 : vector<8x1xf32>, vector<8x16xf32>, vector<8x16xf32>, vector<8x16xf32>, vector<8x16xf32>, vector<8x16xf32>, vector<8x16xf32>, vector<8x16xf32>, vector<8x16xf32>, vector<8x1xf32> -> vector<8x130xf32>
    %121 = vector.extract_strided_slice %120 {offsets = [0, 0], sizes = [8, 128], strides = [1, 1]} : vector<8x130xf32> to vector<8x128xf32>
    %122 = vector.broadcast %91 : vector<1x128xf32> to vector<8x128xf32>
    %123 = arith.mulf %121, %122 : vector<8x128xf32>
    %124 = vector.extract_strided_slice %120 {offsets = [0, 1], sizes = [8, 128], strides = [1, 1]} : vector<8x130xf32> to vector<8x128xf32>
    %125 = vector.extract_strided_slice %120 {offsets = [0, 2], sizes = [8, 128], strides = [1, 1]} : vector<8x130xf32> to vector<8x128xf32>
    %126 = vector.broadcast %92 : vector<1x128xf32> to vector<8x128xf32>
    %127 = arith.mulf %125, %126 : vector<8x128xf32>
    %128 = vector.extract_strided_slice %94 {offsets = [0, 33], sizes = [8, 16], strides = [1, 1]} : vector<8x290xf32> to vector<8x16xf32>
    %129 = vector.extract_strided_slice %94 {offsets = [0, 65], sizes = [8, 16], strides = [1, 1]} : vector<8x290xf32> to vector<8x16xf32>
    %130 = vector.extract_strided_slice %94 {offsets = [0, 97], sizes = [8, 16], strides = [1, 1]} : vector<8x290xf32> to vector<8x16xf32>
    %131 = vector.extract_strided_slice %94 {offsets = [0, 129], sizes = [8, 16], strides = [1, 1]} : vector<8x290xf32> to vector<8x16xf32>
    %132 = vector.extract_strided_slice %94 {offsets = [0, 161], sizes = [8, 16], strides = [1, 1]} : vector<8x290xf32> to vector<8x16xf32>
    %133 = vector.extract_strided_slice %94 {offsets = [0, 193], sizes = [8, 16], strides = [1, 1]} : vector<8x290xf32> to vector<8x16xf32>
    %134 = vector.extract_strided_slice %94 {offsets = [0, 225], sizes = [8, 16], strides = [1, 1]} : vector<8x290xf32> to vector<8x16xf32>
    %135 = vector.extract_strided_slice %94 {offsets = [0, 257], sizes = [8, 16], strides = [1, 1]} : vector<8x290xf32> to vector<8x16xf32>
    %136 = tpu.concatenate %95, %128, %129, %130, %131, %132, %133, %134, %135, %95 in 1 : vector<8x1xf32>, vector<8x16xf32>, vector<8x16xf32>, vector<8x16xf32>, vector<8x16xf32>, vector<8x16xf32>, vector<8x16xf32>, vector<8x16xf32>, vector<8x16xf32>, vector<8x1xf32> -> vector<8x130xf32>
    %137 = vector.extract_strided_slice %136 {offsets = [0, 0], sizes = [8, 128], strides = [1, 1]} : vector<8x130xf32> to vector<8x128xf32>
    %138 = vector.broadcast %91 : vector<1x128xf32> to vector<8x128xf32>
    %139 = arith.mulf %137, %138 : vector<8x128xf32>
    %140 = vector.extract_strided_slice %136 {offsets = [0, 1], sizes = [8, 128], strides = [1, 1]} : vector<8x130xf32> to vector<8x128xf32>
    %141 = vector.extract_strided_slice %136 {offsets = [0, 2], sizes = [8, 128], strides = [1, 1]} : vector<8x130xf32> to vector<8x128xf32>
    %142 = vector.broadcast %92 : vector<1x128xf32> to vector<8x128xf32>
    %143 = arith.mulf %141, %142 : vector<8x128xf32>
    %144 = tpu.concatenate %107, %108, %111, %123, %124, %127, %139, %140, %143 in 0 : vector<8x128xf32>, vector<8x128xf32>, vector<8x128xf32>, vector<8x128xf32>, vector<8x128xf32>, vector<8x128xf32>, vector<8x128xf32>, vector<8x128xf32>, vector<8x128xf32> -> vector<72x128xf32>
    %cst_45 = arith.constant dense<0.000000e+00> : vector<16x128xf32>
    %145 = tpu.matmul %89, %144, %cst_45 {dimension_numbers = #tpu.dot_dimension_numbers<[1], [0], [0], [1], [0, 0, 1, 1], [], []>} : vector<16x72xf32>, vector<72x128xf32>, vector<16x128xf32> -> vector<16x128xf32>
    %c0_46 = arith.constant 0 : index
    %c0_47 = arith.constant 0 : index
    %146 = vector.load %arg22[%c0_46, %c0_47] : memref<128x64xf32, #tpu.memory_space<vmem>>, vector<128x64xf32>
    %cst_48 = arith.constant dense<0.000000e+00> : vector<16x64xf32>
    %147 = tpu.matmul %145, %146, %cst_48 {dimension_numbers = #tpu.dot_dimension_numbers<[1], [0], [0], [1], [0, 0, 1, 1], [], []>} : vector<16x128xf32>, vector<128x64xf32>, vector<16x64xf32> -> vector<16x64xf32>
    %148 = vector.broadcast %90 : vector<16x1xf32> to vector<16x64xf32>
    %149 = arith.addf %147, %148 : vector<16x64xf32>
    %c0_49 = arith.constant 0 : index
    %c0_50 = arith.constant 0 : index
    %150 = vector.load %arg10[%c0_49, %c0_50] : memref<16x144xf32, #tpu.memory_space<vmem>>, vector<16x144xf32>
    %c0_51 = arith.constant 0 : index
    %c0_52 = arith.constant 0 : index
    %151 = vector.load %arg11[%c0_51, %c0_52] : memref<16x1xf32, #tpu.memory_space<vmem>>, vector<16x1xf32>
    %c0_53 = arith.constant 0 : index
    %c0_54 = arith.constant 0 : index
    %152 = vector.load %arg23[%c0_53, %c0_54] : memref<2x64xf32, #tpu.memory_space<vmem>>, vector<1x64xf32>
    %c1_55 = arith.constant 1 : index
    %c0_56 = arith.constant 0 : index
    %153 = vector.load %arg23[%c1_55, %c0_56] : memref<2x64xf32, #tpu.memory_space<vmem>>, vector<1x64xf32>
    %cst_57 = arith.constant 0.000000e+00 : f32
    %154 = vector.broadcast %cst_57 : f32 to vector<16x64xf32>
    %155 = arith.cmpf ogt, %149, %154 : vector<16x64xf32>
    %156 = math.exp %149 : vector<16x64xf32>
    %cst_58 = arith.constant 1.000000e+00 : f32
    %157 = vector.broadcast %cst_58 : f32 to vector<16x64xf32>
    %158 = arith.subf %156, %157 : vector<16x64xf32>
    %159 = arith.select %155, %149, %158 : vector<16x64xi1>, vector<16x64xf32>
    %cst_59 = arith.constant 0.000000e+00 : f32
    %160 = vector.broadcast %cst_59 : f32 to vector<16x9xf32>
    %161 = tpu.concatenate %160, %159, %160 in 1 : vector<16x9xf32>, vector<16x64xf32>, vector<16x9xf32> -> vector<16x82xf32>
    %162 = vector.extract_strided_slice %161 {offsets = [0, 0], sizes = [16, 64], strides = [1, 1]} : vector<16x82xf32> to vector<16x64xf32>
    %163 = vector.broadcast %152 : vector<1x64xf32> to vector<16x64xf32>
    %164 = arith.mulf %162, %163 : vector<16x64xf32>
    %165 = vector.extract_strided_slice %161 {offsets = [0, 1], sizes = [16, 64], strides = [1, 1]} : vector<16x82xf32> to vector<16x64xf32>
    %166 = vector.extract_strided_slice %161 {offsets = [0, 2], sizes = [16, 64], strides = [1, 1]} : vector<16x82xf32> to vector<16x64xf32>
    %167 = vector.broadcast %153 : vector<1x64xf32> to vector<16x64xf32>
    %168 = arith.mulf %166, %167 : vector<16x64xf32>
    %169 = vector.extract_strided_slice %161 {offsets = [0, 8], sizes = [16, 64], strides = [1, 1]} : vector<16x82xf32> to vector<16x64xf32>
    %170 = vector.broadcast %152 : vector<1x64xf32> to vector<16x64xf32>
    %171 = arith.mulf %169, %170 : vector<16x64xf32>
    %172 = vector.extract_strided_slice %161 {offsets = [0, 9], sizes = [16, 64], strides = [1, 1]} : vector<16x82xf32> to vector<16x64xf32>
    %173 = vector.extract_strided_slice %161 {offsets = [0, 10], sizes = [16, 64], strides = [1, 1]} : vector<16x82xf32> to vector<16x64xf32>
    %174 = vector.broadcast %153 : vector<1x64xf32> to vector<16x64xf32>
    %175 = arith.mulf %173, %174 : vector<16x64xf32>
    %176 = vector.extract_strided_slice %161 {offsets = [0, 16], sizes = [16, 64], strides = [1, 1]} : vector<16x82xf32> to vector<16x64xf32>
    %177 = vector.broadcast %152 : vector<1x64xf32> to vector<16x64xf32>
    %178 = arith.mulf %176, %177 : vector<16x64xf32>
    %179 = vector.extract_strided_slice %161 {offsets = [0, 17], sizes = [16, 64], strides = [1, 1]} : vector<16x82xf32> to vector<16x64xf32>
    %180 = vector.extract_strided_slice %161 {offsets = [0, 18], sizes = [16, 64], strides = [1, 1]} : vector<16x82xf32> to vector<16x64xf32>
    %181 = vector.broadcast %153 : vector<1x64xf32> to vector<16x64xf32>
    %182 = arith.mulf %180, %181 : vector<16x64xf32>
    %183 = tpu.concatenate %164, %165, %168, %171, %172, %175, %178, %179, %182 in 0 : vector<16x64xf32>, vector<16x64xf32>, vector<16x64xf32>, vector<16x64xf32>, vector<16x64xf32>, vector<16x64xf32>, vector<16x64xf32>, vector<16x64xf32>, vector<16x64xf32> -> vector<144x64xf32>
    %cst_60 = arith.constant dense<0.000000e+00> : vector<16x64xf32>
    %184 = tpu.matmul %150, %183, %cst_60 {dimension_numbers = #tpu.dot_dimension_numbers<[1], [0], [0], [1], [0, 0, 1, 1], [], []>} : vector<16x144xf32>, vector<144x64xf32>, vector<16x64xf32> -> vector<16x64xf32>
    %185 = arith.addf %149, %184 : vector<16x64xf32>
    %186 = vector.broadcast %151 : vector<16x1xf32> to vector<16x64xf32>
    %187 = arith.addf %185, %186 : vector<16x64xf32>
    %c0_61 = arith.constant 0 : index
    %c0_62 = arith.constant 0 : index
    %c0_63 = arith.constant 0 : index
    %188 = vector.load %arg29[%c0_61, %c0_62, %c0_63] : memref<1x16x64xf32, #tpu.memory_space<vmem>>, vector<1x16x64xf32>
    %189 = vector.shape_cast %188 : vector<1x16x64xf32> to vector<16x64xf32>
    %190 = vector.shape_cast %187 : vector<16x64xf32> to vector<1x16x64xf32>
    tpu.vector_store %arg29[%c0_61, %c0_62, %c0_63], %190 {strides = array<i32>} : memref<1x16x64xf32, #tpu.memory_space<vmem>>, vector<1x16x64xf32>,
    %c0_64 = arith.constant 0 : index
    %c0_65 = arith.constant 0 : index
    %191 = vector.load %arg12[%c0_64, %c0_65] : memref<16x144xf32, #tpu.memory_space<vmem>>, vector<16x144xf32>
    %c0_66 = arith.constant 0 : index
    %c0_67 = arith.constant 0 : index
    %192 = vector.load %arg13[%c0_66, %c0_67] : memref<16x1xf32, #tpu.memory_space<vmem>>, vector<16x1xf32>
    %c0_68 = arith.constant 0 : index
    %c0_69 = arith.constant 0 : index
    %193 = vector.load %arg23[%c0_68, %c0_69] : memref<2x64xf32, #tpu.memory_space<vmem>>, vector<1x64xf32>
    %c1_70 = arith.constant 1 : index
    %c0_71 = arith.constant 0 : index
    %194 = vector.load %arg23[%c1_70, %c0_71] : memref<2x64xf32, #tpu.memory_space<vmem>>, vector<1x64xf32>
    %cst_72 = arith.constant 0.000000e+00 : f32
    %195 = vector.broadcast %cst_72 : f32 to vector<16x64xf32>
    %196 = arith.cmpf ogt, %187, %195 : vector<16x64xf32>
    %197 = math.exp %187 : vector<16x64xf32>
    %cst_73 = arith.constant 1.000000e+00 : f32
    %198 = vector.broadcast %cst_73 : f32 to vector<16x64xf32>
    %199 = arith.subf %197, %198 : vector<16x64xf32>
    %200 = arith.select %196, %187, %199 : vector<16x64xi1>, vector<16x64xf32>
    %cst_74 = arith.constant 0.000000e+00 : f32
    %201 = vector.broadcast %cst_74 : f32 to vector<16x9xf32>
    %202 = tpu.concatenate %201, %200, %201 in 1 : vector<16x9xf32>, vector<16x64xf32>, vector<16x9xf32> -> vector<16x82xf32>
    %203 = vector.extract_strided_slice %202 {offsets = [0, 0], sizes = [16, 64], strides = [1, 1]} : vector<16x82xf32> to vector<16x64xf32>
    %204 = vector.broadcast %193 : vector<1x64xf32> to vector<16x64xf32>
    %205 = arith.mulf %203, %204 : vector<16x64xf32>
    %206 = vector.extract_strided_slice %202 {offsets = [0, 1], sizes = [16, 64], strides = [1, 1]} : vector<16x82xf32> to vector<16x64xf32>
    %207 = vector.extract_strided_slice %202 {offsets = [0, 2], sizes = [16, 64], strides = [1, 1]} : vector<16x82xf32> to vector<16x64xf32>
    %208 = vector.broadcast %194 : vector<1x64xf32> to vector<16x64xf32>
    %209 = arith.mulf %207, %208 : vector<16x64xf32>
    %210 = vector.extract_strided_slice %202 {offsets = [0, 8], sizes = [16, 64], strides = [1, 1]} : vector<16x82xf32> to vector<16x64xf32>
    %211 = vector.broadcast %193 : vector<1x64xf32> to vector<16x64xf32>
    %212 = arith.mulf %210, %211 : vector<16x64xf32>
    %213 = vector.extract_strided_slice %202 {offsets = [0, 9], sizes = [16, 64], strides = [1, 1]} : vector<16x82xf32> to vector<16x64xf32>
    %214 = vector.extract_strided_slice %202 {offsets = [0, 10], sizes = [16, 64], strides = [1, 1]} : vector<16x82xf32> to vector<16x64xf32>
    %215 = vector.broadcast %194 : vector<1x64xf32> to vector<16x64xf32>
    %216 = arith.mulf %214, %215 : vector<16x64xf32>
    %217 = vector.extract_strided_slice %202 {offsets = [0, 16], sizes = [16, 64], strides = [1, 1]} : vector<16x82xf32> to vector<16x64xf32>
    %218 = vector.broadcast %193 : vector<1x64xf32> to vector<16x64xf32>
    %219 = arith.mulf %217, %218 : vector<16x64xf32>
    %220 = vector.extract_strided_slice %202 {offsets = [0, 17], sizes = [16, 64], strides = [1, 1]} : vector<16x82xf32> to vector<16x64xf32>
    %221 = vector.extract_strided_slice %202 {offsets = [0, 18], sizes = [16, 64], strides = [1, 1]} : vector<16x82xf32> to vector<16x64xf32>
    %222 = vector.broadcast %194 : vector<1x64xf32> to vector<16x64xf32>
    %223 = arith.mulf %221, %222 : vector<16x64xf32>
    %224 = tpu.concatenate %205, %206, %209, %212, %213, %216, %219, %220, %223 in 0 : vector<16x64xf32>, vector<16x64xf32>, vector<16x64xf32>, vector<16x64xf32>, vector<16x64xf32>, vector<16x64xf32>, vector<16x64xf32>, vector<16x64xf32>, vector<16x64xf32> -> vector<144x64xf32>
    %cst_75 = arith.constant dense<0.000000e+00> : vector<16x64xf32>
    %225 = tpu.matmul %191, %224, %cst_75 {dimension_numbers = #tpu.dot_dimension_numbers<[1], [0], [0], [1], [0, 0, 1, 1], [], []>} : vector<16x144xf32>, vector<144x64xf32>, vector<16x64xf32> -> vector<16x64xf32>
    %226 = arith.addf %187, %225 : vector<16x64xf32>
    %227 = vector.broadcast %192 : vector<16x1xf32> to vector<16x64xf32>
    %228 = arith.addf %226, %227 : vector<16x64xf32>
    %c0_76 = arith.constant 0 : index
    %c0_77 = arith.constant 0 : index
    %c0_78 = arith.constant 0 : index
    %229 = vector.load %arg30[%c0_76, %c0_77, %c0_78] : memref<1x16x64xf32, #tpu.memory_space<vmem>>, vector<1x16x64xf32>
    %230 = vector.shape_cast %229 : vector<1x16x64xf32> to vector<16x64xf32>
    %231 = vector.shape_cast %228 : vector<16x64xf32> to vector<1x16x64xf32>
    tpu.vector_store %arg30[%c0_76, %c0_77, %c0_78], %231 {strides = array<i32>} : memref<1x16x64xf32, #tpu.memory_space<vmem>>, vector<1x16x64xf32>,
    %c0_79 = arith.constant 0 : index
    %c0_80 = arith.constant 0 : index
    %232 = vector.load %arg14[%c0_79, %c0_80] : memref<16x144xf32, #tpu.memory_space<vmem>>, vector<16x144xf32>
    %c0_81 = arith.constant 0 : index
    %c0_82 = arith.constant 0 : index
    %233 = vector.load %arg15[%c0_81, %c0_82] : memref<16x1xf32, #tpu.memory_space<vmem>>, vector<16x1xf32>
    %c0_83 = arith.constant 0 : index
    %c0_84 = arith.constant 0 : index
    %234 = vector.load %arg24[%c0_83, %c0_84] : memref<2x32xf32, #tpu.memory_space<vmem>>, vector<1x32xf32>
    %c1_85 = arith.constant 1 : index
    %c0_86 = arith.constant 0 : index
    %235 = vector.load %arg24[%c1_85, %c0_86] : memref<2x32xf32, #tpu.memory_space<vmem>>, vector<1x32xf32>
    %cst_87 = arith.constant 0.000000e+00 : f32
    %236 = vector.broadcast %cst_87 : f32 to vector<16x9xf32>
    %237 = tpu.concatenate %236, %228, %236 in 1 : vector<16x9xf32>, vector<16x64xf32>, vector<16x9xf32> -> vector<16x82xf32>
    %cst_88 = arith.constant 0.000000e+00 : f32
    %238 = vector.broadcast %cst_88 : f32 to vector<16x1xf32>
    %239 = vector.extract_strided_slice %237 {offsets = [0, 1], sizes = [16, 8], strides = [1, 1]} : vector<16x82xf32> to vector<16x8xf32>
    %240 = vector.extract_strided_slice %237 {offsets = [0, 17], sizes = [16, 8], strides = [1, 1]} : vector<16x82xf32> to vector<16x8xf32>
    %241 = vector.extract_strided_slice %237 {offsets = [0, 33], sizes = [16, 8], strides = [1, 1]} : vector<16x82xf32> to vector<16x8xf32>
    %242 = vector.extract_strided_slice %237 {offsets = [0, 49], sizes = [16, 8], strides = [1, 1]} : vector<16x82xf32> to vector<16x8xf32>
    %243 = tpu.concatenate %238, %239, %240, %241, %242, %238 in 1 : vector<16x1xf32>, vector<16x8xf32>, vector<16x8xf32>, vector<16x8xf32>, vector<16x8xf32>, vector<16x1xf32> -> vector<16x34xf32>
    %244 = vector.extract_strided_slice %243 {offsets = [0, 0], sizes = [16, 32], strides = [1, 1]} : vector<16x34xf32> to vector<16x32xf32>
    %245 = vector.broadcast %234 : vector<1x32xf32> to vector<16x32xf32>
    %246 = arith.mulf %244, %245 : vector<16x32xf32>
    %247 = vector.extract_strided_slice %243 {offsets = [0, 1], sizes = [16, 32], strides = [1, 1]} : vector<16x34xf32> to vector<16x32xf32>
    %248 = vector.extract_strided_slice %243 {offsets = [0, 2], sizes = [16, 32], strides = [1, 1]} : vector<16x34xf32> to vector<16x32xf32>
    %249 = vector.broadcast %235 : vector<1x32xf32> to vector<16x32xf32>
    %250 = arith.mulf %248, %249 : vector<16x32xf32>
    %251 = vector.extract_strided_slice %237 {offsets = [0, 9], sizes = [16, 8], strides = [1, 1]} : vector<16x82xf32> to vector<16x8xf32>
    %252 = vector.extract_strided_slice %237 {offsets = [0, 25], sizes = [16, 8], strides = [1, 1]} : vector<16x82xf32> to vector<16x8xf32>
    %253 = vector.extract_strided_slice %237 {offsets = [0, 41], sizes = [16, 8], strides = [1, 1]} : vector<16x82xf32> to vector<16x8xf32>
    %254 = vector.extract_strided_slice %237 {offsets = [0, 57], sizes = [16, 8], strides = [1, 1]} : vector<16x82xf32> to vector<16x8xf32>
    %255 = tpu.concatenate %238, %251, %252, %253, %254, %238 in 1 : vector<16x1xf32>, vector<16x8xf32>, vector<16x8xf32>, vector<16x8xf32>, vector<16x8xf32>, vector<16x1xf32> -> vector<16x34xf32>
    %256 = vector.extract_strided_slice %255 {offsets = [0, 0], sizes = [16, 32], strides = [1, 1]} : vector<16x34xf32> to vector<16x32xf32>
    %257 = vector.broadcast %234 : vector<1x32xf32> to vector<16x32xf32>
    %258 = arith.mulf %256, %257 : vector<16x32xf32>
    %259 = vector.extract_strided_slice %255 {offsets = [0, 1], sizes = [16, 32], strides = [1, 1]} : vector<16x34xf32> to vector<16x32xf32>
    %260 = vector.extract_strided_slice %255 {offsets = [0, 2], sizes = [16, 32], strides = [1, 1]} : vector<16x34xf32> to vector<16x32xf32>
    %261 = vector.broadcast %235 : vector<1x32xf32> to vector<16x32xf32>
    %262 = arith.mulf %260, %261 : vector<16x32xf32>
    %263 = vector.extract_strided_slice %237 {offsets = [0, 17], sizes = [16, 8], strides = [1, 1]} : vector<16x82xf32> to vector<16x8xf32>
    %264 = vector.extract_strided_slice %237 {offsets = [0, 33], sizes = [16, 8], strides = [1, 1]} : vector<16x82xf32> to vector<16x8xf32>
    %265 = vector.extract_strided_slice %237 {offsets = [0, 49], sizes = [16, 8], strides = [1, 1]} : vector<16x82xf32> to vector<16x8xf32>
    %266 = vector.extract_strided_slice %237 {offsets = [0, 65], sizes = [16, 8], strides = [1, 1]} : vector<16x82xf32> to vector<16x8xf32>
    %267 = tpu.concatenate %238, %263, %264, %265, %266, %238 in 1 : vector<16x1xf32>, vector<16x8xf32>, vector<16x8xf32>, vector<16x8xf32>, vector<16x8xf32>, vector<16x1xf32> -> vector<16x34xf32>
    %268 = vector.extract_strided_slice %267 {offsets = [0, 0], sizes = [16, 32], strides = [1, 1]} : vector<16x34xf32> to vector<16x32xf32>
    %269 = vector.broadcast %234 : vector<1x32xf32> to vector<16x32xf32>
    %270 = arith.mulf %268, %269 : vector<16x32xf32>
    %271 = vector.extract_strided_slice %267 {offsets = [0, 1], sizes = [16, 32], strides = [1, 1]} : vector<16x34xf32> to vector<16x32xf32>
    %272 = vector.extract_strided_slice %267 {offsets = [0, 2], sizes = [16, 32], strides = [1, 1]} : vector<16x34xf32> to vector<16x32xf32>
    %273 = vector.broadcast %235 : vector<1x32xf32> to vector<16x32xf32>
    %274 = arith.mulf %272, %273 : vector<16x32xf32>
    %275 = tpu.concatenate %246, %247, %250, %258, %259, %262, %270, %271, %274 in 0 : vector<16x32xf32>, vector<16x32xf32>, vector<16x32xf32>, vector<16x32xf32>, vector<16x32xf32>, vector<16x32xf32>, vector<16x32xf32>, vector<16x32xf32>, vector<16x32xf32> -> vector<144x32xf32>
    %cst_89 = arith.constant dense<0.000000e+00> : vector<16x32xf32>
    %276 = tpu.matmul %232, %275, %cst_89 {dimension_numbers = #tpu.dot_dimension_numbers<[1], [0], [0], [1], [0, 0, 1, 1], [], []>} : vector<16x144xf32>, vector<144x32xf32>, vector<16x32xf32> -> vector<16x32xf32>
    %c0_90 = arith.constant 0 : index
    %c0_91 = arith.constant 0 : index
    %277 = vector.load %arg25[%c0_90, %c0_91] : memref<32x16xf32, #tpu.memory_space<vmem>>, vector<32x16xf32>
    %cst_92 = arith.constant dense<0.000000e+00> : vector<16x16xf32>
    %278 = tpu.matmul %276, %277, %cst_92 {dimension_numbers = #tpu.dot_dimension_numbers<[1], [0], [0], [1], [0, 0, 1, 1], [], []>} : vector<16x32xf32>, vector<32x16xf32>, vector<16x16xf32> -> vector<16x16xf32>
    %279 = vector.broadcast %233 : vector<16x1xf32> to vector<16x16xf32>
    %280 = arith.addf %278, %279 : vector<16x16xf32>
    %c0_93 = arith.constant 0 : index
    %c0_94 = arith.constant 0 : index
    %281 = vector.load %arg16[%c0_93, %c0_94] : memref<16x144xf32, #tpu.memory_space<vmem>>, vector<16x144xf32>
    %c0_95 = arith.constant 0 : index
    %c0_96 = arith.constant 0 : index
    %282 = vector.load %arg17[%c0_95, %c0_96] : memref<16x1xf32, #tpu.memory_space<vmem>>, vector<16x1xf32>
    %c0_97 = arith.constant 0 : index
    %c0_98 = arith.constant 0 : index
    %283 = vector.load %arg26[%c0_97, %c0_98] : memref<2x16xf32, #tpu.memory_space<vmem>>, vector<1x16xf32>
    %c1_99 = arith.constant 1 : index
    %c0_100 = arith.constant 0 : index
    %284 = vector.load %arg26[%c1_99, %c0_100] : memref<2x16xf32, #tpu.memory_space<vmem>>, vector<1x16xf32>
    %cst_101 = arith.constant 0.000000e+00 : f32
    %285 = vector.broadcast %cst_101 : f32 to vector<16x16xf32>
    %286 = arith.cmpf ogt, %280, %285 : vector<16x16xf32>
    %287 = math.exp %280 : vector<16x16xf32>
    %cst_102 = arith.constant 1.000000e+00 : f32
    %288 = vector.broadcast %cst_102 : f32 to vector<16x16xf32>
    %289 = arith.subf %287, %288 : vector<16x16xf32>
    %290 = arith.select %286, %280, %289 : vector<16x16xi1>, vector<16x16xf32>
    %cst_103 = arith.constant 0.000000e+00 : f32
    %291 = vector.broadcast %cst_103 : f32 to vector<16x5xf32>
    %292 = tpu.concatenate %291, %290, %291 in 1 : vector<16x5xf32>, vector<16x16xf32>, vector<16x5xf32> -> vector<16x26xf32>
    %293 = vector.extract_strided_slice %292 {offsets = [0, 0], sizes = [16, 16], strides = [1, 1]} : vector<16x26xf32> to vector<16x16xf32>
    %294 = vector.broadcast %283 : vector<1x16xf32> to vector<16x16xf32>
    %295 = arith.mulf %293, %294 : vector<16x16xf32>
    %296 = vector.extract_strided_slice %292 {offsets = [0, 1], sizes = [16, 16], strides = [1, 1]} : vector<16x26xf32> to vector<16x16xf32>
    %297 = vector.extract_strided_slice %292 {offsets = [0, 2], sizes = [16, 16], strides = [1, 1]} : vector<16x26xf32> to vector<16x16xf32>
    %298 = vector.broadcast %284 : vector<1x16xf32> to vector<16x16xf32>
    %299 = arith.mulf %297, %298 : vector<16x16xf32>
    %300 = vector.extract_strided_slice %292 {offsets = [0, 4], sizes = [16, 16], strides = [1, 1]} : vector<16x26xf32> to vector<16x16xf32>
    %301 = vector.broadcast %283 : vector<1x16xf32> to vector<16x16xf32>
    %302 = arith.mulf %300, %301 : vector<16x16xf32>
    %303 = vector.extract_strided_slice %292 {offsets = [0, 5], sizes = [16, 16], strides = [1, 1]} : vector<16x26xf32> to vector<16x16xf32>
    %304 = vector.extract_strided_slice %292 {offsets = [0, 6], sizes = [16, 16], strides = [1, 1]} : vector<16x26xf32> to vector<16x16xf32>
    %305 = vector.broadcast %284 : vector<1x16xf32> to vector<16x16xf32>
    %306 = arith.mulf %304, %305 : vector<16x16xf32>
    %307 = vector.extract_strided_slice %292 {offsets = [0, 8], sizes = [16, 16], strides = [1, 1]} : vector<16x26xf32> to vector<16x16xf32>
    %308 = vector.broadcast %283 : vector<1x16xf32> to vector<16x16xf32>
    %309 = arith.mulf %307, %308 : vector<16x16xf32>
    %310 = vector.extract_strided_slice %292 {offsets = [0, 9], sizes = [16, 16], strides = [1, 1]} : vector<16x26xf32> to vector<16x16xf32>
    %311 = vector.extract_strided_slice %292 {offsets = [0, 10], sizes = [16, 16], strides = [1, 1]} : vector<16x26xf32> to vector<16x16xf32>
    %312 = vector.broadcast %284 : vector<1x16xf32> to vector<16x16xf32>
    %313 = arith.mulf %311, %312 : vector<16x16xf32>
    %314 = tpu.concatenate %295, %296, %299, %302, %303, %306, %309, %310, %313 in 0 : vector<16x16xf32>, vector<16x16xf32>, vector<16x16xf32>, vector<16x16xf32>, vector<16x16xf32>, vector<16x16xf32>, vector<16x16xf32>, vector<16x16xf32>, vector<16x16xf32> -> vector<144x16xf32>
    %cst_104 = arith.constant dense<0.000000e+00> : vector<16x16xf32>
    %315 = tpu.matmul %281, %314, %cst_104 {dimension_numbers = #tpu.dot_dimension_numbers<[1], [0], [0], [1], [0, 0, 1, 1], [], []>} : vector<16x144xf32>, vector<144x16xf32>, vector<16x16xf32> -> vector<16x16xf32>
    %316 = arith.addf %280, %315 : vector<16x16xf32>
    %317 = vector.broadcast %282 : vector<16x1xf32> to vector<16x16xf32>
    %318 = arith.addf %316, %317 : vector<16x16xf32>
    %c0_105 = arith.constant 0 : index
    %c0_106 = arith.constant 0 : index
    %c0_107 = arith.constant 0 : index
    %319 = vector.load %arg31[%c0_105, %c0_106, %c0_107] : memref<1x16x16xf32, #tpu.memory_space<vmem>>, vector<1x16x16xf32>
    %320 = vector.shape_cast %319 : vector<1x16x16xf32> to vector<16x16xf32>
    %321 = vector.shape_cast %318 : vector<16x16xf32> to vector<1x16x16xf32>
    tpu.vector_store %arg31[%c0_105, %c0_106, %c0_107], %321 {strides = array<i32>} : memref<1x16x16xf32, #tpu.memory_space<vmem>>, vector<1x16x16xf32>,
    %c0_108 = arith.constant 0 : index
    %c0_109 = arith.constant 0 : index
    %322 = vector.load %arg18[%c0_108, %c0_109] : memref<16x144xf32, #tpu.memory_space<vmem>>, vector<16x144xf32>
    %c0_110 = arith.constant 0 : index
    %c0_111 = arith.constant 0 : index
    %323 = vector.load %arg19[%c0_110, %c0_111] : memref<16x1xf32, #tpu.memory_space<vmem>>, vector<16x1xf32>
    %c0_112 = arith.constant 0 : index
    %c0_113 = arith.constant 0 : index
    %324 = vector.load %arg26[%c0_112, %c0_113] : memref<2x16xf32, #tpu.memory_space<vmem>>, vector<1x16xf32>
    %c1_114 = arith.constant 1 : index
    %c0_115 = arith.constant 0 : index
    %325 = vector.load %arg26[%c1_114, %c0_115] : memref<2x16xf32, #tpu.memory_space<vmem>>, vector<1x16xf32>
    %cst_116 = arith.constant 0.000000e+00 : f32
    %326 = vector.broadcast %cst_116 : f32 to vector<16x16xf32>
    %327 = arith.cmpf ogt, %318, %326 : vector<16x16xf32>
    %328 = math.exp %318 : vector<16x16xf32>
    %cst_117 = arith.constant 1.000000e+00 : f32
    %329 = vector.broadcast %cst_117 : f32 to vector<16x16xf32>
    %330 = arith.subf %328, %329 : vector<16x16xf32>
    %331 = arith.select %327, %318, %330 : vector<16x16xi1>, vector<16x16xf32>
    %cst_118 = arith.constant 0.000000e+00 : f32
    %332 = vector.broadcast %cst_118 : f32 to vector<16x5xf32>
    %333 = tpu.concatenate %332, %331, %332 in 1 : vector<16x5xf32>, vector<16x16xf32>, vector<16x5xf32> -> vector<16x26xf32>
    %334 = vector.extract_strided_slice %333 {offsets = [0, 0], sizes = [16, 16], strides = [1, 1]} : vector<16x26xf32> to vector<16x16xf32>
    %335 = vector.broadcast %324 : vector<1x16xf32> to vector<16x16xf32>
    %336 = arith.mulf %334, %335 : vector<16x16xf32>
    %337 = vector.extract_strided_slice %333 {offsets = [0, 1], sizes = [16, 16], strides = [1, 1]} : vector<16x26xf32> to vector<16x16xf32>
    %338 = vector.extract_strided_slice %333 {offsets = [0, 2], sizes = [16, 16], strides = [1, 1]} : vector<16x26xf32> to vector<16x16xf32>
    %339 = vector.broadcast %325 : vector<1x16xf32> to vector<16x16xf32>
    %340 = arith.mulf %338, %339 : vector<16x16xf32>
    %341 = vector.extract_strided_slice %333 {offsets = [0, 4], sizes = [16, 16], strides = [1, 1]} : vector<16x26xf32> to vector<16x16xf32>
    %342 = vector.broadcast %324 : vector<1x16xf32> to vector<16x16xf32>
    %343 = arith.mulf %341, %342 : vector<16x16xf32>
    %344 = vector.extract_strided_slice %333 {offsets = [0, 5], sizes = [16, 16], strides = [1, 1]} : vector<16x26xf32> to vector<16x16xf32>
    %345 = vector.extract_strided_slice %333 {offsets = [0, 6], sizes = [16, 16], strides = [1, 1]} : vector<16x26xf32> to vector<16x16xf32>
    %346 = vector.broadcast %325 : vector<1x16xf32> to vector<16x16xf32>
    %347 = arith.mulf %345, %346 : vector<16x16xf32>
    %348 = vector.extract_strided_slice %333 {offsets = [0, 8], sizes = [16, 16], strides = [1, 1]} : vector<16x26xf32> to vector<16x16xf32>
    %349 = vector.broadcast %324 : vector<1x16xf32> to vector<16x16xf32>
    %350 = arith.mulf %348, %349 : vector<16x16xf32>
    %351 = vector.extract_strided_slice %333 {offsets = [0, 9], sizes = [16, 16], strides = [1, 1]} : vector<16x26xf32> to vector<16x16xf32>
    %352 = vector.extract_strided_slice %333 {offsets = [0, 10], sizes = [16, 16], strides = [1, 1]} : vector<16x26xf32> to vector<16x16xf32>
    %353 = vector.broadcast %325 : vector<1x16xf32> to vector<16x16xf32>
    %354 = arith.mulf %352, %353 : vector<16x16xf32>
    %355 = tpu.concatenate %336, %337, %340, %343, %344, %347, %350, %351, %354 in 0 : vector<16x16xf32>, vector<16x16xf32>, vector<16x16xf32>, vector<16x16xf32>, vector<16x16xf32>, vector<16x16xf32>, vector<16x16xf32>, vector<16x16xf32>, vector<16x16xf32> -> vector<144x16xf32>
    %cst_119 = arith.constant dense<0.000000e+00> : vector<16x16xf32>
    %356 = tpu.matmul %322, %355, %cst_119 {dimension_numbers = #tpu.dot_dimension_numbers<[1], [0], [0], [1], [0, 0, 1, 1], [], []>} : vector<16x144xf32>, vector<144x16xf32>, vector<16x16xf32> -> vector<16x16xf32>
    %357 = arith.addf %318, %356 : vector<16x16xf32>
    %358 = vector.broadcast %323 : vector<16x1xf32> to vector<16x16xf32>
    %359 = arith.addf %357, %358 : vector<16x16xf32>
    %c0_120 = arith.constant 0 : index
    %c0_121 = arith.constant 0 : index
    %c0_122 = arith.constant 0 : index
    %360 = vector.load %arg32[%c0_120, %c0_121, %c0_122] : memref<1x16x16xf32, #tpu.memory_space<vmem>>, vector<1x16x16xf32>
    %361 = vector.shape_cast %360 : vector<1x16x16xf32> to vector<16x16xf32>
    %362 = vector.shape_cast %359 : vector<16x16xf32> to vector<1x16x16xf32>
    tpu.vector_store %arg32[%c0_120, %c0_121, %c0_122], %362 {strides = array<i32>} : memref<1x16x16xf32, #tpu.memory_space<vmem>>, vector<1x16x16xf32>,
    return
  }
  func.func @transform_0(%arg0: i32) -> (i32, i32, i32) {
    %c0_i32 = arith.constant 0 : i32
    %c0_i32_0 = arith.constant 0 : i32
    %c0_i32_1 = arith.constant 0 : i32
    return %arg0, %c0_i32, %c0_i32_0 : i32, i32, i32
  }
  func.func @transform_1(%arg0: i32) -> (i32, i32) {
    %c0_i32 = arith.constant 0 : i32
    %c0_i32_0 = arith.constant 0 : i32
    %c0_i32_1 = arith.constant 0 : i32
    return %c0_i32, %c0_i32_0 : i32, i32
  }
  func.func @transform_2(%arg0: i32) -> (i32, i32) {
    %c0_i32 = arith.constant 0 : i32
    %c0_i32_0 = arith.constant 0 : i32
    %c0_i32_1 = arith.constant 0 : i32
    return %c0_i32, %c0_i32_0 : i32, i32
  }
  func.func @transform_3(%arg0: i32) -> (i32, i32) {
    %c0_i32 = arith.constant 0 : i32
    %c0_i32_0 = arith.constant 0 : i32
    %c0_i32_1 = arith.constant 0 : i32
    return %c0_i32, %c0_i32_0 : i32, i32
  }
  func.func @transform_4(%arg0: i32) -> (i32, i32) {
    %c0_i32 = arith.constant 0 : i32
    %c0_i32_0 = arith.constant 0 : i32
    %c0_i32_1 = arith.constant 0 : i32
    return %c0_i32, %c0_i32_0 : i32, i32
  }
  func.func @transform_5(%arg0: i32) -> (i32, i32) {
    %c0_i32 = arith.constant 0 : i32
    %c0_i32_0 = arith.constant 0 : i32
    %c0_i32_1 = arith.constant 0 : i32
    return %c0_i32, %c0_i32_0 : i32, i32
  }
  func.func @transform_6(%arg0: i32) -> (i32, i32) {
    %c0_i32 = arith.constant 0 : i32
    %c0_i32_0 = arith.constant 0 : i32
    %c0_i32_1 = arith.constant 0 : i32
    return %c0_i32, %c0_i32_0 : i32, i32
  }
  func.func @transform_7(%arg0: i32) -> (i32, i32) {
    %c0_i32 = arith.constant 0 : i32
    %c0_i32_0 = arith.constant 0 : i32
    %c0_i32_1 = arith.constant 0 : i32
    return %c0_i32, %c0_i32_0 : i32, i32
  }
  func.func @transform_8(%arg0: i32) -> (i32, i32) {
    %c0_i32 = arith.constant 0 : i32
    %c0_i32_0 = arith.constant 0 : i32
    %c0_i32_1 = arith.constant 0 : i32
    return %c0_i32, %c0_i32_0 : i32, i32
  }
  func.func @transform_9(%arg0: i32) -> (i32, i32) {
    %c0_i32 = arith.constant 0 : i32
    %c0_i32_0 = arith.constant 0 : i32
    %c0_i32_1 = arith.constant 0 : i32
    return %c0_i32, %c0_i32_0 : i32, i32
  }
  func.func @transform_10(%arg0: i32) -> (i32, i32) {
    %c0_i32 = arith.constant 0 : i32
    %c0_i32_0 = arith.constant 0 : i32
    %c0_i32_1 = arith.constant 0 : i32
    return %c0_i32, %c0_i32_0 : i32, i32
  }
  func.func @transform_11(%arg0: i32) -> (i32, i32) {
    %c0_i32 = arith.constant 0 : i32
    %c0_i32_0 = arith.constant 0 : i32
    %c0_i32_1 = arith.constant 0 : i32
    return %c0_i32, %c0_i32_0 : i32, i32
  }
  func.func @transform_12(%arg0: i32) -> (i32, i32) {
    %c0_i32 = arith.constant 0 : i32
    %c0_i32_0 = arith.constant 0 : i32
    %c0_i32_1 = arith.constant 0 : i32
    return %c0_i32, %c0_i32_0 : i32, i32
  }
  func.func @transform_13(%arg0: i32) -> (i32, i32) {
    %c0_i32 = arith.constant 0 : i32
    %c0_i32_0 = arith.constant 0 : i32
    %c0_i32_1 = arith.constant 0 : i32
    return %c0_i32, %c0_i32_0 : i32, i32
  }
  func.func @transform_14(%arg0: i32) -> (i32, i32) {
    %c0_i32 = arith.constant 0 : i32
    %c0_i32_0 = arith.constant 0 : i32
    %c0_i32_1 = arith.constant 0 : i32
    return %c0_i32, %c0_i32_0 : i32, i32
  }
  func.func @transform_15(%arg0: i32) -> (i32, i32) {
    %c0_i32 = arith.constant 0 : i32
    %c0_i32_0 = arith.constant 0 : i32
    %c0_i32_1 = arith.constant 0 : i32
    return %c0_i32, %c0_i32_0 : i32, i32
  }
  func.func @transform_16(%arg0: i32) -> (i32, i32) {
    %c0_i32 = arith.constant 0 : i32
    %c0_i32_0 = arith.constant 0 : i32
    %c0_i32_1 = arith.constant 0 : i32
    return %c0_i32, %c0_i32_0 : i32, i32
  }
  func.func @transform_17(%arg0: i32) -> (i32, i32) {
    %c0_i32 = arith.constant 0 : i32
    %c0_i32_0 = arith.constant 0 : i32
    %c0_i32_1 = arith.constant 0 : i32
    return %c0_i32, %c0_i32_0 : i32, i32
  }
  func.func @transform_18(%arg0: i32) -> (i32, i32) {
    %c0_i32 = arith.constant 0 : i32
    %c0_i32_0 = arith.constant 0 : i32
    %c0_i32_1 = arith.constant 0 : i32
    return %c0_i32, %c0_i32_0 : i32, i32
  }
  func.func @transform_19(%arg0: i32) -> (i32, i32) {
    %c0_i32 = arith.constant 0 : i32
    %c0_i32_0 = arith.constant 0 : i32
    %c0_i32_1 = arith.constant 0 : i32
    return %c0_i32, %c0_i32_0 : i32, i32
  }
  func.func @transform_20(%arg0: i32) -> (i32, i32) {
    %c0_i32 = arith.constant 0 : i32
    %c0_i32_0 = arith.constant 0 : i32
    %c0_i32_1 = arith.constant 0 : i32
    return %c0_i32, %c0_i32_0 : i32, i32
  }
  func.func @transform_21(%arg0: i32) -> (i32, i32) {
    %c0_i32 = arith.constant 0 : i32
    %c0_i32_0 = arith.constant 0 : i32
    %c0_i32_1 = arith.constant 0 : i32
    return %c0_i32, %c0_i32_0 : i32, i32
  }
  func.func @transform_22(%arg0: i32) -> (i32, i32) {
    %c0_i32 = arith.constant 0 : i32
    %c0_i32_0 = arith.constant 0 : i32
    %c0_i32_1 = arith.constant 0 : i32
    return %c0_i32, %c0_i32_0 : i32, i32
  }
  func.func @transform_23(%arg0: i32) -> (i32, i32) {
    %c0_i32 = arith.constant 0 : i32
    %c0_i32_0 = arith.constant 0 : i32
    %c0_i32_1 = arith.constant 0 : i32
    return %c0_i32, %c0_i32_0 : i32, i32
  }
  func.func @transform_24(%arg0: i32) -> (i32, i32) {
    %c0_i32 = arith.constant 0 : i32
    %c0_i32_0 = arith.constant 0 : i32
    %c0_i32_1 = arith.constant 0 : i32
    return %c0_i32, %c0_i32_0 : i32, i32
  }
  func.func @transform_25(%arg0: i32) -> (i32, i32) {
    %c0_i32 = arith.constant 0 : i32
    %c0_i32_0 = arith.constant 0 : i32
    %c0_i32_1 = arith.constant 0 : i32
    return %c0_i32, %c0_i32_0 : i32, i32
  }
  func.func @transform_26(%arg0: i32) -> (i32, i32, i32) {
    %c0_i32 = arith.constant 0 : i32
    %c0_i32_0 = arith.constant 0 : i32
    %c0_i32_1 = arith.constant 0 : i32
    return %arg0, %c0_i32, %c0_i32_0 : i32, i32, i32
  }
  func.func @transform_27(%arg0: i32) -> (i32, i32, i32) {
    %c0_i32 = arith.constant 0 : i32
    %c0_i32_0 = arith.constant 0 : i32
    %c0_i32_1 = arith.constant 0 : i32
    return %arg0, %c0_i32, %c0_i32_0 : i32, i32, i32
  }
  func.func @transform_28(%arg0: i32) -> (i32, i32, i32) {
    %c0_i32 = arith.constant 0 : i32
    %c0_i32_0 = arith.constant 0 : i32
    %c0_i32_1 = arith.constant 0 : i32
    return %arg0, %c0_i32, %c0_i32_0 : i32, i32, i32
  }
  func.func @transform_29(%arg0: i32) -> (i32, i32, i32) {
    %c0_i32 = arith.constant 0 : i32
    %c0_i32_0 = arith.constant 0 : i32
    %c0_i32_1 = arith.constant 0 : i32
    return %arg0, %c0_i32, %c0_i32_0 : i32, i32, i32
  }
  func.func @transform_30(%arg0: i32) -> (i32, i32, i32) {
    %c0_i32 = arith.constant 0 : i32
    %c0_i32_0 = arith.constant 0 : i32
    %c0_i32_1 = arith.constant 0 : i32
    return %arg0, %c0_i32, %c0_i32_0 : i32, i32, i32
  }
  func.func @transform_31(%arg0: i32) -> (i32, i32, i32) {
    %c0_i32 = arith.constant 0 : i32
    %c0_i32_0 = arith.constant 0 : i32
    %c0_i32_1 = arith.constant 0 : i32
    return %arg0, %c0_i32, %c0_i32_0 : i32, i32, i32
  }
}

</mosaic_0001>

<llo_original>
// kernel: tpu_custom_call.1
$region0: #{tpu_custom_call.1}
  #allocation0 [shape = 'u32[]', space=smem, size = 0x4, offset = 0x4, fixed_abs, tag = 'smem constant byte address 0x4 - core index']
  #allocation1 [shape = 'u32[144,128]{1,0:T(1,128)}', space=vmem, size = 0x12000, scoped, tag = 'internal scratch']
  %s0 = inlined_call_operand.smem [shape: u32[32], index: -1, kind: input, shape index: {}]
  %s1 = sld [smem:[%s0]]
  %s2 = scalar_lea.smem %s0, 1
  %s3 = sld [smem:[%s2]]
  %s4 = scalar_lea.smem %s0, 2
  %s5 = sld [smem:[%s4]]
  %s6 = scalar_lea.smem %s0, 3
  %s7 = sld [smem:[%s6]]
  %s8 = scalar_lea.smem %s0, 4
  %s9 = sld [smem:[%s8]]
  %s10 = scalar_lea.smem %s0, 5
  %s11 = sld [smem:[%s10]]
  %s12 = scalar_lea.smem %s0, 6
  %s13 = sld [smem:[%s12]]
  %s14 = scalar_lea.smem %s0, 7
  %s15 = sld [smem:[%s14]]
  %s16 = scalar_lea.smem %s0, 8
  %s17 = sld [smem:[%s16]]
  %s18 = scalar_lea.smem %s0, 9
  %s19 = sld [smem:[%s18]]
  %s20 = scalar_lea.smem %s0, 10
  %s21 = sld [smem:[%s20]]
  %s22 = scalar_lea.smem %s0, 11
  %s23 = sld [smem:[%s22]]
  %s24 = scalar_lea.smem %s0, 12
  %s25 = sld [smem:[%s24]]
  %s26 = scalar_lea.smem %s0, 13
  %s27 = sld [smem:[%s26]]
  %s28 = scalar_lea.smem %s0, 14
  %s29 = sld [smem:[%s28]]
  %s30 = scalar_lea.smem %s0, 15
  %s31 = sld [smem:[%s30]]
  %s32 = scalar_lea.smem %s0, 16
  %s33 = sld [smem:[%s32]]
  %s34 = scalar_lea.smem %s0, 17
  %s35 = sld [smem:[%s34]]
  %s36 = scalar_lea.smem %s0, 18
  %s37 = sld [smem:[%s36]]
  %s38 = scalar_lea.smem %s0, 19
  %s39 = sld [smem:[%s38]]
  %s40 = scalar_lea.smem %s0, 20
  %s41 = sld [smem:[%s40]]
  %s42 = scalar_lea.smem %s0, 21
  %s43 = sld [smem:[%s42]]
  %s44 = scalar_lea.smem %s0, 22
  %s45 = sld [smem:[%s44]]
  %s46 = scalar_lea.smem %s0, 23
  %s47 = sld [smem:[%s46]]
  %s48 = scalar_lea.smem %s0, 24
  %s49 = sld [smem:[%s48]]
  %s50 = scalar_lea.smem %s0, 25
  %s51 = sld [smem:[%s50]]
  %s52 = scalar_lea.smem %s0, 26
  %s53 = sld [smem:[%s52]]
  %s54 = scalar_lea.smem %s0, 27
  %s55 = sld [smem:[%s54]]
  %s56 = scalar_lea.smem %s0, 28
  %s57 = sld [smem:[%s56]]
  %s58 = scalar_lea.smem %s0, 29
  %s59 = sld [smem:[%s58]]
  %s60 = scalar_lea.smem %s0, 30
  %s61 = sld [smem:[%s60]]
  %s62 = scalar_lea.smem %s0, 31
  %s63 = sld [smem:[%s62]]
  %64 = xla_tuple %s53, %s55, %s57, %s59, %s61, %s63
  %s65 = sld [smem:[#allocation0]]
  $region177: #{tpu_custom_call.1} parent=0
    _
  %s67 = ssub.s32 1, %s65
  %s68 = scalar_select 0, %s67, %s65
  $region1: #{tpu_custom_call.1} parent=0
    #allocation2 [shape = 'u8[16384]{0}', space=vmem, size = 0x4000, scoped, tag = 'output window, operand 0']
    #allocation3 [shape = 's32[2]{0}', space=sflag, size = 0x8, scoped, tag = 'scoped memory for tpu_custom_call.1']
    #allocation4 [shape = 'u8[16384]{0}', space=vmem, size = 0x4000, scoped, tag = 'output window, operand 1']
    #allocation5 [shape = 's32[2]{0}', space=sflag, size = 0x8, scoped, tag = 'scoped memory for tpu_custom_call.1']
    #allocation6 [shape = 'u8[16384]{0}', space=vmem, size = 0x4000, scoped, tag = 'output window, operand 2']
    #allocation7 [shape = 'u8[16384]{0}', space=vmem, size = 0x4000, scoped, tag = 'output window, operand 3']
    #allocation8 [shape = 's32[2]{0}', space=sflag, size = 0x8, scoped, tag = 'scoped memory for tpu_custom_call.1']
    #allocation9 [shape = 'u8[16384]{0}', space=vmem, size = 0x4000, scoped, tag = 'output window, operand 4']
    #allocation10 [shape = 'u8[16384]{0}', space=vmem, size = 0x4000, scoped, tag = 'output window, operand 5']
    #allocation11 [shape = 's32[2]{0}', space=sflag, size = 0x8, scoped, tag = 'scoped memory for tpu_custom_call.1']
    %69 = vsyncpa [#allocation3], 0
    %s70 = scalar_lea.sflag [#allocation3], 1
    %71 = vsyncpa %s70, 0
    %72 = vsyncpa [#allocation5], 0
    %s73 = scalar_lea.sflag [#allocation5], 1
    %74 = vsyncpa %s73, 0
    %75 = vsyncpa [#allocation8], 0
    %s76 = scalar_lea.sflag [#allocation8], 1
    %77 = vsyncpa %s76, 0
    %78 = vsyncpa [#allocation11], 0
    %s79 = scalar_lea.sflag [#allocation11], 1
    %80 = vsyncpa %s79, 0
    loop: start=0, step=1, limit=4
    $region2: #{tpu_custom_call.1} parent=1 // loop_pre_header
      _
    $region3: #{tpu_custom_call.1} parent=1 // loop_header
      %s82 = sphi 0, %s86
      %p83 = scmp.ge.s32.totalorder %s82, 4
      %s92 = sphi 0, %s94
      %s95 = sphi 0, %s92
      %s96 = sphi 0, %s95
      %s112 = sphi 0, %s96
      %s116 = sphi 0, %s116
      %s118 = sphi 0, %s116
      %s119 = sphi 0, %s118
      %s133 = sphi 0, %s119
      %s137 = sphi 0, %s137
      %s139 = sphi 0, %s137
      %s140 = sphi 0, %s139
      %s154 = sphi 0, %s140
      %s158 = sphi 0, %s158
      %s160 = sphi 0, %s158
      %s161 = sphi 0, %s160
      %s175 = sphi 0, %s161
      %s179 = sphi 0, %s179
      %s181 = sphi 0, %s179
      %s182 = sphi 0, %s181
      %s196 = sphi 0, %s182
      %s200 = sphi 0, %s200
      %s202 = sphi 0, %s200
      %s203 = sphi 0, %s202
      %s217 = sphi 0, %s203
      %s221 = sphi 0, %s221
      %s223 = sphi 0, %s221
      %s224 = sphi 0, %s223
      %s238 = sphi 0, %s224
      %s242 = sphi 0, %s242
      %s244 = sphi 0, %s242
      %s245 = sphi 0, %s244
      %s259 = sphi 0, %s245
      %s263 = sphi 0, %s263
      %s265 = sphi 0, %s263
      %s266 = sphi 0, %s265
      %s280 = sphi 0, %s266
      %s284 = sphi 0, %s284
      %s286 = sphi 0, %s284
      %s287 = sphi 0, %s286
      %s301 = sphi 0, %s287
      %s305 = sphi 0, %s305
      %s307 = sphi 0, %s305
      %s308 = sphi 0, %s307
      %s322 = sphi 0, %s308
      %s326 = sphi 0, %s326
      %s328 = sphi 0, %s326
      %s329 = sphi 0, %s328
      %s343 = sphi 0, %s329
      %s347 = sphi 0, %s347
      %s349 = sphi 0, %s347
      %s350 = sphi 0, %s349
      %s364 = sphi 0, %s350
      %s368 = sphi 0, %s368
      %s370 = sphi 0, %s368
      %s371 = sphi 0, %s370
      %s385 = sphi 0, %s371
      %s389 = sphi 0, %s389
      %s391 = sphi 0, %s389
      %s392 = sphi 0, %s391
      %s406 = sphi 0, %s392
      %s410 = sphi 0, %s410
      %s412 = sphi 0, %s410
      %s413 = sphi 0, %s412
      %s427 = sphi 0, %s413
      %s431 = sphi 0, %s431
      %s433 = sphi 0, %s431
      %s434 = sphi 0, %s433
      %s448 = sphi 0, %s434
      %s452 = sphi 0, %s452
      %s454 = sphi 0, %s452
      %s455 = sphi 0, %s454
      %s469 = sphi 0, %s455
      %s473 = sphi 0, %s473
      %s475 = sphi 0, %s473
      %s476 = sphi 0, %s475
      %s490 = sphi 0, %s476
      %s494 = sphi 0, %s494
      %s496 = sphi 0, %s494
      %s497 = sphi 0, %s496
      %s511 = sphi 0, %s497
      %s515 = sphi 0, %s515
      %s517 = sphi 0, %s515
      %s518 = sphi 0, %s517
      %s532 = sphi 0, %s518
      %s536 = sphi 0, %s536
      %s538 = sphi 0, %s536
      %s539 = sphi 0, %s538
      %s553 = sphi 0, %s539
      %s557 = sphi 0, %s557
      %s559 = sphi 0, %s557
      %s560 = sphi 0, %s559
      %s574 = sphi 0, %s560
      %s578 = sphi 0, %s578
      %s580 = sphi 0, %s578
      %s581 = sphi 0, %s580
      %s595 = sphi 0, %s581
      %s599 = sphi 0, %s599
      %s601 = sphi 0, %s599
      %s602 = sphi 0, %s601
      %s616 = sphi 0, %s602
      %s620 = sphi 0, %s620
      %s622 = sphi 0, %s620
      %s623 = sphi 0, %s622
      %s637 = sphi 0, %s623
      %s643 = sphi 0, %s645
      %s646 = sphi 0, %s643
      %s647 = sphi 0, %s646
      %s663 = sphi 0, %s647
      %s669 = sphi 0, %s671
      %s672 = sphi 0, %s669
      %s673 = sphi 0, %s672
      %s689 = sphi 0, %s673
      %s695 = sphi 0, %s697
      %s698 = sphi 0, %s695
      %s699 = sphi 0, %s698
      %s715 = sphi 0, %s699
      %s721 = sphi 0, %s723
      %s724 = sphi 0, %s721
      %s725 = sphi 0, %s724
      %s741 = sphi 0, %s725
      %s747 = sphi 0, %s749
      %s750 = sphi 0, %s747
      %s751 = sphi 0, %s750
      %s767 = sphi 0, %s751
      %s773 = sphi 0, %s775
      %s776 = sphi 0, %s773
      %s777 = sphi 0, %s776
      %s793 = sphi 0, %s777
    $region4: #{tpu_custom_call.1} parent=1 // loop_header_branch
      %85 = sbr.rel (%p83) target = $region8
    $region5: #{tpu_custom_call.1} parent=1 // loop_body
      %s87 = ssub.s32 %s82, 1
      %s88 = ssub.s32 %s82, 2
      %s89 = sadd.s32 %s82, 1
      %s90 = ssub.s32 %s82, %s89
      %p91 = scmp.eq.s32.totalorder %s90, 0
      %s93 = sadd.s32 %s92, 1
      %s94 = scalar_select %p91, %s92, %s93
      %p97 = pneg %p91
      %p98 = scmp.eq.s32.totalorder %s82, 1
      %p99 = por %p97, %p98
      %p100 = scmp.ne.s32.totalorder %s92, %s95
      %p101 = scmp.eq.s32.totalorder %s82, 0
      %p102 = por %p100, %p101
      %p103 = scmp.ne.s32.totalorder %s92, %s95
      %p104 = scmp.eq.s32.totalorder %s87, 1
      %p105 = por %p103, %p104
      %p106 = scmp.ne.s32.totalorder %s95, %s96
      %p107 = scmp.eq.s32.totalorder %s87, 0
      %p108 = por %p106, %p107
      %p109 = scmp.ne.s32.totalorder %s95, %s96
      %p110 = scmp.eq.s32.totalorder %s88, 1
      %p111 = por %p109, %p110
      %p113 = scmp.ne.s32.totalorder %s96, %s112
      %p114 = scmp.eq.s32.totalorder %s88, 0
      %p115 = por %p113, %p114
      %s117 = sadd.s32 %s116, 1
      %p120 = scmp.eq.s32.totalorder %s82, 1
      %p121 = scmp.ne.s32.totalorder %s116, %s118
      %p122 = scmp.eq.s32.totalorder %s82, 0
      %p123 = por %p121, %p122
      %p124 = scmp.ne.s32.totalorder %s116, %s118
      %p125 = scmp.eq.s32.totalorder %s87, 1
      %p126 = por %p124, %p125
      %p127 = scmp.ne.s32.totalorder %s118, %s119
      %p128 = scmp.eq.s32.totalorder %s87, 0
      %p129 = por %p127, %p128
      %p130 = scmp.ne.s32.totalorder %s118, %s119
      %p131 = scmp.eq.s32.totalorder %s88, 1
      %p132 = por %p130, %p131
      %p134 = scmp.ne.s32.totalorder %s119, %s133
      %p135 = scmp.eq.s32.totalorder %s88, 0
      %p136 = por %p134, %p135
      %s138 = sadd.s32 %s137, 1
      %p141 = scmp.eq.s32.totalorder %s82, 1
      %p142 = scmp.ne.s32.totalorder %s137, %s139
      %p143 = scmp.eq.s32.totalorder %s82, 0
      %p144 = por %p142, %p143
      %p145 = scmp.ne.s32.totalorder %s137, %s139
      %p146 = scmp.eq.s32.totalorder %s87, 1
      %p147 = por %p145, %p146
      %p148 = scmp.ne.s32.totalorder %s139, %s140
      %p149 = scmp.eq.s32.totalorder %s87, 0
      %p150 = por %p148, %p149
      %p151 = scmp.ne.s32.totalorder %s139, %s140
      %p152 = scmp.eq.s32.totalorder %s88, 1
      %p153 = por %p151, %p152
      %p155 = scmp.ne.s32.totalorder %s140, %s154
      %p156 = scmp.eq.s32.totalorder %s88, 0
      %p157 = por %p155, %p156
      %s159 = sadd.s32 %s158, 1
      %p162 = scmp.eq.s32.totalorder %s82, 1
      %p163 = scmp.ne.s32.totalorder %s158, %s160
      %p164 = scmp.eq.s32.totalorder %s82, 0
      %p165 = por %p163, %p164
      %p166 = scmp.ne.s32.totalorder %s158, %s160
      %p167 = scmp.eq.s32.totalorder %s87, 1
      %p168 = por %p166, %p167
      %p169 = scmp.ne.s32.totalorder %s160, %s161
      %p170 = scmp.eq.s32.totalorder %s87, 0
      %p171 = por %p169, %p170
      %p172 = scmp.ne.s32.totalorder %s160, %s161
      %p173 = scmp.eq.s32.totalorder %s88, 1
      %p174 = por %p172, %p173
      %p176 = scmp.ne.s32.totalorder %s161, %s175
      %p177 = scmp.eq.s32.totalorder %s88, 0
      %p178 = por %p176, %p177
      %s180 = sadd.s32 %s179, 1
      %p183 = scmp.eq.s32.totalorder %s82, 1
      %p184 = scmp.ne.s32.totalorder %s179, %s181
      %p185 = scmp.eq.s32.totalorder %s82, 0
      %p186 = por %p184, %p185
      %p187 = scmp.ne.s32.totalorder %s179, %s181
      %p188 = scmp.eq.s32.totalorder %s87, 1
      %p189 = por %p187, %p188
      %p190 = scmp.ne.s32.totalorder %s181, %s182
      %p191 = scmp.eq.s32.totalorder %s87, 0
      %p192 = por %p190, %p191
      %p193 = scmp.ne.s32.totalorder %s181, %s182
      %p194 = scmp.eq.s32.totalorder %s88, 1
      %p195 = por %p193, %p194
      %p197 = scmp.ne.s32.totalorder %s182, %s196
      %p198 = scmp.eq.s32.totalorder %s88, 0
      %p199 = por %p197, %p198
      %s201 = sadd.s32 %s200, 1
      %p204 = scmp.eq.s32.totalorder %s82, 1
      %p205 = scmp.ne.s32.totalorder %s200, %s202
      %p206 = scmp.eq.s32.totalorder %s82, 0
      %p207 = por %p205, %p206
      %p208 = scmp.ne.s32.totalorder %s200, %s202
      %p209 = scmp.eq.s32.totalorder %s87, 1
      %p210 = por %p208, %p209
      %p211 = scmp.ne.s32.totalorder %s202, %s203
      %p212 = scmp.eq.s32.totalorder %s87, 0
      %p213 = por %p211, %p212
      %p214 = scmp.ne.s32.totalorder %s202, %s203
      %p215 = scmp.eq.s32.totalorder %s88, 1
      %p216 = por %p214, %p215
      %p218 = scmp.ne.s32.totalorder %s203, %s217
      %p219 = scmp.eq.s32.totalorder %s88, 0
      %p220 = por %p218, %p219
      %s222 = sadd.s32 %s221, 1
      %p225 = scmp.eq.s32.totalorder %s82, 1
      %p226 = scmp.ne.s32.totalorder %s221, %s223
      %p227 = scmp.eq.s32.totalorder %s82, 0
      %p228 = por %p226, %p227
      %p229 = scmp.ne.s32.totalorder %s221, %s223
      %p230 = scmp.eq.s32.totalorder %s87, 1
      %p231 = por %p229, %p230
      %p232 = scmp.ne.s32.totalorder %s223, %s224
      %p233 = scmp.eq.s32.totalorder %s87, 0
      %p234 = por %p232, %p233
      %p235 = scmp.ne.s32.totalorder %s223, %s224
      %p236 = scmp.eq.s32.totalorder %s88, 1
      %p237 = por %p235, %p236
      %p239 = scmp.ne.s32.totalorder %s224, %s238
      %p240 = scmp.eq.s32.totalorder %s88, 0
      %p241 = por %p239, %p240
      %s243 = sadd.s32 %s242, 1
      %p246 = scmp.eq.s32.totalorder %s82, 1
      %p247 = scmp.ne.s32.totalorder %s242, %s244
      %p248 = scmp.eq.s32.totalorder %s82, 0
      %p249 = por %p247, %p248
      %p250 = scmp.ne.s32.totalorder %s242, %s244
      %p251 = scmp.eq.s32.totalorder %s87, 1
      %p252 = por %p250, %p251
      %p253 = scmp.ne.s32.totalorder %s244, %s245
      %p254 = scmp.eq.s32.totalorder %s87, 0
      %p255 = por %p253, %p254
      %p256 = scmp.ne.s32.totalorder %s244, %s245
      %p257 = scmp.eq.s32.totalorder %s88, 1
      %p258 = por %p256, %p257
      %p260 = scmp.ne.s32.totalorder %s245, %s259
      %p261 = scmp.eq.s32.totalorder %s88, 0
      %p262 = por %p260, %p261
      %s264 = sadd.s32 %s263, 1
      %p267 = scmp.eq.s32.totalorder %s82, 1
      %p268 = scmp.ne.s32.totalorder %s263, %s265
      %p269 = scmp.eq.s32.totalorder %s82, 0
      %p270 = por %p268, %p269
      %p271 = scmp.ne.s32.totalorder %s263, %s265
      %p272 = scmp.eq.s32.totalorder %s87, 1
      %p273 = por %p271, %p272
      %p274 = scmp.ne.s32.totalorder %s265, %s266
      %p275 = scmp.eq.s32.totalorder %s87, 0
      %p276 = por %p274, %p275
      %p277 = scmp.ne.s32.totalorder %s265, %s266
      %p278 = scmp.eq.s32.totalorder %s88, 1
      %p279 = por %p277, %p278
      %p281 = scmp.ne.s32.totalorder %s266, %s280
      %p282 = scmp.eq.s32.totalorder %s88, 0
      %p283 = por %p281, %p282
      %s285 = sadd.s32 %s284, 1
      %p288 = scmp.eq.s32.totalorder %s82, 1
      %p289 = scmp.ne.s32.totalorder %s284, %s286
      %p290 = scmp.eq.s32.totalorder %s82, 0
      %p291 = por %p289, %p290
      %p292 = scmp.ne.s32.totalorder %s284, %s286
      %p293 = scmp.eq.s32.totalorder %s87, 1
      %p294 = por %p292, %p293
      %p295 = scmp.ne.s32.totalorder %s286, %s287
      %p296 = scmp.eq.s32.totalorder %s87, 0
      %p297 = por %p295, %p296
      %p298 = scmp.ne.s32.totalorder %s286, %s287
      %p299 = scmp.eq.s32.totalorder %s88, 1
      %p300 = por %p298, %p299
      %p302 = scmp.ne.s32.totalorder %s287, %s301
      %p303 = scmp.eq.s32.totalorder %s88, 0
      %p304 = por %p302, %p303
      %s306 = sadd.s32 %s305, 1
      %p309 = scmp.eq.s32.totalorder %s82, 1
      %p310 = scmp.ne.s32.totalorder %s305, %s307
      %p311 = scmp.eq.s32.totalorder %s82, 0
      %p312 = por %p310, %p311
      %p313 = scmp.ne.s32.totalorder %s305, %s307
      %p314 = scmp.eq.s32.totalorder %s87, 1
      %p315 = por %p313, %p314
      %p316 = scmp.ne.s32.totalorder %s307, %s308
      %p317 = scmp.eq.s32.totalorder %s87, 0
      %p318 = por %p316, %p317
      %p319 = scmp.ne.s32.totalorder %s307, %s308
      %p320 = scmp.eq.s32.totalorder %s88, 1
      %p321 = por %p319, %p320
      %p323 = scmp.ne.s32.totalorder %s308, %s322
      %p324 = scmp.eq.s32.totalorder %s88, 0
      %p325 = por %p323, %p324
      %s327 = sadd.s32 %s326, 1
      %p330 = scmp.eq.s32.totalorder %s82, 1
      %p331 = scmp.ne.s32.totalorder %s326, %s328
      %p332 = scmp.eq.s32.totalorder %s82, 0
      %p333 = por %p331, %p332
      %p334 = scmp.ne.s32.totalorder %s326, %s328
      %p335 = scmp.eq.s32.totalorder %s87, 1
      %p336 = por %p334, %p335
      %p337 = scmp.ne.s32.totalorder %s328, %s329
      %p338 = scmp.eq.s32.totalorder %s87, 0
      %p339 = por %p337, %p338
      %p340 = scmp.ne.s32.totalorder %s328, %s329
      %p341 = scmp.eq.s32.totalorder %s88, 1
      %p342 = por %p340, %p341
      %p344 = scmp.ne.s32.totalorder %s329, %s343
      %p345 = scmp.eq.s32.totalorder %s88, 0
      %p346 = por %p344, %p345
      %s348 = sadd.s32 %s347, 1
      %p351 = scmp.eq.s32.totalorder %s82, 1
      %p352 = scmp.ne.s32.totalorder %s347, %s349
      %p353 = scmp.eq.s32.totalorder %s82, 0
      %p354 = por %p352, %p353
      %p355 = scmp.ne.s32.totalorder %s347, %s349
      %p356 = scmp.eq.s32.totalorder %s87, 1
      %p357 = por %p355, %p356
      %p358 = scmp.ne.s32.totalorder %s349, %s350
      %p359 = scmp.eq.s32.totalorder %s87, 0
      %p360 = por %p358, %p359
      %p361 = scmp.ne.s32.totalorder %s349, %s350
      %p362 = scmp.eq.s32.totalorder %s88, 1
      %p363 = por %p361, %p362
      %p365 = scmp.ne.s32.totalorder %s350, %s364
      %p366 = scmp.eq.s32.totalorder %s88, 0
      %p367 = por %p365, %p366
      %s369 = sadd.s32 %s368, 1
      %p372 = scmp.eq.s32.totalorder %s82, 1
      %p373 = scmp.ne.s32.totalorder %s368, %s370
      %p374 = scmp.eq.s32.totalorder %s82, 0
      %p375 = por %p373, %p374
      %p376 = scmp.ne.s32.totalorder %s368, %s370
      %p377 = scmp.eq.s32.totalorder %s87, 1
      %p378 = por %p376, %p377
      %p379 = scmp.ne.s32.totalorder %s370, %s371
      %p380 = scmp.eq.s32.totalorder %s87, 0
      %p381 = por %p379, %p380
      %p382 = scmp.ne.s32.totalorder %s370, %s371
      %p383 = scmp.eq.s32.totalorder %s88, 1
      %p384 = por %p382, %p383
      %p386 = scmp.ne.s32.totalorder %s371, %s385
      %p387 = scmp.eq.s32.totalorder %s88, 0
      %p388 = por %p386, %p387
      %s390 = sadd.s32 %s389, 1
      %p393 = scmp.eq.s32.totalorder %s82, 1
      %p394 = scmp.ne.s32.totalorder %s389, %s391
      %p395 = scmp.eq.s32.totalorder %s82, 0
      %p396 = por %p394, %p395
      %p397 = scmp.ne.s32.totalorder %s389, %s391
      %p398 = scmp.eq.s32.totalorder %s87, 1
      %p399 = por %p397, %p398
      %p400 = scmp.ne.s32.totalorder %s391, %s392
      %p401 = scmp.eq.s32.totalorder %s87, 0
      %p402 = por %p400, %p401
      %p403 = scmp.ne.s32.totalorder %s391, %s392
      %p404 = scmp.eq.s32.totalorder %s88, 1
      %p405 = por %p403, %p404
      %p407 = scmp.ne.s32.totalorder %s392, %s406
      %p408 = scmp.eq.s32.totalorder %s88, 0
      %p409 = por %p407, %p408
      %s411 = sadd.s32 %s410, 1
      %p414 = scmp.eq.s32.totalorder %s82, 1
      %p415 = scmp.ne.s32.totalorder %s410, %s412
      %p416 = scmp.eq.s32.totalorder %s82, 0
      %p417 = por %p415, %p416
      %p418 = scmp.ne.s32.totalorder %s410, %s412
      %p419 = scmp.eq.s32.totalorder %s87, 1
      %p420 = por %p418, %p419
      %p421 = scmp.ne.s32.totalorder %s412, %s413
      %p422 = scmp.eq.s32.totalorder %s87, 0
      %p423 = por %p421, %p422
      %p424 = scmp.ne.s32.totalorder %s412, %s413
      %p425 = scmp.eq.s32.totalorder %s88, 1
      %p426 = por %p424, %p425
      %p428 = scmp.ne.s32.totalorder %s413, %s427
      %p429 = scmp.eq.s32.totalorder %s88, 0
      %p430 = por %p428, %p429
      %s432 = sadd.s32 %s431, 1
      %p435 = scmp.eq.s32.totalorder %s82, 1
      %p436 = scmp.ne.s32.totalorder %s431, %s433
      %p437 = scmp.eq.s32.totalorder %s82, 0
      %p438 = por %p436, %p437
      %p439 = scmp.ne.s32.totalorder %s431, %s433
      %p440 = scmp.eq.s32.totalorder %s87, 1
      %p441 = por %p439, %p440
      %p442 = scmp.ne.s32.totalorder %s433, %s434
      %p443 = scmp.eq.s32.totalorder %s87, 0
      %p444 = por %p442, %p443
      %p445 = scmp.ne.s32.totalorder %s433, %s434
      %p446 = scmp.eq.s32.totalorder %s88, 1
      %p447 = por %p445, %p446
      %p449 = scmp.ne.s32.totalorder %s434, %s448
      %p450 = scmp.eq.s32.totalorder %s88, 0
      %p451 = por %p449, %p450
      %s453 = sadd.s32 %s452, 1
      %p456 = scmp.eq.s32.totalorder %s82, 1
      %p457 = scmp.ne.s32.totalorder %s452, %s454
      %p458 = scmp.eq.s32.totalorder %s82, 0
      %p459 = por %p457, %p458
      %p460 = scmp.ne.s32.totalorder %s452, %s454
      %p461 = scmp.eq.s32.totalorder %s87, 1
      %p462 = por %p460, %p461
      %p463 = scmp.ne.s32.totalorder %s454, %s455
      %p464 = scmp.eq.s32.totalorder %s87, 0
      %p465 = por %p463, %p464
      %p466 = scmp.ne.s32.totalorder %s454, %s455
      %p467 = scmp.eq.s32.totalorder %s88, 1
      %p468 = por %p466, %p467
      %p470 = scmp.ne.s32.totalorder %s455, %s469
      %p471 = scmp.eq.s32.totalorder %s88, 0
      %p472 = por %p470, %p471
      %s474 = sadd.s32 %s473, 1
      %p477 = scmp.eq.s32.totalorder %s82, 1
      %p478 = scmp.ne.s32.totalorder %s473, %s475
      %p479 = scmp.eq.s32.totalorder %s82, 0
      %p480 = por %p478, %p479
      %p481 = scmp.ne.s32.totalorder %s473, %s475
      %p482 = scmp.eq.s32.totalorder %s87, 1
      %p483 = por %p481, %p482
      %p484 = scmp.ne.s32.totalorder %s475, %s476
      %p485 = scmp.eq.s32.totalorder %s87, 0
      %p486 = por %p484, %p485
      %p487 = scmp.ne.s32.totalorder %s475, %s476
      %p488 = scmp.eq.s32.totalorder %s88, 1
      %p489 = por %p487, %p488
      %p491 = scmp.ne.s32.totalorder %s476, %s490
      %p492 = scmp.eq.s32.totalorder %s88, 0
      %p493 = por %p491, %p492
      %s495 = sadd.s32 %s494, 1
      %p498 = scmp.eq.s32.totalorder %s82, 1
      %p499 = scmp.ne.s32.totalorder %s494, %s496
      %p500 = scmp.eq.s32.totalorder %s82, 0
      %p501 = por %p499, %p500
      %p502 = scmp.ne.s32.totalorder %s494, %s496
      %p503 = scmp.eq.s32.totalorder %s87, 1
      %p504 = por %p502, %p503
      %p505 = scmp.ne.s32.totalorder %s496, %s497
      %p506 = scmp.eq.s32.totalorder %s87, 0
      %p507 = por %p505, %p506
      %p508 = scmp.ne.s32.totalorder %s496, %s497
      %p509 = scmp.eq.s32.totalorder %s88, 1
      %p510 = por %p508, %p509
      %p512 = scmp.ne.s32.totalorder %s497, %s511
      %p513 = scmp.eq.s32.totalorder %s88, 0
      %p514 = por %p512, %p513
      %s516 = sadd.s32 %s515, 1
      %p519 = scmp.eq.s32.totalorder %s82, 1
      %p520 = scmp.ne.s32.totalorder %s515, %s517
      %p521 = scmp.eq.s32.totalorder %s82, 0
      %p522 = por %p520, %p521
      %p523 = scmp.ne.s32.totalorder %s515, %s517
      %p524 = scmp.eq.s32.totalorder %s87, 1
      %p525 = por %p523, %p524
      %p526 = scmp.ne.s32.totalorder %s517, %s518
      %p527 = scmp.eq.s32.totalorder %s87, 0
      %p528 = por %p526, %p527
      %p529 = scmp.ne.s32.totalorder %s517, %s518
      %p530 = scmp.eq.s32.totalorder %s88, 1
      %p531 = por %p529, %p530
      %p533 = scmp.ne.s32.totalorder %s518, %s532
      %p534 = scmp.eq.s32.totalorder %s88, 0
      %p535 = por %p533, %p534
      %s537 = sadd.s32 %s536, 1
      %p540 = scmp.eq.s32.totalorder %s82, 1
      %p541 = scmp.ne.s32.totalorder %s536, %s538
      %p542 = scmp.eq.s32.totalorder %s82, 0
      %p543 = por %p541, %p542
      %p544 = scmp.ne.s32.totalorder %s536, %s538
      %p545 = scmp.eq.s32.totalorder %s87, 1
      %p546 = por %p544, %p545
      %p547 = scmp.ne.s32.totalorder %s538, %s539
      %p548 = scmp.eq.s32.totalorder %s87, 0
      %p549 = por %p547, %p548
      %p550 = scmp.ne.s32.totalorder %s538, %s539
      %p551 = scmp.eq.s32.totalorder %s88, 1
      %p552 = por %p550, %p551
      %p554 = scmp.ne.s32.totalorder %s539, %s553
      %p555 = scmp.eq.s32.totalorder %s88, 0
      %p556 = por %p554, %p555
      %s558 = sadd.s32 %s557, 1
      %p561 = scmp.eq.s32.totalorder %s82, 1
      %p562 = scmp.ne.s32.totalorder %s557, %s559
      %p563 = scmp.eq.s32.totalorder %s82, 0
      %p564 = por %p562, %p563
      %p565 = scmp.ne.s32.totalorder %s557, %s559
      %p566 = scmp.eq.s32.totalorder %s87, 1
      %p567 = por %p565, %p566
      %p568 = scmp.ne.s32.totalorder %s559, %s560
      %p569 = scmp.eq.s32.totalorder %s87, 0
      %p570 = por %p568, %p569
      %p571 = scmp.ne.s32.totalorder %s559, %s560
      %p572 = scmp.eq.s32.totalorder %s88, 1
      %p573 = por %p571, %p572
      %p575 = scmp.ne.s32.totalorder %s560, %s574
      %p576 = scmp.eq.s32.totalorder %s88, 0
      %p577 = por %p575, %p576
      %s579 = sadd.s32 %s578, 1
      %p582 = scmp.eq.s32.totalorder %s82, 1
      %p583 = scmp.ne.s32.totalorder %s578, %s580
      %p584 = scmp.eq.s32.totalorder %s82, 0
      %p585 = por %p583, %p584
      %p586 = scmp.ne.s32.totalorder %s578, %s580
      %p587 = scmp.eq.s32.totalorder %s87, 1
      %p588 = por %p586, %p587
      %p589 = scmp.ne.s32.totalorder %s580, %s581
      %p590 = scmp.eq.s32.totalorder %s87, 0
      %p591 = por %p589, %p590
      %p592 = scmp.ne.s32.totalorder %s580, %s581
      %p593 = scmp.eq.s32.totalorder %s88, 1
      %p594 = por %p592, %p593
      %p596 = scmp.ne.s32.totalorder %s581, %s595
      %p597 = scmp.eq.s32.totalorder %s88, 0
      %p598 = por %p596, %p597
      %s600 = sadd.s32 %s599, 1
      %p603 = scmp.eq.s32.totalorder %s82, 1
      %p604 = scmp.ne.s32.totalorder %s599, %s601
      %p605 = scmp.eq.s32.totalorder %s82, 0
      %p606 = por %p604, %p605
      %p607 = scmp.ne.s32.totalorder %s599, %s601
      %p608 = scmp.eq.s32.totalorder %s87, 1
      %p609 = por %p607, %p608
      %p610 = scmp.ne.s32.totalorder %s601, %s602
      %p611 = scmp.eq.s32.totalorder %s87, 0
      %p612 = por %p610, %p611
      %p613 = scmp.ne.s32.totalorder %s601, %s602
      %p614 = scmp.eq.s32.totalorder %s88, 1
      %p615 = por %p613, %p614
      %p617 = scmp.ne.s32.totalorder %s602, %s616
      %p618 = scmp.eq.s32.totalorder %s88, 0
      %p619 = por %p617, %p618
      %s621 = sadd.s32 %s620, 1
      %p624 = scmp.eq.s32.totalorder %s82, 1
      %p625 = scmp.ne.s32.totalorder %s620, %s622
      %p626 = scmp.eq.s32.totalorder %s82, 0
      %p627 = por %p625, %p626
      %p628 = scmp.ne.s32.totalorder %s620, %s622
      %p629 = scmp.eq.s32.totalorder %s87, 1
      %p630 = por %p628, %p629
      %p631 = scmp.ne.s32.totalorder %s622, %s623
      %p632 = scmp.eq.s32.totalorder %s87, 0
      %p633 = por %p631, %p632
      %p634 = scmp.ne.s32.totalorder %s622, %s623
      %p635 = scmp.eq.s32.totalorder %s88, 1
      %p636 = por %p634, %p635
      %p638 = scmp.ne.s32.totalorder %s623, %s637
      %p639 = scmp.eq.s32.totalorder %s88, 0
      %p640 = por %p638, %p639
      %s641 = ssub.s32 %s82, %s89
      %p642 = scmp.eq.s32.totalorder %s641, 0
      %s644 = sadd.s32 %s643, 1
      %s645 = scalar_select %p642, %s643, %s644
      %p648 = pneg %p642
      %p649 = scmp.eq.s32.totalorder %s82, 1
      %p650 = por %p648, %p649
      %p651 = scmp.ne.s32.totalorder %s643, %s646
      %p652 = scmp.eq.s32.totalorder %s82, 0
      %p653 = por %p651, %p652
      %p654 = scmp.ne.s32.totalorder %s643, %s646
      %p655 = scmp.eq.s32.totalorder %s87, 1
      %p656 = por %p654, %p655
      %p657 = scmp.ne.s32.totalorder %s646, %s647
      %p658 = scmp.eq.s32.totalorder %s87, 0
      %p659 = por %p657, %p658
      %p660 = scmp.ne.s32.totalorder %s646, %s647
      %p661 = scmp.eq.s32.totalorder %s88, 1
      %p662 = por %p660, %p661
      %p664 = scmp.ne.s32.totalorder %s647, %s663
      %p665 = scmp.eq.s32.totalorder %s88, 0
      %p666 = por %p664, %p665
      %s667 = ssub.s32 %s82, %s89
      %p668 = scmp.eq.s32.totalorder %s667, 0
      %s670 = sadd.s32 %s669, 1
      %s671 = scalar_select %p668, %s669, %s670
      %p674 = pneg %p668
      %p675 = scmp.eq.s32.totalorder %s82, 1
      %p676 = por %p674, %p675
      %p677 = scmp.ne.s32.totalorder %s669, %s672
      %p678 = scmp.eq.s32.totalorder %s82, 0
      %p679 = por %p677, %p678
      %p680 = scmp.ne.s32.totalorder %s669, %s672
      %p681 = scmp.eq.s32.totalorder %s87, 1
      %p682 = por %p680, %p681
      %p683 = scmp.ne.s32.totalorder %s672, %s673
      %p684 = scmp.eq.s32.totalorder %s87, 0
      %p685 = por %p683, %p684
      %p686 = scmp.ne.s32.totalorder %s672, %s673
      %p687 = scmp.eq.s32.totalorder %s88, 1
      %p688 = por %p686, %p687
      %p690 = scmp.ne.s32.totalorder %s673, %s689
      %p691 = scmp.eq.s32.totalorder %s88, 0
      %p692 = por %p690, %p691
      %s693 = ssub.s32 %s82, %s89
      %p694 = scmp.eq.s32.totalorder %s693, 0
      %s696 = sadd.s32 %s695, 1
      %s697 = scalar_select %p694, %s695, %s696
      %p700 = pneg %p694
      %p701 = scmp.eq.s32.totalorder %s82, 1
      %p702 = por %p700, %p701
      %p703 = scmp.ne.s32.totalorder %s695, %s698
      %p704 = scmp.eq.s32.totalorder %s82, 0
      %p705 = por %p703, %p704
      %p706 = scmp.ne.s32.totalorder %s695, %s698
      %p707 = scmp.eq.s32.totalorder %s87, 1
      %p708 = por %p706, %p707
      %p709 = scmp.ne.s32.totalorder %s698, %s699
      %p710 = scmp.eq.s32.totalorder %s87, 0
      %p711 = por %p709, %p710
      %p712 = scmp.ne.s32.totalorder %s698, %s699
      %p713 = scmp.eq.s32.totalorder %s88, 1
      %p714 = por %p712, %p713
      %p716 = scmp.ne.s32.totalorder %s699, %s715
      %p717 = scmp.eq.s32.totalorder %s88, 0
      %p718 = por %p716, %p717
      %s719 = ssub.s32 %s82, %s89
      %p720 = scmp.eq.s32.totalorder %s719, 0
      %s722 = sadd.s32 %s721, 1
      %s723 = scalar_select %p720, %s721, %s722
      %p726 = pneg %p720
      %p727 = scmp.eq.s32.totalorder %s82, 1
      %p728 = por %p726, %p727
      %p729 = scmp.ne.s32.totalorder %s721, %s724
      %p730 = scmp.eq.s32.totalorder %s82, 0
      %p731 = por %p729, %p730
      %p732 = scmp.ne.s32.totalorder %s721, %s724
      %p733 = scmp.eq.s32.totalorder %s87, 1
      %p734 = por %p732, %p733
      %p735 = scmp.ne.s32.totalorder %s724, %s725
      %p736 = scmp.eq.s32.totalorder %s87, 0
      %p737 = por %p735, %p736
      %p738 = scmp.ne.s32.totalorder %s724, %s725
      %p739 = scmp.eq.s32.totalorder %s88, 1
      %p740 = por %p738, %p739
      %p742 = scmp.ne.s32.totalorder %s725, %s741
      %p743 = scmp.eq.s32.totalorder %s88, 0
      %p744 = por %p742, %p743
      %s745 = ssub.s32 %s82, %s89
      %p746 = scmp.eq.s32.totalorder %s745, 0
      %s748 = sadd.s32 %s747, 1
      %s749 = scalar_select %p746, %s747, %s748
      %p752 = pneg %p746
      %p753 = scmp.eq.s32.totalorder %s82, 1
      %p754 = por %p752, %p753
      %p755 = scmp.ne.s32.totalorder %s747, %s750
      %p756 = scmp.eq.s32.totalorder %s82, 0
      %p757 = por %p755, %p756
      %p758 = scmp.ne.s32.totalorder %s747, %s750
      %p759 = scmp.eq.s32.totalorder %s87, 1
      %p760 = por %p758, %p759
      %p761 = scmp.ne.s32.totalorder %s750, %s751
      %p762 = scmp.eq.s32.totalorder %s87, 0
      %p763 = por %p761, %p762
      %p764 = scmp.ne.s32.totalorder %s750, %s751
      %p765 = scmp.eq.s32.totalorder %s88, 1
      %p766 = por %p764, %p765
      %p768 = scmp.ne.s32.totalorder %s751, %s767
      %p769 = scmp.eq.s32.totalorder %s88, 0
      %p770 = por %p768, %p769
      %s771 = ssub.s32 %s82, %s89
      %p772 = scmp.eq.s32.totalorder %s771, 0
      %s774 = sadd.s32 %s773, 1
      %s775 = scalar_select %p772, %s773, %s774
      %p778 = pneg %p772
      %p779 = scmp.eq.s32.totalorder %s82, 1
      %p780 = por %p778, %p779
      %p781 = scmp.ne.s32.totalorder %s773, %s776
      %p782 = scmp.eq.s32.totalorder %s82, 0
      %p783 = por %p781, %p782
      %p784 = scmp.ne.s32.totalorder %s773, %s776
      %p785 = scmp.eq.s32.totalorder %s87, 1
      %p786 = por %p784, %p785
      %p787 = scmp.ne.s32.totalorder %s776, %s777
      %p788 = scmp.eq.s32.totalorder %s87, 0
      %p789 = por %p787, %p788
      %p790 = scmp.ne.s32.totalorder %s776, %s777
      %p791 = scmp.eq.s32.totalorder %s88, 1
      %p792 = por %p790, %p791
      %p794 = scmp.ne.s32.totalorder %s777, %s793
      %p795 = scmp.eq.s32.totalorder %s88, 0
      %p796 = por %p794, %p795
      %p797 = scmp.le.s32.totalorder 1, %s82
      %p798 = scmp.lt.s32.totalorder %s82, 3
      %p799 = pnand %p797, %p798
      %p800 = pneg %p799
      // Predicated region
      $region9: #{tpu_custom_call.1} parent=5 // pred_check
        _
      $region10: #{tpu_custom_call.1} parent=5 // pred_check_branch
        %802 = sbr.rel (%p799) target = $region12
      $region11: #{tpu_custom_call.1} parent=5 // pred_region
        %s803 = ssub.s32 %s82, 1
        // Predicated region
        $region13: #{tpu_custom_call.1} parent=11 // pred_check
          %p804 = pneg %p129
        $region14: #{tpu_custom_call.1} parent=11 // pred_check_branch
          %806 = sbr.rel (%p804) target = $region16
        $region15: #{tpu_custom_call.1} parent=11 // pred_region
          _
        $region16: #{tpu_custom_call.1} parent=11 // pred_fallthru
          _
        // Predicated region
        $region17: #{tpu_custom_call.1} parent=11 // pred_check
          %p807 = pneg %p150
        $region18: #{tpu_custom_call.1} parent=11 // pred_check_branch
          %809 = sbr.rel (%p807) target = $region20
        $region19: #{tpu_custom_call.1} parent=11 // pred_region
          _
        $region20: #{tpu_custom_call.1} parent=11 // pred_fallthru
          _
        // Predicated region
        $region21: #{tpu_custom_call.1} parent=11 // pred_check
          %p810 = pneg %p171
        $region22: #{tpu_custom_call.1} parent=11 // pred_check_branch
          %812 = sbr.rel (%p810) target = $region24
        $region23: #{tpu_custom_call.1} parent=11 // pred_region
          _
        $region24: #{tpu_custom_call.1} parent=11 // pred_fallthru
          _
        // Predicated region
        $region25: #{tpu_custom_call.1} parent=11 // pred_check
          %p813 = pneg %p192
        $region26: #{tpu_custom_call.1} parent=11 // pred_check_branch
          %815 = sbr.rel (%p813) target = $region28
        $region27: #{tpu_custom_call.1} parent=11 // pred_region
          _
        $region28: #{tpu_custom_call.1} parent=11 // pred_fallthru
          _
        // Predicated region
        $region29: #{tpu_custom_call.1} parent=11 // pred_check
          %p816 = pneg %p213
        $region30: #{tpu_custom_call.1} parent=11 // pred_check_branch
          %818 = sbr.rel (%p816) target = $region32
        $region31: #{tpu_custom_call.1} parent=11 // pred_region
          _
        $region32: #{tpu_custom_call.1} parent=11 // pred_fallthru
          _
        // Predicated region
        $region33: #{tpu_custom_call.1} parent=11 // pred_check
          %p819 = pneg %p234
        $region34: #{tpu_custom_call.1} parent=11 // pred_check_branch
          %821 = sbr.rel (%p819) target = $region36
        $region35: #{tpu_custom_call.1} parent=11 // pred_region
          _
        $region36: #{tpu_custom_call.1} parent=11 // pred_fallthru
          _
        // Predicated region
        $region37: #{tpu_custom_call.1} parent=11 // pred_check
          %p822 = pneg %p255
        $region38: #{tpu_custom_call.1} parent=11 // pred_check_branch
          %824 = sbr.rel (%p822) target = $region40
        $region39: #{tpu_custom_call.1} parent=11 // pred_region
          _
        $region40: #{tpu_custom_call.1} parent=11 // pred_fallthru
          _
        // Predicated region
        $region41: #{tpu_custom_call.1} parent=11 // pred_check
          %p825 = pneg %p276
        $region42: #{tpu_custom_call.1} parent=11 // pred_check_branch
          %827 = sbr.rel (%p825) target = $region44
        $region43: #{tpu_custom_call.1} parent=11 // pred_region
          _
        $region44: #{tpu_custom_call.1} parent=11 // pred_fallthru
          _
        // Predicated region
        $region45: #{tpu_custom_call.1} parent=11 // pred_check
          %p828 = pneg %p297
        $region46: #{tpu_custom_call.1} parent=11 // pred_check_branch
          %830 = sbr.rel (%p828) target = $region48
        $region47: #{tpu_custom_call.1} parent=11 // pred_region
          _
        $region48: #{tpu_custom_call.1} parent=11 // pred_fallthru
          _
        // Predicated region
        $region49: #{tpu_custom_call.1} parent=11 // pred_check
          %p831 = pneg %p318
        $region50: #{tpu_custom_call.1} parent=11 // pred_check_branch
          %833 = sbr.rel (%p831) target = $region52
        $region51: #{tpu_custom_call.1} parent=11 // pred_region
          _
        $region52: #{tpu_custom_call.1} parent=11 // pred_fallthru
          _
        // Predicated region
        $region53: #{tpu_custom_call.1} parent=11 // pred_check
          %p834 = pneg %p339
        $region54: #{tpu_custom_call.1} parent=11 // pred_check_branch
          %836 = sbr.rel (%p834) target = $region56
        $region55: #{tpu_custom_call.1} parent=11 // pred_region
          _
        $region56: #{tpu_custom_call.1} parent=11 // pred_fallthru
          _
        // Predicated region
        $region57: #{tpu_custom_call.1} parent=11 // pred_check
          %p837 = pneg %p360
        $region58: #{tpu_custom_call.1} parent=11 // pred_check_branch
          %839 = sbr.rel (%p837) target = $region60
        $region59: #{tpu_custom_call.1} parent=11 // pred_region
          _
        $region60: #{tpu_custom_call.1} parent=11 // pred_fallthru
          _
        // Predicated region
        $region61: #{tpu_custom_call.1} parent=11 // pred_check
          %p840 = pneg %p381
        $region62: #{tpu_custom_call.1} parent=11 // pred_check_branch
          %842 = sbr.rel (%p840) target = $region64
        $region63: #{tpu_custom_call.1} parent=11 // pred_region
          _
        $region64: #{tpu_custom_call.1} parent=11 // pred_fallthru
          _
        // Predicated region
        $region65: #{tpu_custom_call.1} parent=11 // pred_check
          %p843 = pneg %p402
        $region66: #{tpu_custom_call.1} parent=11 // pred_check_branch
          %845 = sbr.rel (%p843) target = $region68
        $region67: #{tpu_custom_call.1} parent=11 // pred_region
          _
        $region68: #{tpu_custom_call.1} parent=11 // pred_fallthru
          _
        // Predicated region
        $region69: #{tpu_custom_call.1} parent=11 // pred_check
          %p846 = pneg %p423
        $region70: #{tpu_custom_call.1} parent=11 // pred_check_branch
          %848 = sbr.rel (%p846) target = $region72
        $region71: #{tpu_custom_call.1} parent=11 // pred_region
          _
        $region72: #{tpu_custom_call.1} parent=11 // pred_fallthru
          _
        // Predicated region
        $region73: #{tpu_custom_call.1} parent=11 // pred_check
          %p849 = pneg %p444
        $region74: #{tpu_custom_call.1} parent=11 // pred_check_branch
          %851 = sbr.rel (%p849) target = $region76
        $region75: #{tpu_custom_call.1} parent=11 // pred_region
          _
        $region76: #{tpu_custom_call.1} parent=11 // pred_fallthru
          _
        // Predicated region
        $region77: #{tpu_custom_call.1} parent=11 // pred_check
          %p852 = pneg %p465
        $region78: #{tpu_custom_call.1} parent=11 // pred_check_branch
          %854 = sbr.rel (%p852) target = $region80
        $region79: #{tpu_custom_call.1} parent=11 // pred_region
          _
        $region80: #{tpu_custom_call.1} parent=11 // pred_fallthru
          _
        // Predicated region
        $region81: #{tpu_custom_call.1} parent=11 // pred_check
          %p855 = pneg %p486
        $region82: #{tpu_custom_call.1} parent=11 // pred_check_branch
          %857 = sbr.rel (%p855) target = $region84
        $region83: #{tpu_custom_call.1} parent=11 // pred_region
          _
        $region84: #{tpu_custom_call.1} parent=11 // pred_fallthru
          _
        // Predicated region
        $region85: #{tpu_custom_call.1} parent=11 // pred_check
          %p858 = pneg %p507
        $region86: #{tpu_custom_call.1} parent=11 // pred_check_branch
          %860 = sbr.rel (%p858) target = $region88
        $region87: #{tpu_custom_call.1} parent=11 // pred_region
          _
        $region88: #{tpu_custom_call.1} parent=11 // pred_fallthru
          _
        // Predicated region
        $region89: #{tpu_custom_call.1} parent=11 // pred_check
          %p861 = pneg %p528
        $region90: #{tpu_custom_call.1} parent=11 // pred_check_branch
          %863 = sbr.rel (%p861) target = $region92
        $region91: #{tpu_custom_call.1} parent=11 // pred_region
          _
        $region92: #{tpu_custom_call.1} parent=11 // pred_fallthru
          _
        // Predicated region
        $region93: #{tpu_custom_call.1} parent=11 // pred_check
          %p864 = pneg %p549
        $region94: #{tpu_custom_call.1} parent=11 // pred_check_branch
          %866 = sbr.rel (%p864) target = $region96
        $region95: #{tpu_custom_call.1} parent=11 // pred_region
          _
        $region96: #{tpu_custom_call.1} parent=11 // pred_fallthru
          _
        // Predicated region
        $region97: #{tpu_custom_call.1} parent=11 // pred_check
          %p867 = pneg %p570
        $region98: #{tpu_custom_call.1} parent=11 // pred_check_branch
          %869 = sbr.rel (%p867) target = $region100
        $region99: #{tpu_custom_call.1} parent=11 // pred_region
          _
        $region100: #{tpu_custom_call.1} parent=11 // pred_fallthru
          _
        // Predicated region
        $region101: #{tpu_custom_call.1} parent=11 // pred_check
          %p870 = pneg %p591
        $region102: #{tpu_custom_call.1} parent=11 // pred_check_branch
          %872 = sbr.rel (%p870) target = $region104
        $region103: #{tpu_custom_call.1} parent=11 // pred_region
          _
        $region104: #{tpu_custom_call.1} parent=11 // pred_fallthru
          _
        // Predicated region
        $region105: #{tpu_custom_call.1} parent=11 // pred_check
          %p873 = pneg %p612
        $region106: #{tpu_custom_call.1} parent=11 // pred_check_branch
          %875 = sbr.rel (%p873) target = $region108
        $region107: #{tpu_custom_call.1} parent=11 // pred_region
          _
        $region108: #{tpu_custom_call.1} parent=11 // pred_fallthru
          _
        // Predicated region
        $region109: #{tpu_custom_call.1} parent=11 // pred_check
          %p876 = pneg %p633
        $region110: #{tpu_custom_call.1} parent=11 // pred_check_branch
          %878 = sbr.rel (%p876) target = $region112
        $region111: #{tpu_custom_call.1} parent=11 // pred_region
          _
        $region112: #{tpu_custom_call.1} parent=11 // pred_fallthru
          _
      $region12: #{tpu_custom_call.1} parent=5 // pred_fallthru
        _
      %p879 = scmp.lt.s32.totalorder %s82, 2
      // Predicated region
      $region113: #{tpu_custom_call.1} parent=5 // pred_check
        %p880 = pneg %p879
      $region114: #{tpu_custom_call.1} parent=5 // pred_check_branch
        %882 = sbr.rel (%p880) target = $region116
      $region115: #{tpu_custom_call.1} parent=5 // pred_region
        // Predicated region
        $region117: #{tpu_custom_call.1} parent=115 // pred_check
          %p883 = pneg %p102
        $region118: #{tpu_custom_call.1} parent=115 // pred_check_branch
          %885 = sbr.rel (%p883) target = $region120
        $region119: #{tpu_custom_call.1} parent=115 // pred_region
          %p886 = scmp.lt.s32.totalorder %s82, 1
          %s887 = scalar_select %p886, %s82, 1
          %s888 = smul.addr %s887, 2
          %s889 = smul.addr %s888, 4
          %s890 = scalar_lea.vmem %s1, %s889
        $region120: #{tpu_custom_call.1} parent=115 // pred_fallthru
          _
      $region116: #{tpu_custom_call.1} parent=5 // pred_fallthru
        _
      %p891 = scmp.le.s32.totalorder 1, %s82
      %p892 = scmp.lt.s32.totalorder %s82, 3
      %p893 = pnand %p891, %p892
      %p894 = pneg %p893
      // Predicated region
      $region121: #{tpu_custom_call.1} parent=5 // pred_check
        _
      $region122: #{tpu_custom_call.1} parent=5 // pred_check_branch
        %896 = sbr.rel (%p893) target = $region124
      $region123: #{tpu_custom_call.1} parent=5 // pred_region
        %s897 = ssub.s32 %s82, 1
        %p898 = scmp.lt.s32.totalorder %s87, 1
        %s899 = scalar_select %p898, %s87, 1
        %s900 = smul.addr %s899, 2
        %s901 = smul.addr %s900, 4
        %s902 = scalar_lea.vmem %s1, %s901
        %p903 = pneg %p108
        %p904 = pneg %p105
        %p905 = pneg %p129
        %p906 = pneg %p126
        %p907 = pneg %p150
        %p908 = pneg %p147
        %p909 = pneg %p171
        %p910 = pneg %p168
        %p911 = pneg %p192
        %p912 = pneg %p189
        %p913 = pneg %p213
        %p914 = pneg %p210
        %p915 = pneg %p234
        %p916 = pneg %p231
        %p917 = pneg %p255
        %p918 = pneg %p252
        %p919 = pneg %p276
        %p920 = pneg %p273
        %p921 = pneg %p297
        %p922 = pneg %p294
        %p923 = pneg %p318
        %p924 = pneg %p315
        %p925 = pneg %p339
        %p926 = pneg %p336
        %p927 = pneg %p360
        %p928 = pneg %p357
        %p929 = pneg %p381
        %p930 = pneg %p378
        %p931 = pneg %p402
        %p932 = pneg %p399
        %p933 = pneg %p423
        %p934 = pneg %p420
        %p935 = pneg %p444
        %p936 = pneg %p441
        %p937 = pneg %p465
        %p938 = pneg %p462
        %p939 = pneg %p486
        %p940 = pneg %p483
        %p941 = pneg %p507
        %p942 = pneg %p504
        %p943 = pneg %p528
        %p944 = pneg %p525
        %p945 = pneg %p549
        %p946 = pneg %p546
        %p947 = pneg %p570
        %p948 = pneg %p567
        %p949 = pneg %p591
        %p950 = pneg %p588
        %p951 = pneg %p612
        %p952 = pneg %p609
        %p953 = pneg %p633
        %p954 = pneg %p630
        %p955 = pneg %p659
        %p956 = pneg %p656
        %s957 = sand.u32 %s646, 1
        %s958 = scalar_lea.sflag [#allocation3], %s957
        %s959 = sand.u32 %s646, 1
        %s960 = smul.addr %s959, 16
        %s961 = scalar_lea.vmem [#allocation2], %s960
        %p962 = pneg %p685
        %p963 = pneg %p682
        %s964 = sand.u32 %s87, 1
        %s965 = scalar_lea.sflag [#allocation5], %s964
        %s966 = sand.u32 %s672, 1
        %s967 = smul.addr %s966, 16
        %s968 = scalar_lea.vmem [#allocation4], %s967
        %p969 = pneg %p711
        %p970 = pneg %p708
        %s971 = sand.u32 %s87, 1
        %s972 = scalar_lea.sflag [#allocation5], %s971
        %s973 = sand.u32 %s698, 1
        %s974 = smul.addr %s973, 16
        %s975 = scalar_lea.vmem [#allocation6], %s974
        %p976 = pneg %p737
        %p977 = pneg %p734
        %s978 = sand.u32 %s87, 1
        %s979 = scalar_lea.sflag [#allocation8], %s978
        %s980 = sand.u32 %s724, 1
        %s981 = smul.addr %s980, 16
        %s982 = scalar_lea.vmem [#allocation7], %s981
        %p983 = pneg %p763
        %p984 = pneg %p760
        %s985 = sand.u32 %s87, 1
        %s986 = scalar_lea.sflag [#allocation8], %s985
        %s987 = sand.u32 %s750, 1
        %s988 = smul.addr %s987, 16
        %s989 = scalar_lea.vmem [#allocation9], %s988
        %p990 = pneg %p789
        %p991 = pneg %p786
        %s992 = sand.u32 %s776, 1
        %s993 = scalar_lea.sflag [#allocation11], %s992
        %s994 = sand.u32 %s776, 1
        %s995 = smul.addr %s994, 16
        %s996 = scalar_lea.vmem [#allocation10], %s995
        %p997 = scmp.lt.s32.totalorder %s87, 1
        %s998 = scalar_select %p997, %s87, 1
        %s999 = smul.addr %s998, 2
        %s1000 = smul.addr %s999, 4
        %s1001 = scalar_lea.vmem %s1, %s1000
        %v1002 = vld [vmem:[%s1001] sm:$0x77]
        %v1003 = vld [vmem:[%s3] sm:$0xff]
        %v1004 = vld [vmem:[%s5] sm:$0xff]
        %1006 = vset.pattern.permute.xlu0 0
        %1007 = vperm.xlu0 %1006, %v1004
        %v1008 = vpop.permute.xlu0 %1007
        %v1011 = vcombine.high %v1002, %v1002
        %vm1012 = vcmask 23552
        %v1014 = vsel %vm1012, %v1003, 0
        %vm1016 = vcmask 1042432
        %v1017 = vsel %vm1016, %v1002, 0
        %v1019 = vsel %vm1016, %v1011, 0
        %1021 = vmatprep.subr.mxu0 0.0
        %1022 = vmatpush1.msra.mxu0 0.0
        %1023 = vmatprep.subr.mxu0 0.0
        %1024 = vmatpush1.msra.mxu0 0.0
        %1025 = vmatprep.subr.mxu0 0.0
        %1026 = vmatpush1.msra.mxu0 0.0
        %1027 = vmatprep.subr.mxu0 0.0
        %1028 = vmatpush1.msra.mxu0 0.0
        %1029 = vmatprep.subr.mxu0 0.0
        %1030 = vmatpush1.msra.mxu0 0.0
        %1031 = vmatprep.subr.mxu0 0.0
        %1032 = vmatpush1.msra.mxu0 0.0
        %1033 = vmatprep.subr.mxu0 0.0
        %1034 = vmatpush1.msra.mxu0 0.0
        %1035 = vmatprep.subr.mxu0 0.0
        %1036 = vmatpush1.msra.mxu0 0.0
        %1037 = vmatprep.subr.mxu0 0.0
        %1038 = vmatpush1.msra.mxu0 0.0
        %1039 = vmatprep.subr.mxu0 0.0
        %1040 = vmatpush1.msra.mxu0 0.0
        %1041 = vmatprep.subr.mxu0 0.0
        %1042 = vmatpush1.msra.mxu0 0.0
        %1043 = vmatprep.subr.mxu0 0.0
        %1044 = vmatpush1.msra.mxu0 0.0
        %1045 = vmatprep.subr.mxu0 0.0
        %1046 = vmatpush1.msra.mxu0 0.0
        %1047 = vmatprep.subr.mxu0 0.0
        %1048 = vmatpush1.msra.mxu0 0.0
        %1049 = vmatprep.subr.mxu0 0.0
        %1050 = vmatpush1.msra.mxu0 0.0
        %1051 = vmatprep.subr.mxu0 %v1019
        %1052 = vmatpush1.msra.mxu0 %v1017
        %1053 = vmatprep.subr.mxu0 0.0
        %1054 = vmatpush2.msra.mxu0 0.0
        %1055 = vmatprep.subr.mxu0 0.0
        %1056 = vmatpush2.msra.mxu0 0.0
        %1057 = vmatprep.subr.mxu0 0.0
        %1058 = vmatpush2.msra.mxu0 0.0
        %1059 = vmatprep.subr.mxu0 0.0
        %1060 = vmatpush2.msra.mxu0 0.0
        %1061 = vmatprep.subr.mxu0 0.0
        %1062 = vmatpush2.msra.mxu0 0.0
        %1063 = vmatprep.subr.mxu0 0.0
        %1064 = vmatpush2.msra.mxu0 0.0
        %1065 = vmatprep.subr.mxu0 0.0
        %1066 = vmatpush2.msra.mxu0 0.0
        %1067 = vmatprep.subr.mxu0 0.0
        %1068 = vmatpush2.msra.mxu0 0.0
        %1069 = vmatprep.subr.mxu0 0.0
        %1070 = vmatpush2.msra.mxu0 0.0
        %1071 = vmatprep.subr.mxu0 0.0
        %1072 = vmatpush2.msra.mxu0 0.0
        %1073 = vmatprep.subr.mxu0 0.0
        %1074 = vmatpush2.msra.mxu0 0.0
        %1075 = vmatprep.subr.mxu0 0.0
        %1076 = vmatpush2.msra.mxu0 0.0
        %1077 = vmatprep.subr.mxu0 0.0
        %1078 = vmatpush2.msra.mxu0 0.0
        %1079 = vmatprep.subr.mxu0 0.0
        %1080 = vmatpush2.msra.mxu0 0.0
        %1081 = vmatprep.subr.mxu0 0.0
        %1082 = vmatpush2.msra.mxu0 0.0
        %1083 = vmatprep.subr.mxu0 0.0
        %1084 = vmatpush2.msra.mxu0 0.0
        %1085 = vmatprep.mubr.f32.mxu0 0.0
        %1086 = vmatmul.mubr.f32.gmra.mxu0 %v1014
        %v1087 = vpop.f32.mrf.mxu0
        %v1088 = vadd.f32 %v1008, %v1087
        %v1089 = vpop.f32.mrf.mxu0
        %v1090 = vadd.f32 %v1008, %v1089
        %1091 = vdwg.mxu0
        %v1092 = vld [vmem:[%s7] sm:$0xff]
        %v1093 = vld [vmem:[%s9] sm:$0xff]
        %v1094 = vld [vmem:[%s39] ss:$2 sm:$0x3]
        %s1095 = scalar_lea.vmem %s39, 1
        %v1096 = vld [vmem:[%s1095] ss:$2 sm:$0x3]
        %vm1097 = vcmp.gt.f32.partialorder %v1088, 0.0
        %vm1098 = vcmp.gt.f32.partialorder %v1090, 0.0
        %v1099 = vmul.f32 %v1088, 1.442695
        %v1100 = vpow.pop %v1099
        %v1101 = vmul.f32 %v1090, 1.442695
        %v1102 = vpow.pop %v1101
        %v1103 = vsub.f32 %v1100, 1.0
        %v1104 = vsub.f32 %v1102, 1.0
        %v1105 = vsel %vm1097, %v1088, %v1103
        %v1106 = vsel %vm1098, %v1090, %v1104
        %1109 = vrot.lane.b32.xlu0 %v1105, 17
        %v1110 = vpop.permute.xlu0 %1109
        %1111 = vrot.lane.b32.xlu0 %v1106, 17
        %v1112 = vpop.permute.xlu0 %1111
        %vm1113 = vcmask 138240
        %v1114 = vsel %vm1113, %v1110, %v1112
        %v1118 = vsel %vm1113, 0.0, %v1110
        %v1119 = vsel %vm1113, %v1112, 0.0
        %v1121 = vlaneseq
        %v1122 = vshrl.u32 %v1121, 7
        %v1123 = vsub.s32 0, %v1122
        %v1124 = vrot.slane %v1094, %v1123
        %v1125 = vlaneseq
        %v1126 = vshrl.u32 %v1125, 7
        %v1127 = vsub.s32 1, %v1126
        %v1128 = vrot.slane %v1094, %v1127
        %v1131 = vmul.f32 %v1118, %v1124
        %v1132 = vmul.f32 %v1114, %v1128
        %v1134 = vlaneseq
        %v1135 = vshrl.u32 %v1134, 7
        %v1136 = vsub.s32 0, %v1135
        %v1137 = vrot.slane %v1096, %v1136
        %v1138 = vlaneseq
        %v1139 = vshrl.u32 %v1138, 7
        %v1140 = vsub.s32 1, %v1139
        %v1141 = vrot.slane %v1096, %v1140
        %1142 = vrot.lane.b32.xlu0 %v1137, 2
        %v1143 = vpop.permute.xlu0 %1142
        %1144 = vrot.lane.b32.xlu0 %v1141, 2
        %v1145 = vpop.permute.xlu0 %1144
        %vm1146 = vcmask 15360
        %v1147 = vsel %vm1146, %v1143, %v1145
        %v1151 = vmul.f32 %v1118, %v1143
        %v1152 = vmul.f32 %v1114, %v1147
        %v1153 = vmul.f32 %v1119, %v1145
        %1154 = vrot.lane.b32.xlu0 %v1124, 16
        %v1155 = vpop.permute.xlu0 %1154
        %1156 = vrot.lane.b32.xlu0 %v1128, 16
        %v1157 = vpop.permute.xlu0 %1156
        %vm1158 = vcmask 130048
        %v1159 = vsel %vm1158, %v1155, %v1157
        %v1163 = vmul.f32 %v1118, %v1155
        %v1164 = vmul.f32 %v1114, %v1159
        %v1165 = vmul.f32 %v1119, %v1157
        %1166 = vrot.lane.b32.xlu0 %v1137, 18
        %v1167 = vpop.permute.xlu0 %1166
        %1168 = vrot.lane.b32.xlu0 %v1141, 18
        %v1169 = vpop.permute.xlu0 %1168
        %vm1170 = vcmask 146432
        %v1171 = vsel %vm1170, %v1167, %v1169
        %v1175 = vmul.f32 %v1118, %v1167
        %v1176 = vmul.f32 %v1114, %v1171
        %v1177 = vmul.f32 %v1119, %v1169
        %1178 = vrot.lane.b32.xlu0 %v1124, 32
        %v1179 = vpop.permute.xlu0 %1178
        %1180 = vrot.lane.b32.xlu0 %v1128, 32
        %v1181 = vpop.permute.xlu0 %1180
        %vm1182 = vcmask 261120
        %v1183 = vsel %vm1182, %v1179, %v1181
        %v1187 = vmul.f32 %v1118, %v1179
        %v1188 = vmul.f32 %v1114, %v1183
        %v1189 = vmul.f32 %v1119, %v1181
        %1190 = vrot.lane.b32.xlu0 %v1137, 34
        %v1191 = vpop.permute.xlu0 %1190
        %1192 = vrot.lane.b32.xlu0 %v1141, 34
        %v1193 = vpop.permute.xlu0 %1192
        %vm1194 = vcmask 277504
        %v1195 = vsel %vm1194, %v1191, %v1193
        %v1199 = vmul.f32 %v1118, %v1191
        %v1200 = vmul.f32 %v1114, %v1195
        %v1201 = vmul.f32 %v1119, %v1193
        %1204 = vrot.lane.b32.xlu0 %v1118, 127
        %v1205 = vpop.permute.xlu0 %1204
        %1206 = vrot.lane.b32.xlu0 %v1114, 127
        %v1207 = vpop.permute.xlu0 %1206
        %1208 = vrot.lane.b32.xlu0 %v1119, 127
        %v1209 = vpop.permute.xlu0 %1208
        %vm1210 = vcmask 1039360
        %v1211 = vsel %vm1210, %v1205, %v1207
        %v1212 = vsel %vm1210, %v1207, %v1209
        %1218 = vrot.lane.b32.xlu0 %v1151, 126
        %v1219 = vpop.permute.xlu0 %1218
        %1220 = vrot.lane.b32.xlu0 %v1152, 126
        %v1221 = vpop.permute.xlu0 %1220
        %1222 = vrot.lane.b32.xlu0 %v1153, 126
        %v1223 = vpop.permute.xlu0 %1222
        %vm1224 = vcmask 1031168
        %v1225 = vsel %vm1224, %v1219, %v1221
        %v1226 = vsel %vm1224, %v1221, %v1223
        %1232 = vrot.lane.b32.xlu0 %v1163, 112
        %v1233 = vpop.permute.xlu0 %1232
        %1234 = vrot.lane.b32.xlu0 %v1164, 112
        %v1235 = vpop.permute.xlu0 %1234
        %1236 = vrot.lane.b32.xlu0 %v1165, 112
        %v1237 = vpop.permute.xlu0 %1236
        %vm1238 = vcmask 916480
        %v1239 = vsel %vm1238, %v1233, %v1235
        %v1240 = vsel %vm1238, %v1235, %v1237
        %1243 = vrot.lane.b32.xlu0 %v1118, 111
        %v1244 = vpop.permute.xlu0 %1243
        %1245 = vrot.lane.b32.xlu0 %v1114, 111
        %v1246 = vpop.permute.xlu0 %1245
        %1247 = vrot.lane.b32.xlu0 %v1119, 111
        %v1248 = vpop.permute.xlu0 %1247
        %vm1249 = vcmask 908288
        %v1250 = vsel %vm1249, %v1244, %v1246
        %v1251 = vsel %vm1249, %v1246, %v1248
        %1257 = vrot.lane.b32.xlu0 %v1175, 110
        %v1258 = vpop.permute.xlu0 %1257
        %1259 = vrot.lane.b32.xlu0 %v1176, 110
        %v1260 = vpop.permute.xlu0 %1259
        %1261 = vrot.lane.b32.xlu0 %v1177, 110
        %v1262 = vpop.permute.xlu0 %1261
        %vm1263 = vcmask 900096
        %v1264 = vsel %vm1263, %v1258, %v1260
        %v1265 = vsel %vm1263, %v1260, %v1262
        %1271 = vrot.lane.b32.xlu0 %v1187, 96
        %v1272 = vpop.permute.xlu0 %1271
        %1273 = vrot.lane.b32.xlu0 %v1188, 96
        %v1274 = vpop.permute.xlu0 %1273
        %1275 = vrot.lane.b32.xlu0 %v1189, 96
        %v1276 = vpop.permute.xlu0 %1275
        %vm1277 = vcmask 785408
        %v1278 = vsel %vm1277, %v1272, %v1274
        %v1279 = vsel %vm1277, %v1274, %v1276
        %1282 = vrot.lane.b32.xlu0 %v1118, 95
        %v1283 = vpop.permute.xlu0 %1282
        %1284 = vrot.lane.b32.xlu0 %v1114, 95
        %v1285 = vpop.permute.xlu0 %1284
        %1286 = vrot.lane.b32.xlu0 %v1119, 95
        %v1287 = vpop.permute.xlu0 %1286
        %vm1288 = vcmask 777216
        %v1289 = vsel %vm1288, %v1283, %v1285
        %v1290 = vsel %vm1288, %v1285, %v1287
        %1296 = vrot.lane.b32.xlu0 %v1199, 94
        %v1297 = vpop.permute.xlu0 %1296
        %1298 = vrot.lane.b32.xlu0 %v1200, 94
        %v1299 = vpop.permute.xlu0 %1298
        %1300 = vrot.lane.b32.xlu0 %v1201, 94
        %v1301 = vpop.permute.xlu0 %1300
        %vm1302 = vcmask 769024
        %v1303 = vsel %vm1302, %v1297, %v1299
        %v1304 = vsel %vm1302, %v1299, %v1301
        %vm1307 = vcmask 588800
        %v1309 = vsel %vm1307, %v1092, 0
        %1311 = vmatprep.subr.mxu0 0.0
        %1312 = vmatpush1.msra.mxu0 0.0
        %1313 = vmatprep.subr.mxu0 0.0
        %1314 = vmatpush1.msra.mxu0 0.0
        %1315 = vmatprep.subr.mxu0 0.0
        %1316 = vmatpush1.msra.mxu0 0.0
        %1317 = vmatprep.subr.mxu0 0.0
        %1318 = vmatpush1.msra.mxu0 0.0
        %1319 = vmatprep.subr.mxu0 0.0
        %1320 = vmatpush1.msra.mxu0 0.0
        %1321 = vmatprep.subr.mxu0 0.0
        %1322 = vmatpush1.msra.mxu0 0.0
        %1323 = vmatprep.subr.mxu0 0.0
        %1324 = vmatpush1.msra.mxu0 0.0
        %1325 = vmatprep.subr.mxu0 %v1304
        %1326 = vmatpush1.msra.mxu0 %v1303
        %1327 = vmatprep.subr.mxu0 %v1290
        %1328 = vmatpush1.msra.mxu0 %v1289
        %1329 = vmatprep.subr.mxu0 %v1279
        %1330 = vmatpush1.msra.mxu0 %v1278
        %1331 = vmatprep.subr.mxu0 %v1265
        %1332 = vmatpush1.msra.mxu0 %v1264
        %1333 = vmatprep.subr.mxu0 %v1251
        %1334 = vmatpush1.msra.mxu0 %v1250
        %1335 = vmatprep.subr.mxu0 %v1240
        %1336 = vmatpush1.msra.mxu0 %v1239
        %1337 = vmatprep.subr.mxu0 %v1226
        %1338 = vmatpush1.msra.mxu0 %v1225
        %1339 = vmatprep.subr.mxu0 %v1212
        %1340 = vmatpush1.msra.mxu0 %v1211
        %1341 = vmatprep.subr.mxu0 %v1132
        %1342 = vmatpush1.msra.mxu0 %v1131
        %1343 = vmatprep.subr.mxu0 0.0
        %1344 = vmatpush2.msra.mxu0 0.0
        %1345 = vmatprep.subr.mxu0 0.0
        %1346 = vmatpush2.msra.mxu0 0.0
        %1347 = vmatprep.subr.mxu0 0.0
        %1348 = vmatpush2.msra.mxu0 0.0
        %1349 = vmatprep.subr.mxu0 0.0
        %1350 = vmatpush2.msra.mxu0 0.0
        %1351 = vmatprep.subr.mxu0 0.0
        %1352 = vmatpush2.msra.mxu0 0.0
        %1353 = vmatprep.subr.mxu0 0.0
        %1354 = vmatpush2.msra.mxu0 0.0
        %1355 = vmatprep.subr.mxu0 0.0
        %1356 = vmatpush2.msra.mxu0 0.0
        %1357 = vmatprep.subr.mxu0 0.0
        %1358 = vmatpush2.msra.mxu0 0.0
        %1359 = vmatprep.subr.mxu0 0.0
        %1360 = vmatpush2.msra.mxu0 0.0
        %1361 = vmatprep.subr.mxu0 0.0
        %1362 = vmatpush2.msra.mxu0 0.0
        %1363 = vmatprep.subr.mxu0 0.0
        %1364 = vmatpush2.msra.mxu0 0.0
        %1365 = vmatprep.subr.mxu0 0.0
        %1366 = vmatpush2.msra.mxu0 0.0
        %1367 = vmatprep.subr.mxu0 0.0
        %1368 = vmatpush2.msra.mxu0 0.0
        %1369 = vmatprep.subr.mxu0 0.0
        %1370 = vmatpush2.msra.mxu0 0.0
        %1371 = vmatprep.subr.mxu0 0.0
        %1372 = vmatpush2.msra.mxu0 0.0
        %1373 = vmatprep.subr.mxu0 0.0
        %1374 = vmatpush2.msra.mxu0 0.0
        %1375 = vmatprep.mubr.f32.mxu0 0.0
        %1376 = vmatmul.mubr.f32.gmra.mxu0 %v1309
        %v1377 = vpop.f32.mrf.mxu0
        %v1378 = vadd.f32 0.0, %v1377
        %v1379 = vpop.f32.mrf.mxu0
        %v1380 = vadd.f32 0.0, %v1379
        %1381 = vdwg.mxu0
        %v1382 = vadd.f32 %v1088, %v1378
        %v1383 = vadd.f32 %v1090, %v1380
        %1385 = vset.pattern.permute.xlu0 0
        %1386 = vperm.xlu0 %1385, %v1093
        %v1387 = vpop.permute.xlu0 %1386
        %v1389 = vadd.f32 %v1382, %v1387
        %v1390 = vadd.f32 %v1383, %v1387
        %1391 = vst [vmem:[%s961] sm:$0xff] %v1389
        %1392 = vst [vmem:[%s961 + $0x8] sm:$0xff] %v1390
        %v1393 = vld [vmem:[%s11] sm:$0xff]
        %v1394 = vld [vmem:[%s13] sm:$0xff]
        %v1395 = vld [vmem:[%s39] ss:$2 sm:$0x3]
        %v1396 = vld [vmem:[%s1095] ss:$2 sm:$0x3]
        %vm1397 = vcmp.gt.f32.partialorder %v1389, 0.0
        %vm1398 = vcmp.gt.f32.partialorder %v1390, 0.0
        %v1399 = vmul.f32 %v1389, 1.442695
        %v1400 = vpow.pop %v1399
        %v1401 = vmul.f32 %v1390, 1.442695
        %v1402 = vpow.pop %v1401
        %v1403 = vsub.f32 %v1400, 1.0
        %v1404 = vsub.f32 %v1402, 1.0
        %v1405 = vsel %vm1397, %v1389, %v1403
        %v1406 = vsel %vm1398, %v1390, %v1404
        %1409 = vrot.lane.b32.xlu0 %v1405, 17
        %v1410 = vpop.permute.xlu0 %1409
        %1411 = vrot.lane.b32.xlu0 %v1406, 17
        %v1412 = vpop.permute.xlu0 %1411
        %v1413 = vsel %vm1113, %v1410, %v1412
        %v1417 = vsel %vm1113, 0.0, %v1410
        %v1418 = vsel %vm1113, %v1412, 0.0
        %v1420 = vlaneseq
        %v1421 = vshrl.u32 %v1420, 7
        %v1422 = vsub.s32 0, %v1421
        %v1423 = vrot.slane %v1395, %v1422
        %v1424 = vlaneseq
        %v1425 = vshrl.u32 %v1424, 7
        %v1426 = vsub.s32 1, %v1425
        %v1427 = vrot.slane %v1395, %v1426
        %v1430 = vmul.f32 %v1417, %v1423
        %v1431 = vmul.f32 %v1413, %v1427
        %v1433 = vlaneseq
        %v1434 = vshrl.u32 %v1433, 7
        %v1435 = vsub.s32 0, %v1434
        %v1436 = vrot.slane %v1396, %v1435
        %v1437 = vlaneseq
        %v1438 = vshrl.u32 %v1437, 7
        %v1439 = vsub.s32 1, %v1438
        %v1440 = vrot.slane %v1396, %v1439
        %1441 = vrot.lane.b32.xlu0 %v1436, 2
        %v1442 = vpop.permute.xlu0 %1441
        %1443 = vrot.lane.b32.xlu0 %v1440, 2
        %v1444 = vpop.permute.xlu0 %1443
        %v1445 = vsel %vm1146, %v1442, %v1444
        %v1449 = vmul.f32 %v1417, %v1442
        %v1450 = vmul.f32 %v1413, %v1445
        %v1451 = vmul.f32 %v1418, %v1444
        %1452 = vrot.lane.b32.xlu0 %v1423, 16
        %v1453 = vpop.permute.xlu0 %1452
        %1454 = vrot.lane.b32.xlu0 %v1427, 16
        %v1455 = vpop.permute.xlu0 %1454
        %v1456 = vsel %vm1158, %v1453, %v1455
        %v1460 = vmul.f32 %v1417, %v1453
        %v1461 = vmul.f32 %v1413, %v1456
        %v1462 = vmul.f32 %v1418, %v1455
        %1463 = vrot.lane.b32.xlu0 %v1436, 18
        %v1464 = vpop.permute.xlu0 %1463
        %1465 = vrot.lane.b32.xlu0 %v1440, 18
        %v1466 = vpop.permute.xlu0 %1465
        %v1467 = vsel %vm1170, %v1464, %v1466
        %v1471 = vmul.f32 %v1417, %v1464
        %v1472 = vmul.f32 %v1413, %v1467
        %v1473 = vmul.f32 %v1418, %v1466
        %1474 = vrot.lane.b32.xlu0 %v1423, 32
        %v1475 = vpop.permute.xlu0 %1474
        %1476 = vrot.lane.b32.xlu0 %v1427, 32
        %v1477 = vpop.permute.xlu0 %1476
        %v1478 = vsel %vm1182, %v1475, %v1477
        %v1482 = vmul.f32 %v1417, %v1475
        %v1483 = vmul.f32 %v1413, %v1478
        %v1484 = vmul.f32 %v1418, %v1477
        %1485 = vrot.lane.b32.xlu0 %v1436, 34
        %v1486 = vpop.permute.xlu0 %1485
        %1487 = vrot.lane.b32.xlu0 %v1440, 34
        %v1488 = vpop.permute.xlu0 %1487
        %v1489 = vsel %vm1194, %v1486, %v1488
        %v1493 = vmul.f32 %v1417, %v1486
        %v1494 = vmul.f32 %v1413, %v1489
        %v1495 = vmul.f32 %v1418, %v1488
        %1498 = vrot.lane.b32.xlu0 %v1417, 127
        %v1499 = vpop.permute.xlu0 %1498
        %1500 = vrot.lane.b32.xlu0 %v1413, 127
        %v1501 = vpop.permute.xlu0 %1500
        %1502 = vrot.lane.b32.xlu0 %v1418, 127
        %v1503 = vpop.permute.xlu0 %1502
        %v1504 = vsel %vm1210, %v1499, %v1501
        %v1505 = vsel %vm1210, %v1501, %v1503
        %1511 = vrot.lane.b32.xlu0 %v1449, 126
        %v1512 = vpop.permute.xlu0 %1511
        %1513 = vrot.lane.b32.xlu0 %v1450, 126
        %v1514 = vpop.permute.xlu0 %1513
        %1515 = vrot.lane.b32.xlu0 %v1451, 126
        %v1516 = vpop.permute.xlu0 %1515
        %v1517 = vsel %vm1224, %v1512, %v1514
        %v1518 = vsel %vm1224, %v1514, %v1516
        %1524 = vrot.lane.b32.xlu0 %v1460, 112
        %v1525 = vpop.permute.xlu0 %1524
        %1526 = vrot.lane.b32.xlu0 %v1461, 112
        %v1527 = vpop.permute.xlu0 %1526
        %1528 = vrot.lane.b32.xlu0 %v1462, 112
        %v1529 = vpop.permute.xlu0 %1528
        %v1530 = vsel %vm1238, %v1525, %v1527
        %v1531 = vsel %vm1238, %v1527, %v1529
        %1534 = vrot.lane.b32.xlu0 %v1417, 111
        %v1535 = vpop.permute.xlu0 %1534
        %1536 = vrot.lane.b32.xlu0 %v1413, 111
        %v1537 = vpop.permute.xlu0 %1536
        %1538 = vrot.lane.b32.xlu0 %v1418, 111
        %v1539 = vpop.permute.xlu0 %1538
        %v1540 = vsel %vm1249, %v1535, %v1537
        %v1541 = vsel %vm1249, %v1537, %v1539
        %1547 = vrot.lane.b32.xlu0 %v1471, 110
        %v1548 = vpop.permute.xlu0 %1547
        %1549 = vrot.lane.b32.xlu0 %v1472, 110
        %v1550 = vpop.permute.xlu0 %1549
        %1551 = vrot.lane.b32.xlu0 %v1473, 110
        %v1552 = vpop.permute.xlu0 %1551
        %v1553 = vsel %vm1263, %v1548, %v1550
        %v1554 = vsel %vm1263, %v1550, %v1552
        %1560 = vrot.lane.b32.xlu0 %v1482, 96
        %v1561 = vpop.permute.xlu0 %1560
        %1562 = vrot.lane.b32.xlu0 %v1483, 96
        %v1563 = vpop.permute.xlu0 %1562
        %1564 = vrot.lane.b32.xlu0 %v1484, 96
        %v1565 = vpop.permute.xlu0 %1564
        %v1566 = vsel %vm1277, %v1561, %v1563
        %v1567 = vsel %vm1277, %v1563, %v1565
        %1570 = vrot.lane.b32.xlu0 %v1417, 95
        %v1571 = vpop.permute.xlu0 %1570
        %1572 = vrot.lane.b32.xlu0 %v1413, 95
        %v1573 = vpop.permute.xlu0 %1572
        %1574 = vrot.lane.b32.xlu0 %v1418, 95
        %v1575 = vpop.permute.xlu0 %1574
        %v1576 = vsel %vm1288, %v1571, %v1573
        %v1577 = vsel %vm1288, %v1573, %v1575
        %1583 = vrot.lane.b32.xlu0 %v1493, 94
        %v1584 = vpop.permute.xlu0 %1583
        %1585 = vrot.lane.b32.xlu0 %v1494, 94
        %v1586 = vpop.permute.xlu0 %1585
        %1587 = vrot.lane.b32.xlu0 %v1495, 94
        %v1588 = vpop.permute.xlu0 %1587
        %v1589 = vsel %vm1302, %v1584, %v1586
        %v1590 = vsel %vm1302, %v1586, %v1588
        %v1594 = vsel %vm1307, %v1393, 0
        %1596 = vmatprep.subr.mxu0 0.0
        %1597 = vmatpush1.msra.mxu0 0.0
        %1598 = vmatprep.subr.mxu0 0.0
        %1599 = vmatpush1.msra.mxu0 0.0
        %1600 = vmatprep.subr.mxu0 0.0
        %1601 = vmatpush1.msra.mxu0 0.0
        %1602 = vmatprep.subr.mxu0 0.0
        %1603 = vmatpush1.msra.mxu0 0.0
        %1604 = vmatprep.subr.mxu0 0.0
        %1605 = vmatpush1.msra.mxu0 0.0
        %1606 = vmatprep.subr.mxu0 0.0
        %1607 = vmatpush1.msra.mxu0 0.0
        %1608 = vmatprep.subr.mxu0 0.0
        %1609 = vmatpush1.msra.mxu0 0.0
        %1610 = vmatprep.subr.mxu0 %v1590
        %1611 = vmatpush1.msra.mxu0 %v1589
        %1612 = vmatprep.subr.mxu0 %v1577
        %1613 = vmatpush1.msra.mxu0 %v1576
        %1614 = vmatprep.subr.mxu0 %v1567
        %1615 = vmatpush1.msra.mxu0 %v1566
        %1616 = vmatprep.subr.mxu0 %v1554
        %1617 = vmatpush1.msra.mxu0 %v1553
        %1618 = vmatprep.subr.mxu0 %v1541
        %1619 = vmatpush1.msra.mxu0 %v1540
        %1620 = vmatprep.subr.mxu0 %v1531
        %1621 = vmatpush1.msra.mxu0 %v1530
        %1622 = vmatprep.subr.mxu0 %v1518
        %1623 = vmatpush1.msra.mxu0 %v1517
        %1624 = vmatprep.subr.mxu0 %v1505
        %1625 = vmatpush1.msra.mxu0 %v1504
        %1626 = vmatprep.subr.mxu0 %v1431
        %1627 = vmatpush1.msra.mxu0 %v1430
        %1628 = vmatprep.subr.mxu0 0.0
        %1629 = vmatpush2.msra.mxu0 0.0
        %1630 = vmatprep.subr.mxu0 0.0
        %1631 = vmatpush2.msra.mxu0 0.0
        %1632 = vmatprep.subr.mxu0 0.0
        %1633 = vmatpush2.msra.mxu0 0.0
        %1634 = vmatprep.subr.mxu0 0.0
        %1635 = vmatpush2.msra.mxu0 0.0
        %1636 = vmatprep.subr.mxu0 0.0
        %1637 = vmatpush2.msra.mxu0 0.0
        %1638 = vmatprep.subr.mxu0 0.0
        %1639 = vmatpush2.msra.mxu0 0.0
        %1640 = vmatprep.subr.mxu0 0.0
        %1641 = vmatpush2.msra.mxu0 0.0
        %1642 = vmatprep.subr.mxu0 0.0
        %1643 = vmatpush2.msra.mxu0 0.0
        %1644 = vmatprep.subr.mxu0 0.0
        %1645 = vmatpush2.msra.mxu0 0.0
        %1646 = vmatprep.subr.mxu0 0.0
        %1647 = vmatpush2.msra.mxu0 0.0
        %1648 = vmatprep.subr.mxu0 0.0
        %1649 = vmatpush2.msra.mxu0 0.0
        %1650 = vmatprep.subr.mxu0 0.0
        %1651 = vmatpush2.msra.mxu0 0.0
        %1652 = vmatprep.subr.mxu0 0.0
        %1653 = vmatpush2.msra.mxu0 0.0
        %1654 = vmatprep.subr.mxu0 0.0
        %1655 = vmatpush2.msra.mxu0 0.0
        %1656 = vmatprep.subr.mxu0 0.0
        %1657 = vmatpush2.msra.mxu0 0.0
        %1658 = vmatprep.subr.mxu0 0.0
        %1659 = vmatpush2.msra.mxu0 0.0
        %1660 = vmatprep.mubr.f32.mxu0 0.0
        %1661 = vmatmul.mubr.f32.gmra.mxu0 %v1594
        %v1662 = vpop.f32.mrf.mxu0
        %v1663 = vadd.f32 0.0, %v1662
        %v1664 = vpop.f32.mrf.mxu0
        %v1665 = vadd.f32 0.0, %v1664
        %1666 = vdwg.mxu0
        %v1667 = vadd.f32 %v1389, %v1663
        %v1668 = vadd.f32 %v1390, %v1665
        %1670 = vset.pattern.permute.xlu0 0
        %1671 = vperm.xlu0 %1670, %v1394
        %v1672 = vpop.permute.xlu0 %1671
        %v1674 = vadd.f32 %v1667, %v1672
        %v1675 = vadd.f32 %v1668, %v1672
        %1676 = vst [vmem:[%s968] sm:$0xff] %v1674
        %1677 = vst [vmem:[%s968 + $0x8] sm:$0xff] %v1675
        %v1678 = vld [vmem:[%s15] sm:$0xff]
        %v1679 = vld [vmem:[%s15 + $0x8] sm:$0xff]
        %v1680 = vld [vmem:[%s17] sm:$0xff]
        %v1681 = vld [vmem:[%s17 + $0x8] sm:$0xff]
        %v1682 = vld [vmem:[%s41] sm:$0x1]
        %v1683 = vld [vmem:[%s41 + $0x1] sm:$0x1]
        %1686 = vrot.lane.b32.xlu0 %v1674, 17
        %v1687 = vpop.permute.xlu0 %1686
        %1688 = vrot.lane.b32.xlu0 %v1675, 17
        %v1689 = vpop.permute.xlu0 %1688
        %v1690 = vsel %vm1113, %v1687, %v1689
        %v1694 = vsel %vm1113, 0.0, %v1687
        %v1695 = vsel %vm1113, %v1689, 0.0
        %1697 = vrot.lane.b32.xlu0 %v1694, 112
        %v1698 = vpop.permute.xlu0 %1697
        %1700 = vrot.lane.b32.xlu0 %v1694, 96
        %v1701 = vpop.permute.xlu0 %1700
        %1703 = vrot.lane.b32.xlu0 %v1694, 80
        %v1704 = vpop.permute.xlu0 %1703
        %1706 = vrot.lane.b32.xlu0 %v1690, 64
        %v1707 = vpop.permute.xlu0 %1706
        %1709 = vrot.lane.b32.xlu0 %v1690, 48
        %v1710 = vpop.permute.xlu0 %1709
        %1712 = vrot.lane.b32.xlu0 %v1690, 32
        %v1713 = vpop.permute.xlu0 %1712
        %1715 = vrot.lane.b32.xlu0 %v1690, 16
        %v1716 = vpop.permute.xlu0 %1715
        %vm1718 = vcmask 7168
        %v1719 = vsel %vm1718, 0.0, %v1694
        %v1720 = vsel %vm1113, %v1719, %v1698
        %vm1721 = vcmask 269312
        %v1722 = vsel %vm1721, %v1720, %v1701
        %vm1723 = vcmask 400384
        %v1724 = vsel %vm1723, %v1722, %v1704
        %vm1725 = vcmask 531456
        %v1726 = vsel %vm1725, %v1724, %v1707
        %vm1727 = vcmask 662528
        %v1728 = vsel %vm1727, %v1726, %v1710
        %vm1729 = vcmask 793600
        %v1730 = vsel %vm1729, %v1728, %v1713
        %vm1731 = vcmask 924672
        %v1732 = vsel %vm1731, %v1730, %v1716
        %v1733 = vsel %vm1718, %v1716, 0.0
        %v1734 = vlaneseq
        %v1735 = vshrl.u32 %v1734, 7
        %v1736 = vsub.s32 0, %v1735
        %v1737 = vrot.slane %v1682, %v1736
        %v1738 = vmul.f32 %v1732, %v1737
        %v1739 = vlaneseq
        %v1740 = vshrl.u32 %v1739, 7
        %v1741 = vsub.s32 0, %v1740
        %v1742 = vrot.slane %v1683, %v1741
        %1744 = vrot.lane.b32.xlu0 %v1742, 2
        %v1745 = vpop.permute.xlu0 %1744
        %v1747 = vmul.f32 %v1732, %v1745
        %v1748 = vmul.f32 %v1733, %v1745
        %1749 = vrot.lane.b32.xlu0 %v1694, 64
        %v1750 = vpop.permute.xlu0 %1749
        %vm1751 = vcmask 523264
        %v1752 = vsel %vm1751, %v1750, %v1707
        %v1754 = vsel %vm1718, 0.0, %v1698
        %v1755 = vsel %vm1113, %v1754, %v1701
        %v1756 = vsel %vm1721, %v1755, %v1704
        %v1757 = vsel %vm1723, %v1756, %v1752
        %v1758 = vsel %vm1725, %v1757, %v1710
        %v1759 = vsel %vm1727, %v1758, %v1713
        %v1760 = vsel %vm1729, %v1759, %v1716
        %v1761 = vsel %vm1731, %v1760, %v1690
        %v1762 = vsel %vm1718, %v1695, 0.0
        %v1763 = vmul.f32 %v1761, %v1737
        %v1764 = vmul.f32 %v1761, %v1745
        %v1765 = vmul.f32 %v1762, %v1745
        %1768 = vrot.lane.b32.xlu0 %v1695, 112
        %v1769 = vpop.permute.xlu0 %1768
        %v1771 = vsel %vm1718, 0.0, %v1701
        %v1772 = vsel %vm1113, %v1771, %v1704
        %v1773 = vsel %vm1721, %v1772, %v1750
        %v1774 = vsel %vm1723, %v1773, %v1710
        %v1775 = vsel %vm1725, %v1774, %v1713
        %v1776 = vsel %vm1727, %v1775, %v1716
        %v1777 = vsel %vm1729, %v1776, %v1690
        %v1778 = vsel %vm1731, %v1777, %v1769
        %v1779 = vsel %vm1718, %v1769, 0.0
        %v1780 = vmul.f32 %v1778, %v1737
        %v1781 = vmul.f32 %v1778, %v1745
        %v1782 = vmul.f32 %v1779, %v1745
        %1785 = vrot.lane.b32.xlu0 %v1732, 127
        %v1786 = vpop.permute.xlu0 %1785
        %1787 = vrot.lane.b32.xlu0 %v1733, 127
        %v1788 = vpop.permute.xlu0 %1787
        %v1789 = vsel %vm1210, %v1786, %v1788
        %1793 = vrot.lane.b32.xlu0 %v1747, 126
        %v1794 = vpop.permute.xlu0 %1793
        %1795 = vrot.lane.b32.xlu0 %v1748, 126
        %v1796 = vpop.permute.xlu0 %1795
        %v1797 = vsel %vm1224, %v1794, %v1796
        %1801 = vrot.lane.b32.xlu0 %v1761, 127
        %v1802 = vpop.permute.xlu0 %1801
        %1803 = vrot.lane.b32.xlu0 %v1762, 127
        %v1804 = vpop.permute.xlu0 %1803
        %v1805 = vsel %vm1210, %v1802, %v1804
        %1809 = vrot.lane.b32.xlu0 %v1764, 126
        %v1810 = vpop.permute.xlu0 %1809
        %1811 = vrot.lane.b32.xlu0 %v1765, 126
        %v1812 = vpop.permute.xlu0 %1811
        %v1813 = vsel %vm1224, %v1810, %v1812
        %1817 = vrot.lane.b32.xlu0 %v1778, 127
        %v1818 = vpop.permute.xlu0 %1817
        %1819 = vrot.lane.b32.xlu0 %v1779, 127
        %v1820 = vpop.permute.xlu0 %1819
        %v1821 = vsel %vm1210, %v1818, %v1820
        %1825 = vrot.lane.b32.xlu0 %v1781, 126
        %v1826 = vpop.permute.xlu0 %1825
        %1827 = vrot.lane.b32.xlu0 %v1782, 126
        %v1828 = vpop.permute.xlu0 %1827
        %v1829 = vsel %vm1224, %v1826, %v1828
        %v1832 = vsel %vm1307, %v1678, 0
        %v1835 = vsel %vm1307, %v1679, 0
        %1837 = vmatprep.subr.mxu0 0.0
        %1838 = vmatpush1.msra.mxu0 0.0
        %1839 = vmatprep.subr.mxu0 0.0
        %1840 = vmatpush1.msra.mxu0 0.0
        %1841 = vmatprep.subr.mxu0 0.0
        %1842 = vmatpush1.msra.mxu0 0.0
        %1843 = vmatprep.subr.mxu0 0.0
        %1844 = vmatpush1.msra.mxu0 0.0
        %1845 = vmatprep.subr.mxu0 0.0
        %1846 = vmatpush1.msra.mxu0 0.0
        %1847 = vmatprep.subr.mxu0 0.0
        %1848 = vmatpush1.msra.mxu0 0.0
        %1849 = vmatprep.subr.mxu0 0.0
        %1850 = vmatpush1.msra.mxu0 0.0
        %1851 = vmatprep.subr.mxu0 0.0
        %1852 = vmatpush1.msra.mxu0 %v1829
        %1853 = vmatprep.subr.mxu0 0.0
        %1854 = vmatpush1.msra.mxu0 %v1821
        %1855 = vmatprep.subr.mxu0 0.0
        %1856 = vmatpush1.msra.mxu0 %v1780
        %1857 = vmatprep.subr.mxu0 0.0
        %1858 = vmatpush1.msra.mxu0 %v1813
        %1859 = vmatprep.subr.mxu0 0.0
        %1860 = vmatpush1.msra.mxu0 %v1805
        %1861 = vmatprep.subr.mxu0 0.0
        %1862 = vmatpush1.msra.mxu0 %v1763
        %1863 = vmatprep.subr.mxu0 0.0
        %1864 = vmatpush1.msra.mxu0 %v1797
        %1865 = vmatprep.subr.mxu0 0.0
        %1866 = vmatpush1.msra.mxu0 %v1789
        %1867 = vmatprep.subr.mxu0 0.0
        %1868 = vmatpush1.msra.mxu0 %v1738
        %1869 = vmatprep.subr.mxu0 0.0
        %1870 = vmatpush2.msra.mxu0 0.0
        %1871 = vmatprep.subr.mxu0 0.0
        %1872 = vmatpush2.msra.mxu0 0.0
        %1873 = vmatprep.subr.mxu0 0.0
        %1874 = vmatpush2.msra.mxu0 0.0
        %1875 = vmatprep.subr.mxu0 0.0
        %1876 = vmatpush2.msra.mxu0 0.0
        %1877 = vmatprep.subr.mxu0 0.0
        %1878 = vmatpush2.msra.mxu0 0.0
        %1879 = vmatprep.subr.mxu0 0.0
        %1880 = vmatpush2.msra.mxu0 0.0
        %1881 = vmatprep.subr.mxu0 0.0
        %1882 = vmatpush2.msra.mxu0 0.0
        %1883 = vmatprep.subr.mxu0 0.0
        %1884 = vmatpush2.msra.mxu0 0.0
        %1885 = vmatprep.subr.mxu0 0.0
        %1886 = vmatpush2.msra.mxu0 0.0
        %1887 = vmatprep.subr.mxu0 0.0
        %1888 = vmatpush2.msra.mxu0 0.0
        %1889 = vmatprep.subr.mxu0 0.0
        %1890 = vmatpush2.msra.mxu0 0.0
        %1891 = vmatprep.subr.mxu0 0.0
        %1892 = vmatpush2.msra.mxu0 0.0
        %1893 = vmatprep.subr.mxu0 0.0
        %1894 = vmatpush2.msra.mxu0 0.0
        %1895 = vmatprep.subr.mxu0 0.0
        %1896 = vmatpush2.msra.mxu0 0.0
        %1897 = vmatprep.subr.mxu0 0.0
        %1898 = vmatpush2.msra.mxu0 0.0
        %1899 = vmatprep.subr.mxu0 0.0
        %1900 = vmatpush2.msra.mxu0 0.0
        %1901 = vmatprep.mubr.f32.mxu0 0.0
        %1902 = vmatmul.mubr.f32.gmra.mxu0 %v1832
        %v1903 = vpop.f32.mrf.mxu0
        %v1904 = vadd.f32 0.0, %v1903
        %v1905 = vpop.f32.mrf.mxu0
        %1906 = vmatprep.mubr.f32.mxu0 0.0
        %1907 = vmatmul.mubr.f32.gmra.mxu0 %v1835
        %v1908 = vpop.f32.mrf.mxu0
        %v1909 = vadd.f32 0.0, %v1908
        %v1910 = vpop.f32.mrf.mxu0
        %1911 = vdwg.mxu0
        %v1912 = vld [vmem:[%s43] sm:$0xff]
        %v1913 = vld [vmem:[%s43 + $0x8] sm:$0xff]
        %v1914 = vld [vmem:[%s43 + $0x10] sm:$0xff]
        %v1915 = vld [vmem:[%s43 + $0x18] sm:$0xff]
        %v1916 = vld [vmem:[%s43 + $0x20] sm:$0xff]
        %v1917 = vld [vmem:[%s43 + $0x28] sm:$0xff]
        %v1918 = vld [vmem:[%s43 + $0x30] sm:$0xff]
        %v1919 = vld [vmem:[%s43 + $0x38] sm:$0xff]
        %v1920 = vld [vmem:[%s43 + $0x40] sm:$0xff]
        %v1921 = vld [vmem:[%s43 + $0x48] sm:$0xff]
        %v1922 = vld [vmem:[%s43 + $0x50] sm:$0xff]
        %v1923 = vld [vmem:[%s43 + $0x58] sm:$0xff]
        %v1924 = vld [vmem:[%s43 + $0x60] sm:$0xff]
        %v1925 = vld [vmem:[%s43 + $0x68] sm:$0xff]
        %v1926 = vld [vmem:[%s43 + $0x70] sm:$0xff]
        %v1927 = vld [vmem:[%s43 + $0x78] sm:$0xff]
        %1929 = vset.pattern.permute.xlu0 0
        %1930 = vperm.xlu0 %1929, %v1680
        %v1931 = vpop.permute.xlu0 %1930
        %1934 = vset.pattern.permute.xlu0 0
        %1935 = vperm.xlu0 %1934, %v1681
        %v1936 = vpop.permute.xlu0 %1935
        %1938 = vmatprep.subr.mxu0 0.0
        %1939 = vmatpush1.msra.mxu0 %v1927
        %1940 = vmatprep.subr.mxu0 0.0
        %1941 = vmatpush1.msra.mxu0 %v1926
        %1942 = vmatprep.subr.mxu0 0.0
        %1943 = vmatpush1.msra.mxu0 %v1925
        %1944 = vmatprep.subr.mxu0 0.0
        %1945 = vmatpush1.msra.mxu0 %v1924
        %1946 = vmatprep.subr.mxu0 0.0
        %1947 = vmatpush1.msra.mxu0 %v1923
        %1948 = vmatprep.subr.mxu0 0.0
        %1949 = vmatpush1.msra.mxu0 %v1922
        %1950 = vmatprep.subr.mxu0 0.0
        %1951 = vmatpush1.msra.mxu0 %v1921
        %1952 = vmatprep.subr.mxu0 0.0
        %1953 = vmatpush1.msra.mxu0 %v1920
        %1954 = vmatprep.subr.mxu0 0.0
        %1955 = vmatpush1.msra.mxu0 %v1919
        %1956 = vmatprep.subr.mxu0 0.0
        %1957 = vmatpush1.msra.mxu0 %v1918
        %1958 = vmatprep.subr.mxu0 0.0
        %1959 = vmatpush1.msra.mxu0 %v1917
        %1960 = vmatprep.subr.mxu0 0.0
        %1961 = vmatpush1.msra.mxu0 %v1916
        %1962 = vmatprep.subr.mxu0 0.0
        %1963 = vmatpush1.msra.mxu0 %v1915
        %1964 = vmatprep.subr.mxu0 0.0
        %1965 = vmatpush1.msra.mxu0 %v1914
        %1966 = vmatprep.subr.mxu0 0.0
        %1967 = vmatpush1.msra.mxu0 %v1913
        %1968 = vmatprep.subr.mxu0 0.0
        %1969 = vmatpush1.msra.mxu0 %v1912
        %1970 = vmatprep.subr.mxu0 0.0
        %1971 = vmatpush2.msra.mxu0 0.0
        %1972 = vmatprep.subr.mxu0 0.0
        %1973 = vmatpush2.msra.mxu0 0.0
        %1974 = vmatprep.subr.mxu0 0.0
        %1975 = vmatpush2.msra.mxu0 0.0
        %1976 = vmatprep.subr.mxu0 0.0
        %1977 = vmatpush2.msra.mxu0 0.0
        %1978 = vmatprep.subr.mxu0 0.0
        %1979 = vmatpush2.msra.mxu0 0.0
        %1980 = vmatprep.subr.mxu0 0.0
        %1981 = vmatpush2.msra.mxu0 0.0
        %1982 = vmatprep.subr.mxu0 0.0
        %1983 = vmatpush2.msra.mxu0 0.0
        %1984 = vmatprep.subr.mxu0 0.0
        %1985 = vmatpush2.msra.mxu0 0.0
        %1986 = vmatprep.subr.mxu0 0.0
        %1987 = vmatpush2.msra.mxu0 0.0
        %1988 = vmatprep.subr.mxu0 0.0
        %1989 = vmatpush2.msra.mxu0 0.0
        %1990 = vmatprep.subr.mxu0 0.0
        %1991 = vmatpush2.msra.mxu0 0.0
        %1992 = vmatprep.subr.mxu0 0.0
        %1993 = vmatpush2.msra.mxu0 0.0
        %1994 = vmatprep.subr.mxu0 0.0
        %1995 = vmatpush2.msra.mxu0 0.0
        %1996 = vmatprep.subr.mxu0 0.0
        %1997 = vmatpush2.msra.mxu0 0.0
        %1998 = vmatprep.subr.mxu0 0.0
        %1999 = vmatpush2.msra.mxu0 0.0
        %2000 = vmatprep.subr.mxu0 0.0
        %2001 = vmatpush2.msra.mxu0 0.0
        %2002 = vmatprep.mubr.f32.mxu0 0.0
        %2003 = vmatmul.mubr.f32.gmra.mxu0 %v1904
        %v2004 = vpop.f32.mrf.mxu0
        %v2005 = vadd.f32 %v1931, %v2004
        %v2006 = vpop.f32.mrf.mxu0
        %2007 = vmatprep.mubr.f32.mxu0 0.0
        %2008 = vmatmul.mubr.f32.gmra.mxu0 %v1909
        %v2009 = vpop.f32.mrf.mxu0
        %v2010 = vadd.f32 %v1936, %v2009
        %v2011 = vpop.f32.mrf.mxu0
        %2012 = vdwg.mxu0
        %v2013 = vld [vmem:[%s19] sm:$0xff]
        %v2014 = vld [vmem:[%s19 + $0x8] sm:$0xff]
        %v2015 = vld [vmem:[%s19 + $0x10] sm:$0xff]
        %v2016 = vld [vmem:[%s19 + $0x18] sm:$0xff]
        %v2017 = vld [vmem:[%s21] sm:$0xff]
        %v2018 = vld [vmem:[%s21 + $0x8] sm:$0xff]
        %v2019 = vld [vmem:[%s45] sm:$0x1]
        %v2020 = vld [vmem:[%s45 + $0x1] sm:$0x1]
        %vm2021 = vcmp.gt.f32.partialorder %v2005, 0.0
        %vm2022 = vcmp.gt.f32.partialorder %v2010, 0.0
        %v2023 = vmul.f32 %v2005, 1.442695
        %v2024 = vpow.pop %v2023
        %v2025 = vmul.f32 %v2010, 1.442695
        %v2026 = vpow.pop %v2025
        %v2027 = vsub.f32 %v2024, 1.0
        %v2028 = vsub.f32 %v2026, 1.0
        %v2029 = vsel %vm2021, %v2005, %v2027
        %v2030 = vsel %vm2022, %v2010, %v2028
        %2033 = vrot.lane.b32.xlu0 %v2029, 9
        %v2034 = vpop.permute.xlu0 %2033
        %2035 = vrot.lane.b32.xlu0 %v2030, 9
        %v2036 = vpop.permute.xlu0 %2035
        %vm2039 = vcmask 72704
        %v2040 = vsel %vm2039, 0.0, %v2034
        %v2041 = vsel %vm2039, 0.0, %v2036
        %vm2042 = vcmask 596992
        %v2043 = vsel %vm2042, %v2040, 0.0
        %v2044 = vsel %vm2042, %v2041, 0.0
        %v2045 = vlaneseq
        %v2046 = vshrl.u32 %v2045, 7
        %v2047 = vsub.s32 0, %v2046
        %v2048 = vrot.slane %v2019, %v2047
        %v2049 = vmul.f32 %v2043, %v2048
        %v2050 = vmul.f32 %v2044, %v2048
        %v2051 = vlaneseq
        %v2052 = vshrl.u32 %v2051, 7
        %v2053 = vsub.s32 0, %v2052
        %v2054 = vrot.slane %v2020, %v2053
        %2056 = vrot.lane.b32.xlu0 %v2054, 2
        %v2057 = vpop.permute.xlu0 %2056
        %v2059 = vmul.f32 %v2043, %v2057
        %v2060 = vmul.f32 %v2044, %v2057
        %2062 = vrot.lane.b32.xlu0 %v2048, 8
        %v2063 = vpop.permute.xlu0 %2062
        %v2065 = vmul.f32 %v2043, %v2063
        %v2066 = vmul.f32 %v2044, %v2063
        %2067 = vrot.lane.b32.xlu0 %v2054, 10
        %v2068 = vpop.permute.xlu0 %2067
        %v2070 = vmul.f32 %v2043, %v2068
        %v2071 = vmul.f32 %v2044, %v2068
        %2072 = vrot.lane.b32.xlu0 %v2048, 16
        %v2073 = vpop.permute.xlu0 %2072
        %v2075 = vmul.f32 %v2043, %v2073
        %v2076 = vmul.f32 %v2044, %v2073
        %2077 = vrot.lane.b32.xlu0 %v2054, 18
        %v2078 = vpop.permute.xlu0 %2077
        %v2080 = vmul.f32 %v2043, %v2078
        %v2081 = vmul.f32 %v2044, %v2078
        %2084 = vrot.lane.b32.xlu0 %v2043, 127
        %v2085 = vpop.permute.xlu0 %2084
        %2086 = vrot.lane.b32.xlu0 %v2044, 127
        %v2087 = vpop.permute.xlu0 %2086
        %2092 = vrot.lane.b32.xlu0 %v2059, 126
        %v2093 = vpop.permute.xlu0 %2092
        %2094 = vrot.lane.b32.xlu0 %v2060, 126
        %v2095 = vpop.permute.xlu0 %2094
        %2100 = vrot.lane.b32.xlu0 %v2065, 120
        %v2101 = vpop.permute.xlu0 %2100
        %2102 = vrot.lane.b32.xlu0 %v2066, 120
        %v2103 = vpop.permute.xlu0 %2102
        %2106 = vrot.lane.b32.xlu0 %v2043, 119
        %v2107 = vpop.permute.xlu0 %2106
        %2108 = vrot.lane.b32.xlu0 %v2044, 119
        %v2109 = vpop.permute.xlu0 %2108
        %2114 = vrot.lane.b32.xlu0 %v2070, 118
        %v2115 = vpop.permute.xlu0 %2114
        %2116 = vrot.lane.b32.xlu0 %v2071, 118
        %v2117 = vpop.permute.xlu0 %2116
        %2122 = vrot.lane.b32.xlu0 %v2075, 112
        %v2123 = vpop.permute.xlu0 %2122
        %2124 = vrot.lane.b32.xlu0 %v2076, 112
        %v2125 = vpop.permute.xlu0 %2124
        %2128 = vrot.lane.b32.xlu0 %v2043, 111
        %v2129 = vpop.permute.xlu0 %2128
        %2130 = vrot.lane.b32.xlu0 %v2044, 111
        %v2131 = vpop.permute.xlu0 %2130
        %2136 = vrot.lane.b32.xlu0 %v2080, 110
        %v2137 = vpop.permute.xlu0 %2136
        %2138 = vrot.lane.b32.xlu0 %v2081, 110
        %v2139 = vpop.permute.xlu0 %2138
        %v2143 = vsel %vm1158, %v2014, 0
        %v2146 = vsel %vm1158, %v2016, 0
        %2148 = vmatprep.subr.mxu0 0.0
        %2149 = vmatpush1.msra.mxu0 %v2131
        %2150 = vmatprep.subr.mxu0 0.0
        %2151 = vmatpush1.msra.mxu0 %v2129
        %2152 = vmatprep.subr.mxu0 0.0
        %2153 = vmatpush1.msra.mxu0 %v2125
        %2154 = vmatprep.subr.mxu0 0.0
        %2155 = vmatpush1.msra.mxu0 %v2123
        %2156 = vmatprep.subr.mxu0 0.0
        %2157 = vmatpush1.msra.mxu0 %v2117
        %2158 = vmatprep.subr.mxu0 0.0
        %2159 = vmatpush1.msra.mxu0 %v2115
        %2160 = vmatprep.subr.mxu0 0.0
        %2161 = vmatpush1.msra.mxu0 %v2109
        %2162 = vmatprep.subr.mxu0 0.0
        %2163 = vmatpush1.msra.mxu0 %v2107
        %2164 = vmatprep.subr.mxu0 0.0
        %2165 = vmatpush1.msra.mxu0 %v2103
        %2166 = vmatprep.subr.mxu0 0.0
        %2167 = vmatpush1.msra.mxu0 %v2101
        %2168 = vmatprep.subr.mxu0 0.0
        %2169 = vmatpush1.msra.mxu0 %v2095
        %2170 = vmatprep.subr.mxu0 0.0
        %2171 = vmatpush1.msra.mxu0 %v2093
        %2172 = vmatprep.subr.mxu0 0.0
        %2173 = vmatpush1.msra.mxu0 %v2087
        %2174 = vmatprep.subr.mxu0 0.0
        %2175 = vmatpush1.msra.mxu0 %v2085
        %2176 = vmatprep.subr.mxu0 0.0
        %2177 = vmatpush1.msra.mxu0 %v2050
        %2178 = vmatprep.subr.mxu0 0.0
        %2179 = vmatpush1.msra.mxu0 %v2049
        %2180 = vmatprep.subr.mxu0 0.0
        %2181 = vmatpush2.msra.mxu0 0.0
        %2182 = vmatprep.subr.mxu0 0.0
        %2183 = vmatpush2.msra.mxu0 0.0
        %2184 = vmatprep.subr.mxu0 0.0
        %2185 = vmatpush2.msra.mxu0 0.0
        %2186 = vmatprep.subr.mxu0 0.0
        %2187 = vmatpush2.msra.mxu0 0.0
        %2188 = vmatprep.subr.mxu0 0.0
        %2189 = vmatpush2.msra.mxu0 0.0
        %2190 = vmatprep.subr.mxu0 0.0
        %2191 = vmatpush2.msra.mxu0 0.0
        %2192 = vmatprep.subr.mxu0 0.0
        %2193 = vmatpush2.msra.mxu0 0.0
        %2194 = vmatprep.subr.mxu0 0.0
        %2195 = vmatpush2.msra.mxu0 0.0
        %2196 = vmatprep.subr.mxu0 0.0
        %2197 = vmatpush2.msra.mxu0 0.0
        %2198 = vmatprep.subr.mxu0 0.0
        %2199 = vmatpush2.msra.mxu0 0.0
        %2200 = vmatprep.subr.mxu0 0.0
        %2201 = vmatpush2.msra.mxu0 0.0
        %2202 = vmatprep.subr.mxu0 0.0
        %2203 = vmatpush2.msra.mxu0 0.0
        %2204 = vmatprep.subr.mxu0 0.0
        %2205 = vmatpush2.msra.mxu0 0.0
        %2206 = vmatprep.subr.mxu0 0.0
        %2207 = vmatpush2.msra.mxu0 0.0
        %2208 = vmatprep.subr.mxu0 0.0
        %2209 = vmatpush2.msra.mxu0 %v2139
        %2210 = vmatprep.subr.mxu0 0.0
        %2211 = vmatpush2.msra.mxu0 %v2137
        %2212 = vmatprep.mubr.f32.mxu0 %v2143
        %2213 = vmatmul.mubr.f32.gmra.mxu0 %v2013
        %v2214 = vpop.f32.mrf.mxu0
        %v2215 = vadd.f32 0.0, %v2214
        %v2216 = vpop.f32.mrf.mxu0
        %2217 = vmatprep.mubr.f32.mxu0 %v2146
        %2218 = vmatmul.mubr.f32.gmra.mxu0 %v2015
        %v2219 = vpop.f32.mrf.mxu0
        %v2220 = vadd.f32 0.0, %v2219
        %v2221 = vpop.f32.mrf.mxu0
        %2222 = vdwg.mxu0
        %v2223 = vadd.f32 %v2005, %v2215
        %v2224 = vadd.f32 %v2010, %v2220
        %2226 = vset.pattern.permute.xlu0 0
        %2227 = vperm.xlu0 %2226, %v2017
        %v2228 = vpop.permute.xlu0 %2227
        %2231 = vset.pattern.permute.xlu0 0
        %2232 = vperm.xlu0 %2231, %v2018
        %v2233 = vpop.permute.xlu0 %2232
        %v2235 = vadd.f32 %v2223, %v2228
        %v2236 = vadd.f32 %v2224, %v2233
        %2237 = vst.msk [vmem:[%s975] sm:$0xff] %vm1751, %v2235
        %2238 = vst.msk [vmem:[%s975 + $0x8] sm:$0xff] %vm1751, %v2236
        %v2239 = vld [vmem:[%s23] sm:$0xff]
        %v2240 = vld [vmem:[%s23 + $0x8] sm:$0xff]
        %v2241 = vld [vmem:[%s23 + $0x10] sm:$0xff]
        %v2242 = vld [vmem:[%s23 + $0x18] sm:$0xff]
        %v2243 = vld [vmem:[%s25] sm:$0xff]
        %v2244 = vld [vmem:[%s25 + $0x8] sm:$0xff]
        %v2245 = vld [vmem:[%s45] sm:$0x1]
        %v2246 = vld [vmem:[%s45 + $0x1] sm:$0x1]
        %vm2247 = vcmp.gt.f32.partialorder %v2235, 0.0
        %vm2248 = vcmp.gt.f32.partialorder %v2236, 0.0
        %v2249 = vmul.f32 %v2235, 1.442695
        %v2250 = vpow.pop %v2249
        %v2251 = vmul.f32 %v2236, 1.442695
        %v2252 = vpow.pop %v2251
        %v2253 = vsub.f32 %v2250, 1.0
        %v2254 = vsub.f32 %v2252, 1.0
        %v2255 = vsel %vm2247, %v2235, %v2253
        %v2256 = vsel %vm2248, %v2236, %v2254
        %2259 = vrot.lane.b32.xlu0 %v2255, 9
        %v2260 = vpop.permute.xlu0 %2259
        %2261 = vrot.lane.b32.xlu0 %v2256, 9
        %v2262 = vpop.permute.xlu0 %2261
        %v2265 = vsel %vm2039, 0.0, %v2260
        %v2266 = vsel %vm2039, 0.0, %v2262
        %v2267 = vsel %vm2042, %v2265, 0.0
        %v2268 = vsel %vm2042, %v2266, 0.0
        %v2269 = vlaneseq
        %v2270 = vshrl.u32 %v2269, 7
        %v2271 = vsub.s32 0, %v2270
        %v2272 = vrot.slane %v2245, %v2271
        %v2273 = vmul.f32 %v2267, %v2272
        %v2274 = vmul.f32 %v2268, %v2272
        %v2275 = vlaneseq
        %v2276 = vshrl.u32 %v2275, 7
        %v2277 = vsub.s32 0, %v2276
        %v2278 = vrot.slane %v2246, %v2277
        %2280 = vrot.lane.b32.xlu0 %v2278, 2
        %v2281 = vpop.permute.xlu0 %2280
        %v2283 = vmul.f32 %v2267, %v2281
        %v2284 = vmul.f32 %v2268, %v2281
        %2286 = vrot.lane.b32.xlu0 %v2272, 8
        %v2287 = vpop.permute.xlu0 %2286
        %v2289 = vmul.f32 %v2267, %v2287
        %v2290 = vmul.f32 %v2268, %v2287
        %2291 = vrot.lane.b32.xlu0 %v2278, 10
        %v2292 = vpop.permute.xlu0 %2291
        %v2294 = vmul.f32 %v2267, %v2292
        %v2295 = vmul.f32 %v2268, %v2292
        %2296 = vrot.lane.b32.xlu0 %v2272, 16
        %v2297 = vpop.permute.xlu0 %2296
        %v2299 = vmul.f32 %v2267, %v2297
        %v2300 = vmul.f32 %v2268, %v2297
        %2301 = vrot.lane.b32.xlu0 %v2278, 18
        %v2302 = vpop.permute.xlu0 %2301
        %v2304 = vmul.f32 %v2267, %v2302
        %v2305 = vmul.f32 %v2268, %v2302
        %2308 = vrot.lane.b32.xlu0 %v2267, 127
        %v2309 = vpop.permute.xlu0 %2308
        %2310 = vrot.lane.b32.xlu0 %v2268, 127
        %v2311 = vpop.permute.xlu0 %2310
        %2316 = vrot.lane.b32.xlu0 %v2283, 126
        %v2317 = vpop.permute.xlu0 %2316
        %2318 = vrot.lane.b32.xlu0 %v2284, 126
        %v2319 = vpop.permute.xlu0 %2318
        %2324 = vrot.lane.b32.xlu0 %v2289, 120
        %v2325 = vpop.permute.xlu0 %2324
        %2326 = vrot.lane.b32.xlu0 %v2290, 120
        %v2327 = vpop.permute.xlu0 %2326
        %2330 = vrot.lane.b32.xlu0 %v2267, 119
        %v2331 = vpop.permute.xlu0 %2330
        %2332 = vrot.lane.b32.xlu0 %v2268, 119
        %v2333 = vpop.permute.xlu0 %2332
        %2338 = vrot.lane.b32.xlu0 %v2294, 118
        %v2339 = vpop.permute.xlu0 %2338
        %2340 = vrot.lane.b32.xlu0 %v2295, 118
        %v2341 = vpop.permute.xlu0 %2340
        %2346 = vrot.lane.b32.xlu0 %v2299, 112
        %v2347 = vpop.permute.xlu0 %2346
        %2348 = vrot.lane.b32.xlu0 %v2300, 112
        %v2349 = vpop.permute.xlu0 %2348
        %2352 = vrot.lane.b32.xlu0 %v2267, 111
        %v2353 = vpop.permute.xlu0 %2352
        %2354 = vrot.lane.b32.xlu0 %v2268, 111
        %v2355 = vpop.permute.xlu0 %2354
        %2360 = vrot.lane.b32.xlu0 %v2304, 110
        %v2361 = vpop.permute.xlu0 %2360
        %2362 = vrot.lane.b32.xlu0 %v2305, 110
        %v2363 = vpop.permute.xlu0 %2362
        %v2367 = vsel %vm1158, %v2240, 0
        %v2370 = vsel %vm1158, %v2242, 0
        %2372 = vmatprep.subr.mxu0 0.0
        %2373 = vmatpush1.msra.mxu0 %v2355
        %2374 = vmatprep.subr.mxu0 0.0
        %2375 = vmatpush1.msra.mxu0 %v2353
        %2376 = vmatprep.subr.mxu0 0.0
        %2377 = vmatpush1.msra.mxu0 %v2349
        %2378 = vmatprep.subr.mxu0 0.0
        %2379 = vmatpush1.msra.mxu0 %v2347
        %2380 = vmatprep.subr.mxu0 0.0
        %2381 = vmatpush1.msra.mxu0 %v2341
        %2382 = vmatprep.subr.mxu0 0.0
        %2383 = vmatpush1.msra.mxu0 %v2339
        %2384 = vmatprep.subr.mxu0 0.0
        %2385 = vmatpush1.msra.mxu0 %v2333
        %2386 = vmatprep.subr.mxu0 0.0
        %2387 = vmatpush1.msra.mxu0 %v2331
        %2388 = vmatprep.subr.mxu0 0.0
        %2389 = vmatpush1.msra.mxu0 %v2327
        %2390 = vmatprep.subr.mxu0 0.0
        %2391 = vmatpush1.msra.mxu0 %v2325
        %2392 = vmatprep.subr.mxu0 0.0
        %2393 = vmatpush1.msra.mxu0 %v2319
        %2394 = vmatprep.subr.mxu0 0.0
        %2395 = vmatpush1.msra.mxu0 %v2317
        %2396 = vmatprep.subr.mxu0 0.0
        %2397 = vmatpush1.msra.mxu0 %v2311
        %2398 = vmatprep.subr.mxu0 0.0
        %2399 = vmatpush1.msra.mxu0 %v2309
        %2400 = vmatprep.subr.mxu0 0.0
        %2401 = vmatpush1.msra.mxu0 %v2274
        %2402 = vmatprep.subr.mxu0 0.0
        %2403 = vmatpush1.msra.mxu0 %v2273
        %2404 = vmatprep.subr.mxu0 0.0
        %2405 = vmatpush2.msra.mxu0 0.0
        %2406 = vmatprep.subr.mxu0 0.0
        %2407 = vmatpush2.msra.mxu0 0.0
        %2408 = vmatprep.subr.mxu0 0.0
        %2409 = vmatpush2.msra.mxu0 0.0
        %2410 = vmatprep.subr.mxu0 0.0
        %2411 = vmatpush2.msra.mxu0 0.0
        %2412 = vmatprep.subr.mxu0 0.0
        %2413 = vmatpush2.msra.mxu0 0.0
        %2414 = vmatprep.subr.mxu0 0.0
        %2415 = vmatpush2.msra.mxu0 0.0
        %2416 = vmatprep.subr.mxu0 0.0
        %2417 = vmatpush2.msra.mxu0 0.0
        %2418 = vmatprep.subr.mxu0 0.0
        %2419 = vmatpush2.msra.mxu0 0.0
        %2420 = vmatprep.subr.mxu0 0.0
        %2421 = vmatpush2.msra.mxu0 0.0
        %2422 = vmatprep.subr.mxu0 0.0
        %2423 = vmatpush2.msra.mxu0 0.0
        %2424 = vmatprep.subr.mxu0 0.0
        %2425 = vmatpush2.msra.mxu0 0.0
        %2426 = vmatprep.subr.mxu0 0.0
        %2427 = vmatpush2.msra.mxu0 0.0
        %2428 = vmatprep.subr.mxu0 0.0
        %2429 = vmatpush2.msra.mxu0 0.0
        %2430 = vmatprep.subr.mxu0 0.0
        %2431 = vmatpush2.msra.mxu0 0.0
        %2432 = vmatprep.subr.mxu0 0.0
        %2433 = vmatpush2.msra.mxu0 %v2363
        %2434 = vmatprep.subr.mxu0 0.0
        %2435 = vmatpush2.msra.mxu0 %v2361
        %2436 = vmatprep.mubr.f32.mxu0 %v2367
        %2437 = vmatmul.mubr.f32.gmra.mxu0 %v2239
        %v2438 = vpop.f32.mrf.mxu0
        %v2439 = vadd.f32 0.0, %v2438
        %v2440 = vpop.f32.mrf.mxu0
        %2441 = vmatprep.mubr.f32.mxu0 %v2370
        %2442 = vmatmul.mubr.f32.gmra.mxu0 %v2241
        %v2443 = vpop.f32.mrf.mxu0
        %v2444 = vadd.f32 0.0, %v2443
        %v2445 = vpop.f32.mrf.mxu0
        %2446 = vdwg.mxu0
        %v2447 = vadd.f32 %v2235, %v2439
        %v2448 = vadd.f32 %v2236, %v2444
        %2450 = vset.pattern.permute.xlu0 0
        %2451 = vperm.xlu0 %2450, %v2243
        %v2452 = vpop.permute.xlu0 %2451
        %2455 = vset.pattern.permute.xlu0 0
        %2456 = vperm.xlu0 %2455, %v2244
        %v2457 = vpop.permute.xlu0 %2456
        %v2459 = vadd.f32 %v2447, %v2452
        %v2460 = vadd.f32 %v2448, %v2457
        %2461 = vst.msk [vmem:[%s982] sm:$0xff] %vm1751, %v2459
        %2462 = vst.msk [vmem:[%s982 + $0x8] sm:$0xff] %vm1751, %v2460
        %v2463 = vld [vmem:[%s27] sm:$0xff]
        %v2464 = vld [vmem:[%s27 + $0x8] sm:$0xff]
        %v2465 = vld [vmem:[%s27 + $0x10] sm:$0xff]
        %v2466 = vld [vmem:[%s27 + $0x18] sm:$0xff]
        %v2467 = vld [vmem:[%s29] sm:$0xff]
        %v2468 = vld [vmem:[%s29 + $0x8] sm:$0xff]
        %v2469 = vld [vmem:[%s47] sm:$0x1]
        %v2470 = vld [vmem:[%s47 + $0x1] sm:$0x1]
        %2473 = vrot.lane.b32.xlu0 %v2459, 9
        %v2474 = vpop.permute.xlu0 %2473
        %2475 = vrot.lane.b32.xlu0 %v2460, 9
        %v2476 = vpop.permute.xlu0 %2475
        %v2479 = vsel %vm2039, 0.0, %v2474
        %v2480 = vsel %vm2039, 0.0, %v2476
        %v2481 = vsel %vm2042, %v2479, 0.0
        %v2482 = vsel %vm2042, %v2480, 0.0
        %2485 = vrot.lane.b32.xlu0 %v2481, 120
        %v2486 = vpop.permute.xlu0 %2485
        %2487 = vrot.lane.b32.xlu0 %v2482, 120
        %v2488 = vpop.permute.xlu0 %2487
        %2491 = vrot.lane.b32.xlu0 %v2481, 112
        %v2492 = vpop.permute.xlu0 %2491
        %2493 = vrot.lane.b32.xlu0 %v2482, 112
        %v2494 = vpop.permute.xlu0 %2493
        %2497 = vrot.lane.b32.xlu0 %v2481, 104
        %v2498 = vpop.permute.xlu0 %2497
        %2499 = vrot.lane.b32.xlu0 %v2482, 104
        %v2500 = vpop.permute.xlu0 %2499
        %v2503 = vsel %vm1718, 0.0, %v2481
        %v2504 = vsel %vm1718, 0.0, %v2482
        %v2505 = vsel %vm2039, %v2503, %v2486
        %v2506 = vsel %vm2039, %v2504, %v2488
        %v2507 = vsel %vm1113, %v2505, %v2492
        %v2508 = vsel %vm1113, %v2506, %v2494
        %vm2509 = vcmask 203776
        %v2510 = vsel %vm2509, %v2507, %v2498
        %v2511 = vsel %vm2509, %v2508, %v2500
        %v2512 = vsel %vm1721, %v2510, 0.0
        %v2513 = vsel %vm1721, %v2511, 0.0
        %v2514 = vlaneseq
        %v2515 = vshrl.u32 %v2514, 7
        %v2516 = vsub.s32 0, %v2515
        %v2517 = vrot.slane %v2469, %v2516
        %v2518 = vmul.f32 %v2512, %v2517
        %v2519 = vmul.f32 %v2513, %v2517
        %v2520 = vlaneseq
        %v2521 = vshrl.u32 %v2520, 7
        %v2522 = vsub.s32 0, %v2521
        %v2523 = vrot.slane %v2470, %v2522
        %2525 = vrot.lane.b32.xlu0 %v2523, 2
        %v2526 = vpop.permute.xlu0 %2525
        %v2528 = vmul.f32 %v2512, %v2526
        %v2529 = vmul.f32 %v2513, %v2526
        %2530 = vrot.lane.b32.xlu0 %v2481, 96
        %v2531 = vpop.permute.xlu0 %2530
        %2532 = vrot.lane.b32.xlu0 %v2482, 96
        %v2533 = vpop.permute.xlu0 %2532
        %v2536 = vsel %vm1718, 0.0, %v2486
        %v2537 = vsel %vm1718, 0.0, %v2488
        %v2538 = vsel %vm2039, %v2536, %v2492
        %v2539 = vsel %vm2039, %v2537, %v2494
        %v2540 = vsel %vm1113, %v2538, %v2498
        %v2541 = vsel %vm1113, %v2539, %v2500
        %v2542 = vsel %vm2509, %v2540, %v2531
        %v2543 = vsel %vm2509, %v2541, %v2533
        %v2544 = vsel %vm1721, %v2542, 0.0
        %v2545 = vsel %vm1721, %v2543, 0.0
        %v2546 = vmul.f32 %v2544, %v2517
        %v2547 = vmul.f32 %v2545, %v2517
        %v2548 = vmul.f32 %v2544, %v2526
        %v2549 = vmul.f32 %v2545, %v2526
        %2550 = vrot.lane.b32.xlu0 %v2481, 88
        %v2551 = vpop.permute.xlu0 %2550
        %2552 = vrot.lane.b32.xlu0 %v2482, 88
        %v2553 = vpop.permute.xlu0 %2552
        %v2556 = vsel %vm1718, 0.0, %v2492
        %v2557 = vsel %vm1718, 0.0, %v2494
        %v2558 = vsel %vm2039, %v2556, %v2498
        %v2559 = vsel %vm2039, %v2557, %v2500
        %v2560 = vsel %vm1113, %v2558, %v2531
        %v2561 = vsel %vm1113, %v2559, %v2533
        %v2562 = vsel %vm2509, %v2560, %v2551
        %v2563 = vsel %vm2509, %v2561, %v2553
        %v2564 = vsel %vm1721, %v2562, 0.0
        %v2565 = vsel %vm1721, %v2563, 0.0
        %v2566 = vmul.f32 %v2564, %v2517
        %v2567 = vmul.f32 %v2565, %v2517
        %v2568 = vmul.f32 %v2564, %v2526
        %v2569 = vmul.f32 %v2565, %v2526
        %2572 = vrot.lane.b32.xlu0 %v2512, 127
        %v2573 = vpop.permute.xlu0 %2572
        %2574 = vrot.lane.b32.xlu0 %v2513, 127
        %v2575 = vpop.permute.xlu0 %2574
        %2580 = vrot.lane.b32.xlu0 %v2528, 126
        %v2581 = vpop.permute.xlu0 %2580
        %2582 = vrot.lane.b32.xlu0 %v2529, 126
        %v2583 = vpop.permute.xlu0 %2582
        %2588 = vrot.lane.b32.xlu0 %v2544, 127
        %v2589 = vpop.permute.xlu0 %2588
        %2590 = vrot.lane.b32.xlu0 %v2545, 127
        %v2591 = vpop.permute.xlu0 %2590
        %2596 = vrot.lane.b32.xlu0 %v2548, 126
        %v2597 = vpop.permute.xlu0 %2596
        %2598 = vrot.lane.b32.xlu0 %v2549, 126
        %v2599 = vpop.permute.xlu0 %2598
        %2604 = vrot.lane.b32.xlu0 %v2564, 127
        %v2605 = vpop.permute.xlu0 %2604
        %2606 = vrot.lane.b32.xlu0 %v2565, 127
        %v2607 = vpop.permute.xlu0 %2606
        %2612 = vrot.lane.b32.xlu0 %v2568, 126
        %v2613 = vpop.permute.xlu0 %2612
        %2614 = vrot.lane.b32.xlu0 %v2569, 126
        %v2615 = vpop.permute.xlu0 %2614
        %v2619 = vsel %vm1158, %v2464, 0
        %v2622 = vsel %vm1158, %v2466, 0
        %2624 = vmatprep.subr.mxu0 0.0
        %2625 = vmatpush1.msra.mxu0 %v2607
        %2626 = vmatprep.subr.mxu0 0.0
        %2627 = vmatpush1.msra.mxu0 %v2605
        %2628 = vmatprep.subr.mxu0 0.0
        %2629 = vmatpush1.msra.mxu0 %v2567
        %2630 = vmatprep.subr.mxu0 0.0
        %2631 = vmatpush1.msra.mxu0 %v2566
        %2632 = vmatprep.subr.mxu0 0.0
        %2633 = vmatpush1.msra.mxu0 %v2599
        %2634 = vmatprep.subr.mxu0 0.0
        %2635 = vmatpush1.msra.mxu0 %v2597
        %2636 = vmatprep.subr.mxu0 0.0
        %2637 = vmatpush1.msra.mxu0 %v2591
        %2638 = vmatprep.subr.mxu0 0.0
        %2639 = vmatpush1.msra.mxu0 %v2589
        %2640 = vmatprep.subr.mxu0 0.0
        %2641 = vmatpush1.msra.mxu0 %v2547
        %2642 = vmatprep.subr.mxu0 0.0
        %2643 = vmatpush1.msra.mxu0 %v2546
        %2644 = vmatprep.subr.mxu0 0.0
        %2645 = vmatpush1.msra.mxu0 %v2583
        %2646 = vmatprep.subr.mxu0 0.0
        %2647 = vmatpush1.msra.mxu0 %v2581
        %2648 = vmatprep.subr.mxu0 0.0
        %2649 = vmatpush1.msra.mxu0 %v2575
        %2650 = vmatprep.subr.mxu0 0.0
        %2651 = vmatpush1.msra.mxu0 %v2573
        %2652 = vmatprep.subr.mxu0 0.0
        %2653 = vmatpush1.msra.mxu0 %v2519
        %2654 = vmatprep.subr.mxu0 0.0
        %2655 = vmatpush1.msra.mxu0 %v2518
        %2656 = vmatprep.subr.mxu0 0.0
        %2657 = vmatpush2.msra.mxu0 0.0
        %2658 = vmatprep.subr.mxu0 0.0
        %2659 = vmatpush2.msra.mxu0 0.0
        %2660 = vmatprep.subr.mxu0 0.0
        %2661 = vmatpush2.msra.mxu0 0.0
        %2662 = vmatprep.subr.mxu0 0.0
        %2663 = vmatpush2.msra.mxu0 0.0
        %2664 = vmatprep.subr.mxu0 0.0
        %2665 = vmatpush2.msra.mxu0 0.0
        %2666 = vmatprep.subr.mxu0 0.0
        %2667 = vmatpush2.msra.mxu0 0.0
        %2668 = vmatprep.subr.mxu0 0.0
        %2669 = vmatpush2.msra.mxu0 0.0
        %2670 = vmatprep.subr.mxu0 0.0
        %2671 = vmatpush2.msra.mxu0 0.0
        %2672 = vmatprep.subr.mxu0 0.0
        %2673 = vmatpush2.msra.mxu0 0.0
        %2674 = vmatprep.subr.mxu0 0.0
        %2675 = vmatpush2.msra.mxu0 0.0
        %2676 = vmatprep.subr.mxu0 0.0
        %2677 = vmatpush2.msra.mxu0 0.0
        %2678 = vmatprep.subr.mxu0 0.0
        %2679 = vmatpush2.msra.mxu0 0.0
        %2680 = vmatprep.subr.mxu0 0.0
        %2681 = vmatpush2.msra.mxu0 0.0
        %2682 = vmatprep.subr.mxu0 0.0
        %2683 = vmatpush2.msra.mxu0 0.0
        %2684 = vmatprep.subr.mxu0 0.0
        %2685 = vmatpush2.msra.mxu0 %v2615
        %2686 = vmatprep.subr.mxu0 0.0
        %2687 = vmatpush2.msra.mxu0 %v2613
        %2688 = vmatprep.mubr.f32.mxu0 %v2619
        %2689 = vmatmul.mubr.f32.gmra.mxu0 %v2463
        %v2690 = vpop.f32.mrf.mxu0
        %v2691 = vadd.f32 0.0, %v2690
        %v2692 = vpop.f32.mrf.mxu0
        %2693 = vmatprep.mubr.f32.mxu0 %v2622
        %2694 = vmatmul.mubr.f32.gmra.mxu0 %v2465
        %v2695 = vpop.f32.mrf.mxu0
        %v2696 = vadd.f32 0.0, %v2695
        %v2697 = vpop.f32.mrf.mxu0
        %2698 = vdwg.mxu0
        %v2699 = vld [vmem:[%s49] sm:$0xff]
        %v2700 = vld [vmem:[%s49 + $0x8] sm:$0xff]
        %v2701 = vld [vmem:[%s49 + $0x10] sm:$0xff]
        %v2702 = vld [vmem:[%s49 + $0x18] sm:$0xff]
        %2704 = vset.pattern.permute.xlu0 0
        %2705 = vperm.xlu0 %2704, %v2467
        %v2706 = vpop.permute.xlu0 %2705
        %2709 = vset.pattern.permute.xlu0 0
        %2710 = vperm.xlu0 %2709, %v2468
        %v2711 = vpop.permute.xlu0 %2710
        %v2714 = vsel %vm1182, %v2691, 0
        %v2717 = vsel %vm1182, %v2696, 0
        %2719 = vmatprep.subr.mxu0 0.0
        %2720 = vmatpush1.msra.mxu0 0.0
        %2721 = vmatprep.subr.mxu0 0.0
        %2722 = vmatpush1.msra.mxu0 0.0
        %2723 = vmatprep.subr.mxu0 0.0
        %2724 = vmatpush1.msra.mxu0 0.0
        %2725 = vmatprep.subr.mxu0 0.0
        %2726 = vmatpush1.msra.mxu0 0.0
        %2727 = vmatprep.subr.mxu0 0.0
        %2728 = vmatpush1.msra.mxu0 0.0
        %2729 = vmatprep.subr.mxu0 0.0
        %2730 = vmatpush1.msra.mxu0 0.0
        %2731 = vmatprep.subr.mxu0 0.0
        %2732 = vmatpush1.msra.mxu0 0.0
        %2733 = vmatprep.subr.mxu0 0.0
        %2734 = vmatpush1.msra.mxu0 0.0
        %2735 = vmatprep.subr.mxu0 0.0
        %2736 = vmatpush1.msra.mxu0 0.0
        %2737 = vmatprep.subr.mxu0 0.0
        %2738 = vmatpush1.msra.mxu0 0.0
        %2739 = vmatprep.subr.mxu0 0.0
        %2740 = vmatpush1.msra.mxu0 0.0
        %2741 = vmatprep.subr.mxu0 0.0
        %2742 = vmatpush1.msra.mxu0 0.0
        %2743 = vmatprep.subr.mxu0 0.0
        %2744 = vmatpush1.msra.mxu0 %v2702
        %2745 = vmatprep.subr.mxu0 0.0
        %2746 = vmatpush1.msra.mxu0 %v2701
        %2747 = vmatprep.subr.mxu0 0.0
        %2748 = vmatpush1.msra.mxu0 %v2700
        %2749 = vmatprep.subr.mxu0 0.0
        %2750 = vmatpush1.msra.mxu0 %v2699
        %2751 = vmatprep.subr.mxu0 0.0
        %2752 = vmatpush2.msra.mxu0 0.0
        %2753 = vmatprep.subr.mxu0 0.0
        %2754 = vmatpush2.msra.mxu0 0.0
        %2755 = vmatprep.subr.mxu0 0.0
        %2756 = vmatpush2.msra.mxu0 0.0
        %2757 = vmatprep.subr.mxu0 0.0
        %2758 = vmatpush2.msra.mxu0 0.0
        %2759 = vmatprep.subr.mxu0 0.0
        %2760 = vmatpush2.msra.mxu0 0.0
        %2761 = vmatprep.subr.mxu0 0.0
        %2762 = vmatpush2.msra.mxu0 0.0
        %2763 = vmatprep.subr.mxu0 0.0
        %2764 = vmatpush2.msra.mxu0 0.0
        %2765 = vmatprep.subr.mxu0 0.0
        %2766 = vmatpush2.msra.mxu0 0.0
        %2767 = vmatprep.subr.mxu0 0.0
        %2768 = vmatpush2.msra.mxu0 0.0
        %2769 = vmatprep.subr.mxu0 0.0
        %2770 = vmatpush2.msra.mxu0 0.0
        %2771 = vmatprep.subr.mxu0 0.0
        %2772 = vmatpush2.msra.mxu0 0.0
        %2773 = vmatprep.subr.mxu0 0.0
        %2774 = vmatpush2.msra.mxu0 0.0
        %2775 = vmatprep.subr.mxu0 0.0
        %2776 = vmatpush2.msra.mxu0 0.0
        %2777 = vmatprep.subr.mxu0 0.0
        %2778 = vmatpush2.msra.mxu0 0.0
        %2779 = vmatprep.subr.mxu0 0.0
        %2780 = vmatpush2.msra.mxu0 0.0
        %2781 = vmatprep.subr.mxu0 0.0
        %2782 = vmatpush2.msra.mxu0 0.0
        %2783 = vmatprep.mubr.f32.mxu0 0.0
        %2784 = vmatmul.mubr.f32.gmra.mxu0 %v2714
        %v2785 = vpop.f32.mrf.mxu0
        %v2786 = vadd.f32 %v2706, %v2785
        %v2787 = vpop.f32.mrf.mxu0
        %2788 = vmatprep.mubr.f32.mxu0 0.0
        %2789 = vmatmul.mubr.f32.gmra.mxu0 %v2717
        %v2790 = vpop.f32.mrf.mxu0
        %v2791 = vadd.f32 %v2711, %v2790
        %v2792 = vpop.f32.mrf.mxu0
        %2793 = vdwg.mxu0
        %v2794 = vld [vmem:[%s31] sm:$0xff]
        %v2795 = vld [vmem:[%s31 + $0x8] sm:$0xff]
        %v2796 = vld [vmem:[%s31 + $0x10] sm:$0xff]
        %v2797 = vld [vmem:[%s31 + $0x18] sm:$0xff]
        %v2798 = vld [vmem:[%s33] sm:$0xff]
        %v2799 = vld [vmem:[%s33 + $0x8] sm:$0xff]
        %v2800 = vld [vmem:[%s51] sm:$0x1]
        %v2801 = vld [vmem:[%s51 + $0x1] sm:$0x1]
        %vm2802 = vcmp.gt.f32.partialorder %v2786, 0.0
        %vm2803 = vcmp.gt.f32.partialorder %v2791, 0.0
        %v2804 = vmul.f32 %v2786, 1.442695
        %v2805 = vpow.pop %v2804
        %v2806 = vmul.f32 %v2791, 1.442695
        %v2807 = vpow.pop %v2806
        %v2808 = vsub.f32 %v2805, 1.0
        %v2809 = vsub.f32 %v2807, 1.0
        %v2810 = vsel %vm2802, %v2786, %v2808
        %v2811 = vsel %vm2803, %v2791, %v2809
        %2814 = vrot.lane.b32.xlu0 %v2810, 5
        %v2815 = vpop.permute.xlu0 %2814
        %2816 = vrot.lane.b32.xlu0 %v2811, 5
        %v2817 = vpop.permute.xlu0 %2816
        %vm2820 = vcmask 39936
        %v2821 = vsel %vm2820, 0.0, %v2815
        %v2822 = vsel %vm2820, 0.0, %v2817
        %vm2823 = vcmask 171008
        %v2824 = vsel %vm2823, %v2821, 0.0
        %v2825 = vsel %vm2823, %v2822, 0.0
        %v2826 = vlaneseq
        %v2827 = vshrl.u32 %v2826, 7
        %v2828 = vsub.s32 0, %v2827
        %v2829 = vrot.slane %v2800, %v2828
        %v2830 = vmul.f32 %v2824, %v2829
        %v2831 = vmul.f32 %v2825, %v2829
        %v2832 = vlaneseq
        %v2833 = vshrl.u32 %v2832, 7
        %v2834 = vsub.s32 0, %v2833
        %v2835 = vrot.slane %v2801, %v2834
        %2837 = vrot.lane.b32.xlu0 %v2835, 2
        %v2838 = vpop.permute.xlu0 %2837
        %v2840 = vmul.f32 %v2824, %v2838
        %v2841 = vmul.f32 %v2825, %v2838
        %2843 = vrot.lane.b32.xlu0 %v2829, 4
        %v2844 = vpop.permute.xlu0 %2843
        %v2846 = vmul.f32 %v2824, %v2844
        %v2847 = vmul.f32 %v2825, %v2844
        %2848 = vrot.lane.b32.xlu0 %v2835, 6
        %v2849 = vpop.permute.xlu0 %2848
        %v2851 = vmul.f32 %v2824, %v2849
        %v2852 = vmul.f32 %v2825, %v2849
        %2853 = vrot.lane.b32.xlu0 %v2829, 8
        %v2854 = vpop.permute.xlu0 %2853
        %v2856 = vmul.f32 %v2824, %v2854
        %v2857 = vmul.f32 %v2825, %v2854
        %2858 = vrot.lane.b32.xlu0 %v2835, 10
        %v2859 = vpop.permute.xlu0 %2858
        %v2861 = vmul.f32 %v2824, %v2859
        %v2862 = vmul.f32 %v2825, %v2859
        %2865 = vrot.lane.b32.xlu0 %v2824, 127
        %v2866 = vpop.permute.xlu0 %2865
        %2867 = vrot.lane.b32.xlu0 %v2825, 127
        %v2868 = vpop.permute.xlu0 %2867
        %2873 = vrot.lane.b32.xlu0 %v2840, 126
        %v2874 = vpop.permute.xlu0 %2873
        %2875 = vrot.lane.b32.xlu0 %v2841, 126
        %v2876 = vpop.permute.xlu0 %2875
        %2881 = vrot.lane.b32.xlu0 %v2846, 124
        %v2882 = vpop.permute.xlu0 %2881
        %2883 = vrot.lane.b32.xlu0 %v2847, 124
        %v2884 = vpop.permute.xlu0 %2883
        %2887 = vrot.lane.b32.xlu0 %v2824, 123
        %v2888 = vpop.permute.xlu0 %2887
        %2889 = vrot.lane.b32.xlu0 %v2825, 123
        %v2890 = vpop.permute.xlu0 %2889
        %2895 = vrot.lane.b32.xlu0 %v2851, 122
        %v2896 = vpop.permute.xlu0 %2895
        %2897 = vrot.lane.b32.xlu0 %v2852, 122
        %v2898 = vpop.permute.xlu0 %2897
        %2903 = vrot.lane.b32.xlu0 %v2856, 120
        %v2904 = vpop.permute.xlu0 %2903
        %2905 = vrot.lane.b32.xlu0 %v2857, 120
        %v2906 = vpop.permute.xlu0 %2905
        %2909 = vrot.lane.b32.xlu0 %v2824, 119
        %v2910 = vpop.permute.xlu0 %2909
        %2911 = vrot.lane.b32.xlu0 %v2825, 119
        %v2912 = vpop.permute.xlu0 %2911
        %2917 = vrot.lane.b32.xlu0 %v2861, 118
        %v2918 = vpop.permute.xlu0 %2917
        %2919 = vrot.lane.b32.xlu0 %v2862, 118
        %v2920 = vpop.permute.xlu0 %2919
        %v2924 = vsel %vm1158, %v2795, 0
        %v2927 = vsel %vm1158, %v2797, 0
        %2929 = vmatprep.subr.mxu0 0.0
        %2930 = vmatpush1.msra.mxu0 %v2912
        %2931 = vmatprep.subr.mxu0 0.0
        %2932 = vmatpush1.msra.mxu0 %v2910
        %2933 = vmatprep.subr.mxu0 0.0
        %2934 = vmatpush1.msra.mxu0 %v2906
        %2935 = vmatprep.subr.mxu0 0.0
        %2936 = vmatpush1.msra.mxu0 %v2904
        %2937 = vmatprep.subr.mxu0 0.0
        %2938 = vmatpush1.msra.mxu0 %v2898
        %2939 = vmatprep.subr.mxu0 0.0
        %2940 = vmatpush1.msra.mxu0 %v2896
        %2941 = vmatprep.subr.mxu0 0.0
        %2942 = vmatpush1.msra.mxu0 %v2890
        %2943 = vmatprep.subr.mxu0 0.0
        %2944 = vmatpush1.msra.mxu0 %v2888
        %2945 = vmatprep.subr.mxu0 0.0
        %2946 = vmatpush1.msra.mxu0 %v2884
        %2947 = vmatprep.subr.mxu0 0.0
        %2948 = vmatpush1.msra.mxu0 %v2882
        %2949 = vmatprep.subr.mxu0 0.0
        %2950 = vmatpush1.msra.mxu0 %v2876
        %2951 = vmatprep.subr.mxu0 0.0
        %2952 = vmatpush1.msra.mxu0 %v2874
        %2953 = vmatprep.subr.mxu0 0.0
        %2954 = vmatpush1.msra.mxu0 %v2868
        %2955 = vmatprep.subr.mxu0 0.0
        %2956 = vmatpush1.msra.mxu0 %v2866
        %2957 = vmatprep.subr.mxu0 0.0
        %2958 = vmatpush1.msra.mxu0 %v2831
        %2959 = vmatprep.subr.mxu0 0.0
        %2960 = vmatpush1.msra.mxu0 %v2830
        %2961 = vmatprep.subr.mxu0 0.0
        %2962 = vmatpush2.msra.mxu0 0.0
        %2963 = vmatprep.subr.mxu0 0.0
        %2964 = vmatpush2.msra.mxu0 0.0
        %2965 = vmatprep.subr.mxu0 0.0
        %2966 = vmatpush2.msra.mxu0 0.0
        %2967 = vmatprep.subr.mxu0 0.0
        %2968 = vmatpush2.msra.mxu0 0.0
        %2969 = vmatprep.subr.mxu0 0.0
        %2970 = vmatpush2.msra.mxu0 0.0
        %2971 = vmatprep.subr.mxu0 0.0
        %2972 = vmatpush2.msra.mxu0 0.0
        %2973 = vmatprep.subr.mxu0 0.0
        %2974 = vmatpush2.msra.mxu0 0.0
        %2975 = vmatprep.subr.mxu0 0.0
        %2976 = vmatpush2.msra.mxu0 0.0
        %2977 = vmatprep.subr.mxu0 0.0
        %2978 = vmatpush2.msra.mxu0 0.0
        %2979 = vmatprep.subr.mxu0 0.0
        %2980 = vmatpush2.msra.mxu0 0.0
        %2981 = vmatprep.subr.mxu0 0.0
        %2982 = vmatpush2.msra.mxu0 0.0
        %2983 = vmatprep.subr.mxu0 0.0
        %2984 = vmatpush2.msra.mxu0 0.0
        %2985 = vmatprep.subr.mxu0 0.0
        %2986 = vmatpush2.msra.mxu0 0.0
        %2987 = vmatprep.subr.mxu0 0.0
        %2988 = vmatpush2.msra.mxu0 0.0
        %2989 = vmatprep.subr.mxu0 0.0
        %2990 = vmatpush2.msra.mxu0 %v2920
        %2991 = vmatprep.subr.mxu0 0.0
        %2992 = vmatpush2.msra.mxu0 %v2918
        %2993 = vmatprep.mubr.f32.mxu0 %v2924
        %2994 = vmatmul.mubr.f32.gmra.mxu0 %v2794
        %v2995 = vpop.f32.mrf.mxu0
        %v2996 = vadd.f32 0.0, %v2995
        %v2997 = vpop.f32.mrf.mxu0
        %2998 = vmatprep.mubr.f32.mxu0 %v2927
        %2999 = vmatmul.mubr.f32.gmra.mxu0 %v2796
        %v3000 = vpop.f32.mrf.mxu0
        %v3001 = vadd.f32 0.0, %v3000
        %v3002 = vpop.f32.mrf.mxu0
        %3003 = vdwg.mxu0
        %v3004 = vadd.f32 %v2786, %v2996
        %v3005 = vadd.f32 %v2791, %v3001
        %3007 = vset.pattern.permute.xlu0 0
        %3008 = vperm.xlu0 %3007, %v2798
        %v3009 = vpop.permute.xlu0 %3008
        %3012 = vset.pattern.permute.xlu0 0
        %3013 = vperm.xlu0 %3012, %v2799
        %v3014 = vpop.permute.xlu0 %3013
        %v3016 = vadd.f32 %v3004, %v3009
        %v3017 = vadd.f32 %v3005, %v3014
        %3018 = vst.msk [vmem:[%s989] sm:$0xff] %vm1158, %v3016
        %3019 = vst.msk [vmem:[%s989 + $0x8] sm:$0xff] %vm1158, %v3017
        %v3020 = vld [vmem:[%s35] sm:$0xff]
        %v3021 = vld [vmem:[%s35 + $0x8] sm:$0xff]
        %v3022 = vld [vmem:[%s35 + $0x10] sm:$0xff]
        %v3023 = vld [vmem:[%s35 + $0x18] sm:$0xff]
        %v3024 = vld [vmem:[%s37] sm:$0xff]
        %v3025 = vld [vmem:[%s37 + $0x8] sm:$0xff]
        %v3026 = vld [vmem:[%s51] sm:$0x1]
        %v3027 = vld [vmem:[%s51 + $0x1] sm:$0x1]
        %vm3028 = vcmp.gt.f32.partialorder %v3016, 0.0
        %vm3029 = vcmp.gt.f32.partialorder %v3017, 0.0
        %v3030 = vmul.f32 %v3016, 1.442695
        %v3031 = vpow.pop %v3030
        %v3032 = vmul.f32 %v3017, 1.442695
        %v3033 = vpow.pop %v3032
        %v3034 = vsub.f32 %v3031, 1.0
        %v3035 = vsub.f32 %v3033, 1.0
        %v3036 = vsel %vm3028, %v3016, %v3034
        %v3037 = vsel %vm3029, %v3017, %v3035
        %3040 = vrot.lane.b32.xlu0 %v3036, 5
        %v3041 = vpop.permute.xlu0 %3040
        %3042 = vrot.lane.b32.xlu0 %v3037, 5
        %v3043 = vpop.permute.xlu0 %3042
        %v3046 = vsel %vm2820, 0.0, %v3041
        %v3047 = vsel %vm2820, 0.0, %v3043
        %v3048 = vsel %vm2823, %v3046, 0.0
        %v3049 = vsel %vm2823, %v3047, 0.0
        %v3050 = vlaneseq
        %v3051 = vshrl.u32 %v3050, 7
        %v3052 = vsub.s32 0, %v3051
        %v3053 = vrot.slane %v3026, %v3052
        %v3054 = vmul.f32 %v3048, %v3053
        %v3055 = vmul.f32 %v3049, %v3053
        %v3056 = vlaneseq
        %v3057 = vshrl.u32 %v3056, 7
        %v3058 = vsub.s32 0, %v3057
        %v3059 = vrot.slane %v3027, %v3058
        %3061 = vrot.lane.b32.xlu0 %v3059, 2
        %v3062 = vpop.permute.xlu0 %3061
        %v3064 = vmul.f32 %v3048, %v3062
        %v3065 = vmul.f32 %v3049, %v3062
        %3067 = vrot.lane.b32.xlu0 %v3053, 4
        %v3068 = vpop.permute.xlu0 %3067
        %v3070 = vmul.f32 %v3048, %v3068
        %v3071 = vmul.f32 %v3049, %v3068
        %3072 = vrot.lane.b32.xlu0 %v3059, 6
        %v3073 = vpop.permute.xlu0 %3072
        %v3075 = vmul.f32 %v3048, %v3073
        %v3076 = vmul.f32 %v3049, %v3073
        %3077 = vrot.lane.b32.xlu0 %v3053, 8
        %v3078 = vpop.permute.xlu0 %3077
        %v3080 = vmul.f32 %v3048, %v3078
        %v3081 = vmul.f32 %v3049, %v3078
        %3082 = vrot.lane.b32.xlu0 %v3059, 10
        %v3083 = vpop.permute.xlu0 %3082
        %v3085 = vmul.f32 %v3048, %v3083
        %v3086 = vmul.f32 %v3049, %v3083
        %3089 = vrot.lane.b32.xlu0 %v3048, 127
        %v3090 = vpop.permute.xlu0 %3089
        %3091 = vrot.lane.b32.xlu0 %v3049, 127
        %v3092 = vpop.permute.xlu0 %3091
        %3097 = vrot.lane.b32.xlu0 %v3064, 126
        %v3098 = vpop.permute.xlu0 %3097
        %3099 = vrot.lane.b32.xlu0 %v3065, 126
        %v3100 = vpop.permute.xlu0 %3099
        %3105 = vrot.lane.b32.xlu0 %v3070, 124
        %v3106 = vpop.permute.xlu0 %3105
        %3107 = vrot.lane.b32.xlu0 %v3071, 124
        %v3108 = vpop.permute.xlu0 %3107
        %3111 = vrot.lane.b32.xlu0 %v3048, 123
        %v3112 = vpop.permute.xlu0 %3111
        %3113 = vrot.lane.b32.xlu0 %v3049, 123
        %v3114 = vpop.permute.xlu0 %3113
        %3119 = vrot.lane.b32.xlu0 %v3075, 122
        %v3120 = vpop.permute.xlu0 %3119
        %3121 = vrot.lane.b32.xlu0 %v3076, 122
        %v3122 = vpop.permute.xlu0 %3121
        %3127 = vrot.lane.b32.xlu0 %v3080, 120
        %v3128 = vpop.permute.xlu0 %3127
        %3129 = vrot.lane.b32.xlu0 %v3081, 120
        %v3130 = vpop.permute.xlu0 %3129
        %3133 = vrot.lane.b32.xlu0 %v3048, 119
        %v3134 = vpop.permute.xlu0 %3133
        %3135 = vrot.lane.b32.xlu0 %v3049, 119
        %v3136 = vpop.permute.xlu0 %3135
        %3141 = vrot.lane.b32.xlu0 %v3085, 118
        %v3142 = vpop.permute.xlu0 %3141
        %3143 = vrot.lane.b32.xlu0 %v3086, 118
        %v3144 = vpop.permute.xlu0 %3143
        %v3148 = vsel %vm1158, %v3021, 0
        %v3151 = vsel %vm1158, %v3023, 0
        %3153 = vmatprep.subr.mxu0 0.0
        %3154 = vmatpush1.msra.mxu0 %v3136
        %3155 = vmatprep.subr.mxu0 0.0
        %3156 = vmatpush1.msra.mxu0 %v3134
        %3157 = vmatprep.subr.mxu0 0.0
        %3158 = vmatpush1.msra.mxu0 %v3130
        %3159 = vmatprep.subr.mxu0 0.0
        %3160 = vmatpush1.msra.mxu0 %v3128
        %3161 = vmatprep.subr.mxu0 0.0
        %3162 = vmatpush1.msra.mxu0 %v3122
        %3163 = vmatprep.subr.mxu0 0.0
        %3164 = vmatpush1.msra.mxu0 %v3120
        %3165 = vmatprep.subr.mxu0 0.0
        %3166 = vmatpush1.msra.mxu0 %v3114
        %3167 = vmatprep.subr.mxu0 0.0
        %3168 = vmatpush1.msra.mxu0 %v3112
        %3169 = vmatprep.subr.mxu0 0.0
        %3170 = vmatpush1.msra.mxu0 %v3108
        %3171 = vmatprep.subr.mxu0 0.0
        %3172 = vmatpush1.msra.mxu0 %v3106
        %3173 = vmatprep.subr.mxu0 0.0
        %3174 = vmatpush1.msra.mxu0 %v3100
        %3175 = vmatprep.subr.mxu0 0.0
        %3176 = vmatpush1.msra.mxu0 %v3098
        %3177 = vmatprep.subr.mxu0 0.0
        %3178 = vmatpush1.msra.mxu0 %v3092
        %3179 = vmatprep.subr.mxu0 0.0
        %3180 = vmatpush1.msra.mxu0 %v3090
        %3181 = vmatprep.subr.mxu0 0.0
        %3182 = vmatpush1.msra.mxu0 %v3055
        %3183 = vmatprep.subr.mxu0 0.0
        %3184 = vmatpush1.msra.mxu0 %v3054
        %3185 = vmatprep.subr.mxu0 0.0
        %3186 = vmatpush2.msra.mxu0 0.0
        %3187 = vmatprep.subr.mxu0 0.0
        %3188 = vmatpush2.msra.mxu0 0.0
        %3189 = vmatprep.subr.mxu0 0.0
        %3190 = vmatpush2.msra.mxu0 0.0
        %3191 = vmatprep.subr.mxu0 0.0
        %3192 = vmatpush2.msra.mxu0 0.0
        %3193 = vmatprep.subr.mxu0 0.0
        %3194 = vmatpush2.msra.mxu0 0.0
        %3195 = vmatprep.subr.mxu0 0.0
        %3196 = vmatpush2.msra.mxu0 0.0
        %3197 = vmatprep.subr.mxu0 0.0
        %3198 = vmatpush2.msra.mxu0 0.0
        %3199 = vmatprep.subr.mxu0 0.0
        %3200 = vmatpush2.msra.mxu0 0.0
        %3201 = vmatprep.subr.mxu0 0.0
        %3202 = vmatpush2.msra.mxu0 0.0
        %3203 = vmatprep.subr.mxu0 0.0
        %3204 = vmatpush2.msra.mxu0 0.0
        %3205 = vmatprep.subr.mxu0 0.0
        %3206 = vmatpush2.msra.mxu0 0.0
        %3207 = vmatprep.subr.mxu0 0.0
        %3208 = vmatpush2.msra.mxu0 0.0
        %3209 = vmatprep.subr.mxu0 0.0
        %3210 = vmatpush2.msra.mxu0 0.0
        %3211 = vmatprep.subr.mxu0 0.0
        %3212 = vmatpush2.msra.mxu0 0.0
        %3213 = vmatprep.subr.mxu0 0.0
        %3214 = vmatpush2.msra.mxu0 %v3144
        %3215 = vmatprep.subr.mxu0 0.0
        %3216 = vmatpush2.msra.mxu0 %v3142
        %3217 = vmatprep.mubr.f32.mxu0 %v3148
        %3218 = vmatmul.mubr.f32.gmra.mxu0 %v3020
        %v3219 = vpop.f32.mrf.mxu0
        %v3220 = vadd.f32 0.0, %v3219
        %v3221 = vpop.f32.mrf.mxu0
        %3222 = vmatprep.mubr.f32.mxu0 %v3151
        %3223 = vmatmul.mubr.f32.gmra.mxu0 %v3022
        %v3224 = vpop.f32.mrf.mxu0
        %v3225 = vadd.f32 0.0, %v3224
        %v3226 = vpop.f32.mrf.mxu0
        %3227 = vdwg.mxu0
        %v3228 = vadd.f32 %v3016, %v3220
        %v3229 = vadd.f32 %v3017, %v3225
        %3231 = vset.pattern.permute.xlu0 0
        %3232 = vperm.xlu0 %3231, %v3024
        %v3233 = vpop.permute.xlu0 %3232
        %3236 = vset.pattern.permute.xlu0 0
        %3237 = vperm.xlu0 %3236, %v3025
        %v3238 = vpop.permute.xlu0 %3237
        %v3240 = vadd.f32 %v3228, %v3233
        %v3241 = vadd.f32 %v3229, %v3238
        %3242 = vst.msk [vmem:[%s996] sm:$0xff] %vm1158, %v3240
        %3243 = vst.msk [vmem:[%s996 + $0x8] sm:$0xff] %vm1158, %v3241
        %s3244 = sand.u32 %s646, 1
        %s3245 = scalar_lea.sflag [#allocation3], %s3244
        %s3246 = sand.u32 %s646, 1
        %s3247 = smul.addr %s3246, 16
        %s3248 = scalar_lea.vmem [#allocation2], %s3247
        %s3249 = sand.u32 %s87, 1
        %s3250 = scalar_lea.sflag [#allocation5], %s3249
        %s3251 = sand.u32 %s672, 1
        %s3252 = smul.addr %s3251, 16
        %s3253 = scalar_lea.vmem [#allocation4], %s3252
        %s3254 = sand.u32 %s87, 1
        %s3255 = scalar_lea.sflag [#allocation5], %s3254
        %s3256 = sand.u32 %s698, 1
        %s3257 = smul.addr %s3256, 16
        %s3258 = scalar_lea.vmem [#allocation6], %s3257
        %s3259 = sand.u32 %s87, 1
        %s3260 = scalar_lea.sflag [#allocation8], %s3259
        %s3261 = sand.u32 %s724, 1
        %s3262 = smul.addr %s3261, 16
        %s3263 = scalar_lea.vmem [#allocation7], %s3262
        %s3264 = sand.u32 %s87, 1
        %s3265 = scalar_lea.sflag [#allocation8], %s3264
        %s3266 = sand.u32 %s750, 1
        %s3267 = smul.addr %s3266, 16
        %s3268 = scalar_lea.vmem [#allocation9], %s3267
        %s3269 = sand.u32 %s776, 1
        %s3270 = scalar_lea.sflag [#allocation11], %s3269
        %s3271 = sand.u32 %s776, 1
        %s3272 = smul.addr %s3271, 16
        %s3273 = scalar_lea.vmem [#allocation10], %s3272
        // Predicated region
        $region125: #{tpu_custom_call.1} parent=123 // pred_check
          %p3274 = pneg %p656
        $region126: #{tpu_custom_call.1} parent=123 // pred_check_branch
          %3276 = sbr.rel (%p3274) target = $region128
        $region127: #{tpu_custom_call.1} parent=123 // pred_region
          %s3278 = ssub.s32 256, 256
          %3279 = vsyncadd %s3245, %s3278
          %s3280 = smul.addr %s87, 2
          %s3281 = smul.addr %s3280, 128
          %s3282 = scalar_lea.hbm %s53, %s3281
          %s3284 = sshll.u32 %s3248, 4
          %s3285 = int_to_ptr.vmem [resolvable:$true] %s3284
          %3287 = dma.vmem_to_hbm [thread:$0]  %s3285, 256, %s3282, %s3245
        $region128: #{tpu_custom_call.1} parent=123 // pred_fallthru
          _
        // Predicated region
        $region129: #{tpu_custom_call.1} parent=123 // pred_check
          %p3288 = pneg %p682
        $region130: #{tpu_custom_call.1} parent=123 // pred_check_branch
          %3290 = sbr.rel (%p3288) target = $region132
        $region131: #{tpu_custom_call.1} parent=123 // pred_region
          %s3292 = ssub.s32 256, 256
          %3293 = vsyncadd %s3250, %s3292
          %s3294 = smul.addr %s87, 2
          %s3295 = smul.addr %s3294, 128
          %s3296 = scalar_lea.hbm %s55, %s3295
          %s3298 = sshll.u32 %s3253, 4
          %s3299 = int_to_ptr.vmem [resolvable:$true] %s3298
          %3301 = dma.vmem_to_hbm [thread:$0]  %s3299, 256, %s3296, %s3250
        $region132: #{tpu_custom_call.1} parent=123 // pred_fallthru
          _
        // Predicated region
        $region133: #{tpu_custom_call.1} parent=123 // pred_check
          %p3302 = pneg %p708
        $region134: #{tpu_custom_call.1} parent=123 // pred_check_branch
          %3304 = sbr.rel (%p3302) target = $region136
        $region135: #{tpu_custom_call.1} parent=123 // pred_region
          %s3306 = ssub.s32 256, 256
          %3307 = vsyncadd %s3255, %s3306
          %s3308 = smul.addr %s87, 2
          %s3309 = smul.addr %s3308, 128
          %s3310 = scalar_lea.hbm %s57, %s3309
          %s3311 = sshll.u32 %s3258, 4
          %s3312 = int_to_ptr.vmem [resolvable:$true] %s3311
          %3317 = dma.vmem_to_hbm [thread:$0]  %s3312, 256, %s3310, %s3255, 128, 128, 8
        $region136: #{tpu_custom_call.1} parent=123 // pred_fallthru
          _
        // Predicated region
        $region137: #{tpu_custom_call.1} parent=123 // pred_check
          %p3318 = pneg %p734
        $region138: #{tpu_custom_call.1} parent=123 // pred_check_branch
          %3320 = sbr.rel (%p3318) target = $region140
        $region139: #{tpu_custom_call.1} parent=123 // pred_region
          %s3322 = ssub.s32 256, 256
          %3323 = vsyncadd %s3260, %s3322
          %s3324 = smul.addr %s87, 2
          %s3325 = smul.addr %s3324, 128
          %s3326 = scalar_lea.hbm %s59, %s3325
          %s3327 = sshll.u32 %s3263, 4
          %s3328 = int_to_ptr.vmem [resolvable:$true] %s3327
          %3333 = dma.vmem_to_hbm [thread:$0]  %s3328, 256, %s3326, %s3260, 128, 128, 8
        $region140: #{tpu_custom_call.1} parent=123 // pred_fallthru
          _
        // Predicated region
        $region141: #{tpu_custom_call.1} parent=123 // pred_check
          %p3334 = pneg %p760
        $region142: #{tpu_custom_call.1} parent=123 // pred_check_branch
          %3336 = sbr.rel (%p3334) target = $region144
        $region143: #{tpu_custom_call.1} parent=123 // pred_region
          %s3338 = ssub.s32 256, 256
          %3339 = vsyncadd %s3265, %s3338
          %s3340 = smul.addr %s87, 2
          %s3341 = smul.addr %s3340, 128
          %s3342 = scalar_lea.hbm %s61, %s3341
          %s3343 = sshll.u32 %s3268, 4
          %s3344 = int_to_ptr.vmem [resolvable:$true] %s3343
          %3349 = dma.vmem_to_hbm [thread:$0]  %s3344, 256, %s3342, %s3265, 128, 128, 8
        $region144: #{tpu_custom_call.1} parent=123 // pred_fallthru
          _
        // Predicated region
        $region145: #{tpu_custom_call.1} parent=123 // pred_check
          %p3350 = pneg %p786
        $region146: #{tpu_custom_call.1} parent=123 // pred_check_branch
          %3352 = sbr.rel (%p3350) target = $region148
        $region147: #{tpu_custom_call.1} parent=123 // pred_region
          %s3354 = ssub.s32 256, 256
          %3355 = vsyncadd %s3270, %s3354
          %s3356 = smul.addr %s87, 2
          %s3357 = smul.addr %s3356, 128
          %s3358 = scalar_lea.hbm %s63, %s3357
          %s3359 = sshll.u32 %s3273, 4
          %s3360 = int_to_ptr.vmem [resolvable:$true] %s3359
          %3365 = dma.vmem_to_hbm [thread:$0]  %s3360, 256, %s3358, %s3270, 128, 128, 8
        $region148: #{tpu_custom_call.1} parent=123 // pred_fallthru
          _
      $region124: #{tpu_custom_call.1} parent=5 // pred_fallthru
        _
      %p3366 = scmp.le.s32.totalorder 2, %s82
      // Predicated region
      $region149: #{tpu_custom_call.1} parent=5 // pred_check
        %p3367 = pneg %p3366
      $region150: #{tpu_custom_call.1} parent=5 // pred_check_branch
        %3369 = sbr.rel (%p3367) target = $region152
      $region151: #{tpu_custom_call.1} parent=5 // pred_region
        %s3370 = ssub.s32 %s82, 2
        // Predicated region
        $region153: #{tpu_custom_call.1} parent=151 // pred_check
          %p3371 = pneg %p662
        $region154: #{tpu_custom_call.1} parent=151 // pred_check_branch
          %3373 = sbr.rel (%p3371) target = $region156
        $region155: #{tpu_custom_call.1} parent=151 // pred_region
          %s3374 = sand.u32 %s647, 1
          %s3375 = scalar_lea.sflag [#allocation3], %s3374
          %s3376 = sand.u32 %s647, 1
          %s3377 = smul.addr %s3376, 16
          %s3378 = scalar_lea.vmem [#allocation2], %s3377
          %3379 = dma.done %s3375, 256
        $region156: #{tpu_custom_call.1} parent=151 // pred_fallthru
          _
        // Predicated region
        $region157: #{tpu_custom_call.1} parent=151 // pred_check
          %p3380 = pneg %p688
        $region158: #{tpu_custom_call.1} parent=151 // pred_check_branch
          %3382 = sbr.rel (%p3380) target = $region160
        $region159: #{tpu_custom_call.1} parent=151 // pred_region
          %s3383 = sand.u32 %s88, 1
          %s3384 = scalar_lea.sflag [#allocation5], %s3383
          %s3385 = sand.u32 %s673, 1
          %s3386 = smul.addr %s3385, 16
          %s3387 = scalar_lea.vmem [#allocation4], %s3386
          %3388 = dma.done %s3384, 256
        $region160: #{tpu_custom_call.1} parent=151 // pred_fallthru
          _
        // Predicated region
        $region161: #{tpu_custom_call.1} parent=151 // pred_check
          %p3389 = pneg %p714
        $region162: #{tpu_custom_call.1} parent=151 // pred_check_branch
          %3391 = sbr.rel (%p3389) target = $region164
        $region163: #{tpu_custom_call.1} parent=151 // pred_region
          %s3392 = sand.u32 %s88, 1
          %s3393 = scalar_lea.sflag [#allocation5], %s3392
          %s3394 = sand.u32 %s699, 1
          %s3395 = smul.addr %s3394, 16
          %s3396 = scalar_lea.vmem [#allocation6], %s3395
          %3397 = dma.done %s3393, 256
        $region164: #{tpu_custom_call.1} parent=151 // pred_fallthru
          _
        // Predicated region
        $region165: #{tpu_custom_call.1} parent=151 // pred_check
          %p3398 = pneg %p740
        $region166: #{tpu_custom_call.1} parent=151 // pred_check_branch
          %3400 = sbr.rel (%p3398) target = $region168
        $region167: #{tpu_custom_call.1} parent=151 // pred_region
          %s3401 = sand.u32 %s88, 1
          %s3402 = scalar_lea.sflag [#allocation8], %s3401
          %s3403 = sand.u32 %s725, 1
          %s3404 = smul.addr %s3403, 16
          %s3405 = scalar_lea.vmem [#allocation7], %s3404
          %3406 = dma.done %s3402, 256
        $region168: #{tpu_custom_call.1} parent=151 // pred_fallthru
          _
        // Predicated region
        $region169: #{tpu_custom_call.1} parent=151 // pred_check
          %p3407 = pneg %p766
        $region170: #{tpu_custom_call.1} parent=151 // pred_check_branch
          %3409 = sbr.rel (%p3407) target = $region172
        $region171: #{tpu_custom_call.1} parent=151 // pred_region
          %s3410 = sand.u32 %s88, 1
          %s3411 = scalar_lea.sflag [#allocation8], %s3410
          %s3412 = sand.u32 %s751, 1
          %s3413 = smul.addr %s3412, 16
          %s3414 = scalar_lea.vmem [#allocation9], %s3413
          %3415 = dma.done %s3411, 256
        $region172: #{tpu_custom_call.1} parent=151 // pred_fallthru
          _
        // Predicated region
        $region173: #{tpu_custom_call.1} parent=151 // pred_check
          %p3416 = pneg %p792
        $region174: #{tpu_custom_call.1} parent=151 // pred_check_branch
          %3418 = sbr.rel (%p3416) target = $region176
        $region175: #{tpu_custom_call.1} parent=151 // pred_region
          %s3419 = sand.u32 %s777, 1
          %s3420 = scalar_lea.sflag [#allocation11], %s3419
          %s3421 = sand.u32 %s777, 1
          %s3422 = smul.addr %s3421, 16
          %s3423 = scalar_lea.vmem [#allocation10], %s3422
          %3424 = dma.done %s3420, 256
        $region176: #{tpu_custom_call.1} parent=151 // pred_fallthru
          _
      $region152: #{tpu_custom_call.1} parent=5 // pred_fallthru
        _
    $region6: #{tpu_custom_call.1} parent=1 // loop_footer
      %s86 = sadd.s32 1, %s82
    $region7: #{tpu_custom_call.1} parent=1 // loop_footer_branch
      %81 = sbr.rel target = $region3
    $region8: #{tpu_custom_call.1} parent=1 // loop_exit
      _
    %3425 = vsyncpa [#allocation3], 1
    %s3426 = scalar_lea.sflag [#allocation3], 1
    %3427 = vsyncpa %s3426, 1
    %3428 = vsyncpa [#allocation5], 1
    %s3429 = scalar_lea.sflag [#allocation5], 1
    %3430 = vsyncpa %s3429, 1
    %3431 = vsyncpa [#allocation8], 1
    %s3432 = scalar_lea.sflag [#allocation8], 1
    %3433 = vsyncpa %s3432, 1
    %3434 = vsyncpa [#allocation11], 1
    %s3435 = scalar_lea.sflag [#allocation11], 1
    %3436 = vsyncpa %s3435, 1

</llo_original>
